<compile_context>
chip_gen: v5e
topology: v5e:2x2
jax: 0.10.0
libtpu: 0.0.40
codegen_flags: <defaults>
</compile_context>

<pallas_src>
import functools

import jax
import jax.numpy as jnp
from jax.experimental import pallas as pl
from jax.experimental.pallas import tpu as pltpu

HIDDEN = 768          # BERT hidden size (fc: 2*768 -> 768)
NUM_CLASSES = 2       # num_labels
PAD_CLASSES = 128     # lane-dense padded classifier width


def _bert_context_emb_kernel(stack_ref, cls0_ref, wl_hbm_ref, wb_ref, wrc_ref,
                             b_ref, bcf_ref, out_ref, wl_vmem, dma_sem, *, n, batch):
    """Single no-grid invocation: one batched MXU call + short serial fold.

    stack_ref : ((n-1)*B + B, H) bf16  rows: cls[1], ..., cls[n-1], target
    cls0_ref  : (B, H)           bf16  cls[0] (fold seed)
    wl_hbm_ref: (H, H)           bf16  fc.weight^T[:H]   (left concat operand; HBM)
    wb_ref    : (H, H+PAD)       bf16  [ WR | WL @ WC ]  (batched-phase weight)
    wrc_ref   : (H, PAD)         bf16  WR @ WC           (fused ctx -> logits)
    b_ref     : (1, H)           f32   fc.bias
    bcf_ref   : (1, PAD)         f32   fc.bias @ WC + classifier bias
    out_ref   : (B, PAD)         f32
    """
    # Kick off the WL transfer now; it is only needed by the serial fold, so it
    # overlaps with the batched matmul below instead of gating kernel start.
    wl_copy = pltpu.make_async_copy(wl_hbm_ref, wl_vmem, dma_sem)
    wl_copy.start()

    # One MXU call for everything data-independent:
    #   rows 0 .. (n-1)*B-1 : cls[i] @ [WR | WLC]  -> WR half is pre[i] (fold additive term)
    #   rows (n-1)*B ..     : tgt    @ [WR | WLC]  -> WLC half is tgt @ WL @ WC (logit term)
    batched = jnp.dot(stack_ref[...], wb_ref[...],
                      preferred_element_type=jnp.float32)
    pre = batched[:(n - 1) * batch, :HIDDEN] + b_ref[...]      # ((n-1)*B, H) f32
    tgt_c = batched[(n - 1) * batch:, HIDDEN:]                 # (B, PAD)     f32

    wl_copy.wait()
    wl = wl_vmem[...]

    # Serial fold (the only truly sequential work):
    #   ctx_i = ctx_{i-1} @ WL + (cls[i] @ WR + b)
    ctx = cls0_ref[...].astype(jnp.float32)                    # ctx_0 = cls[0]
    for i in range(1, n):
        ctx = (jnp.dot(ctx.astype(jnp.bfloat16), wl,
                       preferred_element_type=jnp.float32)
               + pre[(i - 1) * batch:i * batch])

    # Classifier fused into the final fc step:
    #   out = (tgt@WL + ctx@WR + b) @ WC + bc = tgt@WLC + ctx@WRC + (b@WC + bc)
    out_ref[...] = (tgt_c
                    + jnp.dot(ctx.astype(jnp.bfloat16), wrc_ref[...],
                              preferred_element_type=jnp.float32)
                    + bcf_ref[...]).astype(out_ref.dtype)


def prepare_params(fc_w, fc_b, cls_w, cls_b):
    """One-time (module-init) weight prep; keep this OFF the per-forward path.

    fc_w: (H, 2H) torch layout (out, in); fc_b: (H,); cls_w: (C, H); cls_b: (C,)
    """
    hidden = fc_w.shape[0]
    num_classes = cls_w.shape[0]
    assert fc_w.shape == (hidden, 2 * hidden)
    assert num_classes <= PAD_CLASSES

    wt = fc_w.T.astype(jnp.float32)                 # (2H, H)
    wl = wt[:hidden]                                # acts on the LEFT concat operand
    wr = wt[hidden:]                                # acts on the RIGHT concat operand

    # Zero-padded classifier (lane-dense 128-wide logits).
    wc = jnp.zeros((hidden, PAD_CLASSES), jnp.float32)
    wc = wc.at[:, :num_classes].set(cls_w.T.astype(jnp.float32))
    bc = jnp.zeros((PAD_CLASSES,), jnp.float32)
    bc = bc.at[:num_classes].set(cls_b.astype(jnp.float32))

    wlc = wl @ wc                                   # (H, PAD)  target path, classifier fused
    wrc = wr @ wc                                   # (H, PAD)  ctx path, classifier fused
    bcf = fc_b.astype(jnp.float32) @ wc + bc        # fused final bias

    params = {
        "wl": wl.astype(jnp.bfloat16),                              # (H, H)
        "wb": jnp.concatenate([wr, wlc], axis=1).astype(jnp.bfloat16),  # (H, H+PAD)
        "wrc": wrc.astype(jnp.bfloat16),                            # (H, PAD)
        "b": fc_b.reshape(1, hidden).astype(jnp.float32),           # (1, H)
        "bcf": bcf.reshape(1, PAD_CLASSES),                         # (1, PAD)
    }
    return params, num_classes


@functools.partial(jax.jit, static_argnames=("num_classes",))
def bert_context_emb_forward(cls_stack, target_cls, params, *, num_classes=NUM_CLASSES):
    """cls_stack: (N, B, H) CLS embeddings; target_cls: (B, H); params from prepare_params."""
    n, batch, hidden = cls_stack.shape
    assert hidden == HIDDEN
    assert n >= 1, "need at least one conversation CLS embedding"

    # Rows for the single batched matmul: cls[1], ..., cls[n-1], target.
    stacked = jnp.concatenate(
        [cls_stack[1:].reshape((n - 1) * batch, hidden), target_cls], axis=0
    ).astype(jnp.bfloat16)
    cls0 = cls_stack[0].astype(jnp.bfloat16)

    kernel = functools.partial(_bert_context_emb_kernel, n=n, batch=batch)
    vmem = pl.BlockSpec(memory_space=pltpu.MemorySpace.VMEM)
    hbm = pl.BlockSpec(memory_space=pl.ANY)

    # NOTE(perf): if many independent graphs/targets are processed, add a leading
    # "parallel" grid axis over them instead of calling this per item (uses both
    # v7x TensorCores and amortizes the weight DMA).
    out = pl.pallas_call(
        kernel,
        out_shape=jax.ShapeDtypeStruct((batch, PAD_CLASSES), jnp.float32),
        in_specs=[vmem, vmem, hbm, vmem, vmem, vmem, vmem],
        out_specs=vmem,
        scratch_shapes=[
            pltpu.VMEM((hidden, hidden), jnp.bfloat16),   # WL landing buffer
            pltpu.SemaphoreType.DMA(()),                  # its completion semaphore
        ],
    )(stacked, cls0, params["wl"], params["wb"], params["wrc"],
      params["b"], params["bcf"])

    return out[:, :num_classes].astype(cls_stack.dtype)


def reference_forward(cls_stack, target_cls, fc_w, fc_b, cls_w, cls_b):
    """Plain-JAX f32 replica of the PyTorch forward (post-BERT part)."""
    ctx = cls_stack[0]
    for i in range(1, cls_stack.shape[0]):
        cat = jnp.concatenate([ctx, cls_stack[i]], axis=1)
        ctx = cat @ fc_w.T + fc_b
    combined = jnp.concatenate([target_cls, ctx], axis=1)
    combined = combined @ fc_w.T + fc_b
    return combined @ cls_w.T + cls_b


if __name__ == "__main__":
    key = jax.random.PRNGKey(0)
    k_cls, k_tgt, k_fw, k_fb, k_cw, k_cb = jax.random.split(key, 6)

    N_CONV = 4   # number of kept conversation texts
    BATCH = 1    # tokenizer returns one sequence per text -> batch-1 CLS embedding

    # Synthetic CLS embeddings standing in for the frozen BERT encoder outputs.
    cls_stack = jax.random.normal(k_cls, (N_CONV, BATCH, HIDDEN), jnp.float32)
    target_cls = jax.random.normal(k_tgt, (BATCH, HIDDEN), jnp.float32)

    # Parameter shapes from nn.Linear(1536, 768) and classifier nn.Linear(768, 2).
    fc_w = 0.02 * jax.random.normal(k_fw, (HIDDEN, 2 * HIDDEN), jnp.float32)
    fc_b = 0.02 * jax.random.normal(k_fb, (HIDDEN,), jnp.float32)
    cls_w = 0.02 * jax.random.normal(k_cw, (NUM_CLASSES, HIDDEN), jnp.float32)
    cls_b = 0.02 * jax.random.normal(k_cb, (NUM_CLASSES,), jnp.float32)

    # Module-init analog: done once, off the per-forward path.
    params, num_classes = prepare_params(fc_w, fc_b, cls_w, cls_b)
    params = jax.tree_util.tree_map(jax.block_until_ready, params)

    out = bert_context_emb_forward(cls_stack, target_cls, params,
                                   num_classes=num_classes)
    out = jax.block_until_ready(out)

    ref = reference_forward(cls_stack, target_cls, fc_w, fc_b, cls_w, cls_b)
    assert out.shape == (BATCH, NUM_CLASSES)
    # bf16 MXU operands + fused (pre-multiplied) classifier weights vs f32 reference.
    assert jnp.allclose(out, ref, atol=2e-2, rtol=2e-2), (out, ref)

    print("KERNEL_OK")
</pallas_src>

<mosaic_0001>
module attributes {stable_mosaic.version = 11 : i64} {
  func.func @_bert_context_emb_kernel(%arg0: memref<4x768xbf16, #tpu.memory_space<vmem>>, %arg1: memref<1x768xbf16, #tpu.memory_space<vmem>>, %arg2: memref<768x768xbf16, #tpu.memory_space<any>>, %arg3: memref<768x896xbf16, #tpu.memory_space<vmem>>, %arg4: memref<768x128xbf16, #tpu.memory_space<vmem>>, %arg5: memref<1x768xf32, #tpu.memory_space<vmem>>, %arg6: memref<1x128xf32, #tpu.memory_space<vmem>>, %arg7: memref<1x128xf32, #tpu.memory_space<vmem>>, %arg8: memref<768x768xbf16, #tpu.memory_space<vmem>>, %arg9: memref<!tpu.dma_semaphore, #tpu.memory_space<semaphore_mem>>) attributes {dimension_semantics = [], scalar_prefetch = 0 : i64, scratch_operands = 2 : i64, tpu.core_type = #tpu.core_type<tc>} {
    tpu.enqueue_dma source(%arg2 : memref<768x768xbf16, #tpu.memory_space<any>>) target(%arg8 : memref<768x768xbf16, #tpu.memory_space<vmem>>) target_semaphore(%arg9 : memref<!tpu.dma_semaphore, #tpu.memory_space<semaphore_mem>>)
    %c0 = arith.constant 0 : index
    %c0_0 = arith.constant 0 : index
    %0 = vector.load %arg0[%c0, %c0_0] : memref<4x768xbf16, #tpu.memory_space<vmem>>, vector<4x768xbf16>
    %c0_1 = arith.constant 0 : index
    %c0_2 = arith.constant 0 : index
    %1 = vector.load %arg3[%c0_1, %c0_2] : memref<768x896xbf16, #tpu.memory_space<vmem>>, vector<768x896xbf16>
    %cst = arith.constant dense<0.000000e+00> : vector<4x896xf32>
    %2 = tpu.matmul %0, %1, %cst {dimension_numbers = #tpu.dot_dimension_numbers<[1], [0], [0], [1], [0, 0, 1, 1], [], []>} : vector<4x768xbf16>, vector<768x896xbf16>, vector<4x896xf32> -> vector<4x896xf32>
    %3 = vector.extract_strided_slice %2 {offsets = [0, 0], sizes = [3, 768], strides = [1, 1]} : vector<4x896xf32> to vector<3x768xf32>
    %c0_3 = arith.constant 0 : index
    %c0_4 = arith.constant 0 : index
    %4 = vector.load %arg5[%c0_3, %c0_4] : memref<1x768xf32, #tpu.memory_space<vmem>>, vector<1x768xf32>
    %5 = vector.broadcast %4 : vector<1x768xf32> to vector<3x768xf32>
    %6 = arith.addf %3, %5 : vector<3x768xf32>
    %7 = vector.extract_strided_slice %2 {offsets = [3, 768], sizes = [1, 128], strides = [1, 1]} : vector<4x896xf32> to vector<1x128xf32>
    tpu.wait_dma2 semaphore(%arg9 : memref<!tpu.dma_semaphore, #tpu.memory_space<semaphore_mem>>) src(%arg2 : memref<768x768xbf16, #tpu.memory_space<any>>) dst(%arg8 : memref<768x768xbf16, #tpu.memory_space<vmem>>)
    %c0_5 = arith.constant 0 : index
    %c0_6 = arith.constant 0 : index
    %8 = vector.load %arg8[%c0_5, %c0_6] : memref<768x768xbf16, #tpu.memory_space<vmem>>, vector<768x768xbf16>
    %c0_7 = arith.constant 0 : index
    %c0_8 = arith.constant 0 : index
    %9 = vector.load %arg1[%c0_7, %c0_8] : memref<1x768xbf16, #tpu.memory_space<vmem>>, vector<1x768xbf16>
    %10 = arith.extf %9 : vector<1x768xbf16> to vector<1x768xf32>
    %11 = arith.truncf %10 : vector<1x768xf32> to vector<1x768xbf16>
    %cst_9 = arith.constant dense<0.000000e+00> : vector<1x768xf32>
    %12 = tpu.matmul %11, %8, %cst_9 {dimension_numbers = #tpu.dot_dimension_numbers<[1], [0], [0], [1], [0, 0, 1, 1], [], []>} : vector<1x768xbf16>, vector<768x768xbf16>, vector<1x768xf32> -> vector<1x768xf32>
    %13 = vector.extract_strided_slice %6 {offsets = [0, 0], sizes = [1, 768], strides = [1, 1]} : vector<3x768xf32> to vector<1x768xf32>
    %14 = arith.addf %12, %13 : vector<1x768xf32>
    %15 = arith.truncf %14 : vector<1x768xf32> to vector<1x768xbf16>
    %cst_10 = arith.constant dense<0.000000e+00> : vector<1x768xf32>
    %16 = tpu.matmul %15, %8, %cst_10 {dimension_numbers = #tpu.dot_dimension_numbers<[1], [0], [0], [1], [0, 0, 1, 1], [], []>} : vector<1x768xbf16>, vector<768x768xbf16>, vector<1x768xf32> -> vector<1x768xf32>
    %17 = vector.extract_strided_slice %6 {offsets = [1, 0], sizes = [1, 768], strides = [1, 1]} : vector<3x768xf32> to vector<1x768xf32>
    %18 = arith.addf %16, %17 : vector<1x768xf32>
    %19 = arith.truncf %18 : vector<1x768xf32> to vector<1x768xbf16>
    %cst_11 = arith.constant dense<0.000000e+00> : vector<1x768xf32>
    %20 = tpu.matmul %19, %8, %cst_11 {dimension_numbers = #tpu.dot_dimension_numbers<[1], [0], [0], [1], [0, 0, 1, 1], [], []>} : vector<1x768xbf16>, vector<768x768xbf16>, vector<1x768xf32> -> vector<1x768xf32>
    %21 = vector.extract_strided_slice %6 {offsets = [2, 0], sizes = [1, 768], strides = [1, 1]} : vector<3x768xf32> to vector<1x768xf32>
    %22 = arith.addf %20, %21 : vector<1x768xf32>
    %23 = arith.truncf %22 : vector<1x768xf32> to vector<1x768xbf16>
    %c0_12 = arith.constant 0 : index
    %c0_13 = arith.constant 0 : index
    %24 = vector.load %arg4[%c0_12, %c0_13] : memref<768x128xbf16, #tpu.memory_space<vmem>>, vector<768x128xbf16>
    %cst_14 = arith.constant dense<0.000000e+00> : vector<1x128xf32>
    %25 = tpu.matmul %23, %24, %cst_14 {dimension_numbers = #tpu.dot_dimension_numbers<[1], [0], [0], [1], [0, 0, 1, 1], [], []>} : vector<1x768xbf16>, vector<768x128xbf16>, vector<1x128xf32> -> vector<1x128xf32>
    %26 = arith.addf %7, %25 : vector<1x128xf32>
    %c0_15 = arith.constant 0 : index
    %c0_16 = arith.constant 0 : index
    %27 = vector.load %arg6[%c0_15, %c0_16] : memref<1x128xf32, #tpu.memory_space<vmem>>, vector<1x128xf32>
    %28 = arith.addf %26, %27 : vector<1x128xf32>
    %c0_17 = arith.constant 0 : index
    %c0_18 = arith.constant 0 : index
    %29 = vector.load %arg7[%c0_17, %c0_18] : memref<1x128xf32, #tpu.memory_space<vmem>>, vector<1x128xf32>
    tpu.vector_store %arg7[%c0_17, %c0_18], %28 {strides = array<i32>} : memref<1x128xf32, #tpu.memory_space<vmem>>, vector<1x128xf32>,
    return
  }
}

</mosaic_0001>

<llo_original>
// kernel: bert_context_emb_forward.1
$region0: #{bert_context_emb_forward.1}
  #allocation0 [shape = 'u32[]', space=smem, size = 0x4, offset = 0x4, fixed_abs, tag = 'smem constant byte address 0x4 - core index']
  #allocation1 [shape = 'u32[72,128]{1,0:T(1,128)}', space=vmem, size = 0x9000, scoped, tag = 'internal scratch']
  #allocation2 [shape = 'bf16[768,768]{1,0:T(8,128)(2,1)}', space=vmem, size = 0x120000, scoped, tag = 'scratch operand']
  #allocation3 [shape = 's32[1]{0}', space=sflag, size = 0x4, scoped, tag = 'scratch operand']
  #allocation13 [shape = 's32[]', space=sflag, size = 0x4, offset = 0, fixed_abs, tag = 'sflag constant byte address 0x0 - dummy sync flag']
  #allocation14 [shape = 's32[]', space=sflag, size = 0x4, offset = 0, fixed_abs, tag = 'sflag constant byte address 0x0 - dummy sync flag']
  #allocation15 [shape = 'u32[]', space=smem, size = 0x4, offset = 0x44, fixed_abs, tag = 'smem constant byte address 0x44 - assertion arg 0']
  #allocation16 [shape = 'u32[]', space=smem, size = 0x4, offset = 0x48, fixed_abs, tag = 'smem constant byte address 0x48 - assertion arg 1']
  %s0 = inlined_call_operand.vmem [shape: bf16[4,768], index: 0, kind: input, shape index: {}]
  %s1 = inlined_call_operand.vmem [shape: bf16[1,768], index: 1, kind: input, shape index: {}]
  %s2 = inlined_call_operand.hbm [shape: bf16[768,768], index: 2, kind: input, shape index: {}]
  %s3 = inlined_call_operand.hbm [shape: bf16[768,896], index: 3, kind: input, shape index: {}]
  %s4 = inlined_call_operand.hbm [shape: bf16[768,128], index: 4, kind: input, shape index: {}]
  %s5 = inlined_call_operand.hbm [shape: f32[1,768], index: 5, kind: input, shape index: {}]
  %s6 = inlined_call_operand.hbm [shape: f32[1,128], index: 6, kind: input, shape index: {}]
  %s7 = inlined_call_operand.hbm [shape: f32[1,128], index: 7, kind: output, shape index: {}]
  %s8 = sld [smem:[#allocation0]]
  $region54: #{bert_context_emb_forward.1} parent=0
    _
  %s10 = ssub.s32 1, %s8
  %s11 = scalar_select 0, %s10, %s8
  $region1: #{bert_context_emb_forward.1} parent=0
    #allocation4 [shape = 'u8[1376256]{0}', space=vmem, size = 0x150000, scoped, tag = 'input window, operand 3, single buffered']
    #allocation5 [shape = 's32[1]{0}', space=sflag, size = 0x4, scoped, tag = 'scoped memory for bert_context_emb_forward.1']
    #allocation6 [shape = 's32[1]{0}', space=sflag, size = 0x4, scoped, tag = 'scoped memory for bert_context_emb_forward.1']
    #allocation7 [shape = 'u8[196608]{0}', space=vmem, size = 0x30000, scoped, tag = 'input window, operand 4, single buffered']
    #allocation8 [shape = 's32[1]{0}', space=sflag, size = 0x4, scoped, tag = 'scoped memory for bert_context_emb_forward.1']
    #allocation9 [shape = 'u8[3072]{0}', space=vmem, size = 0xc00, scoped, tag = 'input window, operand 5, single buffered']
    #allocation10 [shape = 'u8[512]{0}', space=vmem, size = 0x400, scoped, tag = 'input window, operand 6, single buffered']
    #allocation11 [shape = 's32[1]{0}', space=sflag, size = 0x4, scoped, tag = 'scoped memory for bert_context_emb_forward.1']
    #allocation12 [shape = 'u8[512]{0}', space=vmem, size = 0x400, scoped, tag = 'output window, operand 0, single buffered']
    %12 = vsyncpa [#allocation5], 0
    %13 = vsyncpa [#allocation8], 0
    %14 = vsyncpa [#allocation11], 0
    %15 = vsyncpa [#allocation6], 0
    // Predicated region
    $region2: #{bert_context_emb_forward.1} parent=1 // pred_check
      _
    $region3: #{bert_context_emb_forward.1} parent=1 // pred_check_branch
      %17 = sbr.rel (0) target = $region5
    $region4: #{bert_context_emb_forward.1} parent=1 // pred_region
      _
    $region5: #{bert_context_emb_forward.1} parent=1 // pred_fallthru
      _
    // Predicated region
    $region6: #{bert_context_emb_forward.1} parent=1 // pred_check
      _
    $region7: #{bert_context_emb_forward.1} parent=1 // pred_check_branch
      %19 = sbr.rel (0) target = $region9
    $region8: #{bert_context_emb_forward.1} parent=1 // pred_region
      _
    $region9: #{bert_context_emb_forward.1} parent=1 // pred_fallthru
      _
    // Predicated region
    $region10: #{bert_context_emb_forward.1} parent=1 // pred_check
      _
    $region11: #{bert_context_emb_forward.1} parent=1 // pred_check_branch
      %21 = sbr.rel (0) target = $region13
    $region12: #{bert_context_emb_forward.1} parent=1 // pred_region
      %23 = vsyncadd [#allocation5], 0
      %s24 = sshll.u32 %s3, 4
      %s25 = int_to_ptr.hbm [resolvable:$true] %s24
      %s26 = sshll.u32 [#allocation4], 4
      %s27 = int_to_ptr.vmem [resolvable:$true] %s26
      %32 = dma.hbm_to_vmem [thread:$0]  %s25, 43008, %s27, [#allocation5], 448, 448, 28
    $region13: #{bert_context_emb_forward.1} parent=1 // pred_fallthru
      _
    // Predicated region
    $region14: #{bert_context_emb_forward.1} parent=1 // pred_check
      _
    $region15: #{bert_context_emb_forward.1} parent=1 // pred_check_branch
      %34 = sbr.rel (0) target = $region17
    $region16: #{bert_context_emb_forward.1} parent=1 // pred_region
      %36 = vsyncadd [#allocation8], 0
      %s37 = sshll.u32 %s4, 4
      %s38 = int_to_ptr.hbm [resolvable:$true] %s37
      %s39 = sshll.u32 [#allocation7], 4
      %s40 = int_to_ptr.vmem [resolvable:$true] %s39
      %45 = dma.hbm_to_vmem [thread:$0]  %s38, 6144, %s40, [#allocation8], 64, 64, 4
    $region17: #{bert_context_emb_forward.1} parent=1 // pred_fallthru
      _
    // Predicated region
    $region18: #{bert_context_emb_forward.1} parent=1 // pred_check
      _
    $region19: #{bert_context_emb_forward.1} parent=1 // pred_check_branch
      %47 = sbr.rel (0) target = $region21
    $region20: #{bert_context_emb_forward.1} parent=1 // pred_region
      %49 = vsyncadd [#allocation8], 0
      %s51 = sshll.u32 %s5, 4
      %s52 = int_to_ptr.hbm [resolvable:$true] %s51
      %s53 = sshll.u32 [#allocation9], 4
      %s54 = int_to_ptr.vmem [resolvable:$true] %s53
      %56 = dma.hbm_to_vmem [thread:$0]  %s52, 96, %s54, [#allocation8]
    $region21: #{bert_context_emb_forward.1} parent=1 // pred_fallthru
      _
    // Predicated region
    $region22: #{bert_context_emb_forward.1} parent=1 // pred_check
      _
    $region23: #{bert_context_emb_forward.1} parent=1 // pred_check_branch
      %58 = sbr.rel (0) target = $region25
    $region24: #{bert_context_emb_forward.1} parent=1 // pred_region
      %60 = vsyncadd [#allocation11], 0
      %s62 = sshll.u32 %s6, 4
      %s63 = int_to_ptr.hbm [resolvable:$true] %s62
      %s64 = sshll.u32 [#allocation10], 4
      %s65 = int_to_ptr.vmem [resolvable:$true] %s64
      %67 = dma.hbm_to_vmem [thread:$0]  %s63, 16, %s65, [#allocation11]
    $region25: #{bert_context_emb_forward.1} parent=1 // pred_fallthru
      _
    // Predicated region
    $region26: #{bert_context_emb_forward.1} parent=1 // pred_check
      _
    $region27: #{bert_context_emb_forward.1} parent=1 // pred_check_branch
      %69 = sbr.rel (0) target = $region29
    $region28: #{bert_context_emb_forward.1} parent=1 // pred_region
      %71 = dma.done [#allocation5], 43008
    $region29: #{bert_context_emb_forward.1} parent=1 // pred_fallthru
      _
    // Predicated region
    $region30: #{bert_context_emb_forward.1} parent=1 // pred_check
      _
    $region31: #{bert_context_emb_forward.1} parent=1 // pred_check_branch
      %73 = sbr.rel (0) target = $region33
    $region32: #{bert_context_emb_forward.1} parent=1 // pred_region
      %75 = dma.done [#allocation8], 6144
    $region33: #{bert_context_emb_forward.1} parent=1 // pred_fallthru
      _
    // Predicated region
    $region34: #{bert_context_emb_forward.1} parent=1 // pred_check
      _
    $region35: #{bert_context_emb_forward.1} parent=1 // pred_check_branch
      %77 = sbr.rel (0) target = $region37
    $region36: #{bert_context_emb_forward.1} parent=1 // pred_region
      %79 = dma.done [#allocation8], 96
    $region37: #{bert_context_emb_forward.1} parent=1 // pred_fallthru
      _
    // Predicated region
    $region38: #{bert_context_emb_forward.1} parent=1 // pred_check
      _
    $region39: #{bert_context_emb_forward.1} parent=1 // pred_check_branch
      %81 = sbr.rel (0) target = $region41
    $region40: #{bert_context_emb_forward.1} parent=1 // pred_region
      %83 = dma.done [#allocation11], 16
    $region41: #{bert_context_emb_forward.1} parent=1 // pred_fallthru
      _
    // Predicated region
    $region42: #{bert_context_emb_forward.1} parent=1 // pred_check
      _
    $region43: #{bert_context_emb_forward.1} parent=1 // pred_check_branch
      %85 = sbr.rel target = $region45
    $region44: #{bert_context_emb_forward.1} parent=1 // pred_region
      %86 = sst [smem:[#allocation15]] [#allocation14]
      %87 = sst [smem:[#allocation16]] [#allocation13]
    $region45: #{bert_context_emb_forward.1} parent=1 // pred_fallthru
      _
    %89 = shalt.err (0)
    %s91 = sshll.u32 %s2, 4
    %s92 = int_to_ptr.hbm [resolvable:$true] %s91
    %s93 = sshll.u32 [#allocation2], 4
    %s94 = int_to_ptr.vmem [resolvable:$true] %s93
    %96 = dma.hbm_to_vmem [thread:$0]  %s92, 36864, %s94, [#allocation3]
    %v97 = vld [vmem:[%s0] sm:$0xff]
    %v98 = vld [vmem:[%s0 + $0x8] sm:$0xf]
    %v99 = vld [vmem:[#allocation4] sm:$0xff]
    %v100 = vld [vmem:[#allocation4 + $0x8] sm:$0xff]
    %v101 = vld [vmem:[#allocation4 + $0x10] sm:$0xff]
    %v102 = vld [vmem:[#allocation4 + $0x18] sm:$0xf]
    %v103 = vld [vmem:[#allocation4 + $0x1c] sm:$0xff]
    %v104 = vld [vmem:[#allocation4 + $0x24] sm:$0xff]
    %v105 = vld [vmem:[#allocation4 + $0x2c] sm:$0xff]
    %v106 = vld [vmem:[#allocation4 + $0x34] sm:$0xf]
    %v107 = vld [vmem:[#allocation4 + $0x38] sm:$0xff]
    %v108 = vld [vmem:[#allocation4 + $0x40] sm:$0xff]
    %v109 = vld [vmem:[#allocation4 + $0x48] sm:$0xff]
    %v110 = vld [vmem:[#allocation4 + $0x50] sm:$0xf]
    %v111 = vld [vmem:[#allocation4 + $0x54] sm:$0xff]
    %v112 = vld [vmem:[#allocation4 + $0x5c] sm:$0xff]
    %v113 = vld [vmem:[#allocation4 + $0x64] sm:$0xff]
    %v114 = vld [vmem:[#allocation4 + $0x6c] sm:$0xf]
    %v115 = vld [vmem:[#allocation4 + $0x70] sm:$0xff]
    %v116 = vld [vmem:[#allocation4 + $0x78] sm:$0xff]
    %v117 = vld [vmem:[#allocation4 + $0x80] sm:$0xff]
    %v118 = vld [vmem:[#allocation4 + $0x88] sm:$0xf]
    %v119 = vld [vmem:[#allocation4 + $0x8c] sm:$0xff]
    %v120 = vld [vmem:[#allocation4 + $0x94] sm:$0xff]
    %v121 = vld [vmem:[#allocation4 + $0x9c] sm:$0xff]
    %v122 = vld [vmem:[#allocation4 + $0xa4] sm:$0xf]
    %v123 = vld [vmem:[#allocation4 + $0xa8] sm:$0xff]
    %v124 = vld [vmem:[#allocation4 + $0xb0] sm:$0xff]
    %v125 = vld [vmem:[#allocation4 + $0xb8] sm:$0xff]
    %v126 = vld [vmem:[#allocation4 + $0xc0] sm:$0xf]
    %v127 = vld [vmem:[#allocation4 + $0xc4] sm:$0xff]
    %v128 = vld [vmem:[#allocation4 + $0xcc] sm:$0xff]
    %v129 = vld [vmem:[#allocation4 + $0xd4] sm:$0xff]
    %v130 = vld [vmem:[#allocation4 + $0xdc] sm:$0xf]
    %v131 = vld [vmem:[#allocation4 + $0xe0] sm:$0xff]
    %v132 = vld [vmem:[#allocation4 + $0xe8] sm:$0xff]
    %v133 = vld [vmem:[#allocation4 + $0xf0] sm:$0xff]
    %v134 = vld [vmem:[#allocation4 + $0xf8] sm:$0xf]
    %v135 = vld [vmem:[#allocation4 + $0xfc] sm:$0xff]
    %v136 = vld [vmem:[#allocation4 + $0x104] sm:$0xff]
    %v137 = vld [vmem:[#allocation4 + $0x10c] sm:$0xff]
    %v138 = vld [vmem:[#allocation4 + $0x114] sm:$0xf]
    %v139 = vld [vmem:[#allocation4 + $0x118] sm:$0xff]
    %v140 = vld [vmem:[#allocation4 + $0x120] sm:$0xff]
    %v141 = vld [vmem:[#allocation4 + $0x128] sm:$0xff]
    %v142 = vld [vmem:[#allocation4 + $0x130] sm:$0xf]
    %v143 = vld [vmem:[#allocation4 + $0x134] sm:$0xff]
    %v144 = vld [vmem:[#allocation4 + $0x13c] sm:$0xff]
    %v145 = vld [vmem:[#allocation4 + $0x144] sm:$0xff]
    %v146 = vld [vmem:[#allocation4 + $0x14c] sm:$0xf]
    %v147 = vld [vmem:[#allocation4 + $0x150] sm:$0xff]
    %v148 = vld [vmem:[#allocation4 + $0x158] sm:$0xff]
    %v149 = vld [vmem:[#allocation4 + $0x160] sm:$0xff]
    %v150 = vld [vmem:[#allocation4 + $0x168] sm:$0xf]
    %v151 = vld [vmem:[#allocation4 + $0x16c] sm:$0xff]
    %v152 = vld [vmem:[#allocation4 + $0x174] sm:$0xff]
    %v153 = vld [vmem:[#allocation4 + $0x17c] sm:$0xff]
    %v154 = vld [vmem:[#allocation4 + $0x184] sm:$0xf]
    %v155 = vld [vmem:[#allocation4 + $0x188] sm:$0xff]
    %v156 = vld [vmem:[#allocation4 + $0x190] sm:$0xff]
    %v157 = vld [vmem:[#allocation4 + $0x198] sm:$0xff]
    %v158 = vld [vmem:[#allocation4 + $0x1a0] sm:$0xf]
    %v159 = vld [vmem:[#allocation4 + $0x1a4] sm:$0xff]
    %v160 = vld [vmem:[#allocation4 + $0x1ac] sm:$0xff]
    %v161 = vld [vmem:[#allocation4 + $0x1b4] sm:$0xff]
    %v162 = vld [vmem:[#allocation4 + $0x1bc] sm:$0xf]
    %v163 = vld [vmem:[#allocation4 + $0x1c0] sm:$0xff]
    %v164 = vld [vmem:[#allocation4 + $0x1c8] sm:$0xff]
    %v165 = vld [vmem:[#allocation4 + $0x1d0] sm:$0xff]
    %v166 = vld [vmem:[#allocation4 + $0x1d8] sm:$0xf]
    %v167 = vld [vmem:[#allocation4 + $0x1dc] sm:$0xff]
    %v168 = vld [vmem:[#allocation4 + $0x1e4] sm:$0xff]
    %v169 = vld [vmem:[#allocation4 + $0x1ec] sm:$0xff]
    %v170 = vld [vmem:[#allocation4 + $0x1f4] sm:$0xf]
    %v171 = vld [vmem:[#allocation4 + $0x1f8] sm:$0xff]
    %v172 = vld [vmem:[#allocation4 + $0x200] sm:$0xff]
    %v173 = vld [vmem:[#allocation4 + $0x208] sm:$0xff]
    %v174 = vld [vmem:[#allocation4 + $0x210] sm:$0xf]
    %v175 = vld [vmem:[#allocation4 + $0x214] sm:$0xff]
    %v176 = vld [vmem:[#allocation4 + $0x21c] sm:$0xff]
    %v177 = vld [vmem:[#allocation4 + $0x224] sm:$0xff]
    %v178 = vld [vmem:[#allocation4 + $0x22c] sm:$0xf]
    %v179 = vld [vmem:[#allocation4 + $0x230] sm:$0xff]
    %v180 = vld [vmem:[#allocation4 + $0x238] sm:$0xff]
    %v181 = vld [vmem:[#allocation4 + $0x240] sm:$0xff]
    %v182 = vld [vmem:[#allocation4 + $0x248] sm:$0xf]
    %v183 = vld [vmem:[#allocation4 + $0x24c] sm:$0xff]
    %v184 = vld [vmem:[#allocation4 + $0x254] sm:$0xff]
    %v185 = vld [vmem:[#allocation4 + $0x25c] sm:$0xff]
    %v186 = vld [vmem:[#allocation4 + $0x264] sm:$0xf]
    %v187 = vld [vmem:[#allocation4 + $0x268] sm:$0xff]
    %v188 = vld [vmem:[#allocation4 + $0x270] sm:$0xff]
    %v189 = vld [vmem:[#allocation4 + $0x278] sm:$0xff]
    %v190 = vld [vmem:[#allocation4 + $0x280] sm:$0xf]
    %v191 = vld [vmem:[#allocation4 + $0x284] sm:$0xff]
    %v192 = vld [vmem:[#allocation4 + $0x28c] sm:$0xff]
    %v193 = vld [vmem:[#allocation4 + $0x294] sm:$0xff]
    %v194 = vld [vmem:[#allocation4 + $0x29c] sm:$0xf]
    %v195 = vld [vmem:[#allocation4 + $0x2a0] sm:$0xff]
    %v196 = vld [vmem:[#allocation4 + $0x2a8] sm:$0xff]
    %v197 = vld [vmem:[#allocation4 + $0x2b0] sm:$0xff]
    %v198 = vld [vmem:[#allocation4 + $0x2b8] sm:$0xf]
    %v199 = vld [vmem:[#allocation4 + $0x2bc] sm:$0xff]
    %v200 = vld [vmem:[#allocation4 + $0x2c4] sm:$0xff]
    %v201 = vld [vmem:[#allocation4 + $0x2cc] sm:$0xff]
    %v202 = vld [vmem:[#allocation4 + $0x2d4] sm:$0xf]
    %v203 = vld [vmem:[#allocation4 + $0x2d8] sm:$0xff]
    %v204 = vld [vmem:[#allocation4 + $0x2e0] sm:$0xff]
    %v205 = vld [vmem:[#allocation4 + $0x2e8] sm:$0xff]
    %v206 = vld [vmem:[#allocation4 + $0x2f0] sm:$0xf]
    %v207 = vld [vmem:[#allocation4 + $0x2f4] sm:$0xff]
    %v208 = vld [vmem:[#allocation4 + $0x2fc] sm:$0xff]
    %v209 = vld [vmem:[#allocation4 + $0x304] sm:$0xff]
    %v210 = vld [vmem:[#allocation4 + $0x30c] sm:$0xf]
    %v211 = vld [vmem:[#allocation4 + $0x310] sm:$0xff]
    %v212 = vld [vmem:[#allocation4 + $0x318] sm:$0xff]
    %v213 = vld [vmem:[#allocation4 + $0x320] sm:$0xff]
    %v214 = vld [vmem:[#allocation4 + $0x328] sm:$0xf]
    %v215 = vld [vmem:[#allocation4 + $0x32c] sm:$0xff]
    %v216 = vld [vmem:[#allocation4 + $0x334] sm:$0xff]
    %v217 = vld [vmem:[#allocation4 + $0x33c] sm:$0xff]
    %v218 = vld [vmem:[#allocation4 + $0x344] sm:$0xf]
    %v219 = vld [vmem:[#allocation4 + $0x348] sm:$0xff]
    %v220 = vld [vmem:[#allocation4 + $0x350] sm:$0xff]
    %v221 = vld [vmem:[#allocation4 + $0x358] sm:$0xff]
    %v222 = vld [vmem:[#allocation4 + $0x360] sm:$0xf]
    %v223 = vld [vmem:[#allocation4 + $0x364] sm:$0xff]
    %v224 = vld [vmem:[#allocation4 + $0x36c] sm:$0xff]
    %v225 = vld [vmem:[#allocation4 + $0x374] sm:$0xff]
    %v226 = vld [vmem:[#allocation4 + $0x37c] sm:$0xf]
    %v227 = vld [vmem:[#allocation4 + $0x380] sm:$0xff]
    %v228 = vld [vmem:[#allocation4 + $0x388] sm:$0xff]
    %v229 = vld [vmem:[#allocation4 + $0x390] sm:$0xff]
    %v230 = vld [vmem:[#allocation4 + $0x398] sm:$0xf]
    %v231 = vld [vmem:[#allocation4 + $0x39c] sm:$0xff]
    %v232 = vld [vmem:[#allocation4 + $0x3a4] sm:$0xff]
    %v233 = vld [vmem:[#allocation4 + $0x3ac] sm:$0xff]
    %v234 = vld [vmem:[#allocation4 + $0x3b4] sm:$0xf]
    %v235 = vld [vmem:[#allocation4 + $0x3b8] sm:$0xff]
    %v236 = vld [vmem:[#allocation4 + $0x3c0] sm:$0xff]
    %v237 = vld [vmem:[#allocation4 + $0x3c8] sm:$0xff]
    %v238 = vld [vmem:[#allocation4 + $0x3d0] sm:$0xf]
    %v239 = vld [vmem:[#allocation4 + $0x3d4] sm:$0xff]
    %v240 = vld [vmem:[#allocation4 + $0x3dc] sm:$0xff]
    %v241 = vld [vmem:[#allocation4 + $0x3e4] sm:$0xff]
    %v242 = vld [vmem:[#allocation4 + $0x3ec] sm:$0xf]
    %v243 = vld [vmem:[#allocation4 + $0x3f0] sm:$0xff]
    %v244 = vld [vmem:[#allocation4 + $0x3f8] sm:$0xff]
    %v245 = vld [vmem:[#allocation4 + $0x400] sm:$0xff]
    %v246 = vld [vmem:[#allocation4 + $0x408] sm:$0xf]
    %v247 = vld [vmem:[#allocation4 + $0x40c] sm:$0xff]
    %v248 = vld [vmem:[#allocation4 + $0x414] sm:$0xff]
    %v249 = vld [vmem:[#allocation4 + $0x41c] sm:$0xff]
    %v250 = vld [vmem:[#allocation4 + $0x424] sm:$0xf]
    %v251 = vld [vmem:[#allocation4 + $0x428] sm:$0xff]
    %v252 = vld [vmem:[#allocation4 + $0x430] sm:$0xff]
    %v253 = vld [vmem:[#allocation4 + $0x438] sm:$0xff]
    %v254 = vld [vmem:[#allocation4 + $0x440] sm:$0xf]
    %v255 = vld [vmem:[#allocation4 + $0x444] sm:$0xff]
    %v256 = vld [vmem:[#allocation4 + $0x44c] sm:$0xff]
    %v257 = vld [vmem:[#allocation4 + $0x454] sm:$0xff]
    %v258 = vld [vmem:[#allocation4 + $0x45c] sm:$0xf]
    %v259 = vld [vmem:[#allocation4 + $0x460] sm:$0xff]
    %v260 = vld [vmem:[#allocation4 + $0x468] sm:$0xff]
    %v261 = vld [vmem:[#allocation4 + $0x470] sm:$0xff]
    %v262 = vld [vmem:[#allocation4 + $0x478] sm:$0xf]
    %v263 = vld [vmem:[#allocation4 + $0x47c] sm:$0xff]
    %v264 = vld [vmem:[#allocation4 + $0x484] sm:$0xff]
    %v265 = vld [vmem:[#allocation4 + $0x48c] sm:$0xff]
    %v266 = vld [vmem:[#allocation4 + $0x494] sm:$0xf]
    %v267 = vld [vmem:[#allocation4 + $0x498] sm:$0xff]
    %v268 = vld [vmem:[#allocation4 + $0x4a0] sm:$0xff]
    %v269 = vld [vmem:[#allocation4 + $0x4a8] sm:$0xff]
    %v270 = vld [vmem:[#allocation4 + $0x4b0] sm:$0xf]
    %v271 = vld [vmem:[#allocation4 + $0x4b4] sm:$0xff]
    %v272 = vld [vmem:[#allocation4 + $0x4bc] sm:$0xff]
    %v273 = vld [vmem:[#allocation4 + $0x4c4] sm:$0xff]
    %v274 = vld [vmem:[#allocation4 + $0x4cc] sm:$0xf]
    %v275 = vld [vmem:[#allocation4 + $0x4d0] sm:$0xff]
    %v276 = vld [vmem:[#allocation4 + $0x4d8] sm:$0xff]
    %v277 = vld [vmem:[#allocation4 + $0x4e0] sm:$0xff]
    %v278 = vld [vmem:[#allocation4 + $0x4e8] sm:$0xf]
    %v279 = vld [vmem:[#allocation4 + $0x4ec] sm:$0xff]
    %v280 = vld [vmem:[#allocation4 + $0x4f4] sm:$0xff]
    %v281 = vld [vmem:[#allocation4 + $0x4fc] sm:$0xff]
    %v282 = vld [vmem:[#allocation4 + $0x504] sm:$0xf]
    %v283 = vld [vmem:[#allocation4 + $0x508] sm:$0xff]
    %v284 = vld [vmem:[#allocation4 + $0x510] sm:$0xff]
    %v285 = vld [vmem:[#allocation4 + $0x518] sm:$0xff]
    %v286 = vld [vmem:[#allocation4 + $0x520] sm:$0xf]
    %v287 = vld [vmem:[#allocation4 + $0x524] sm:$0xff]
    %v288 = vld [vmem:[#allocation4 + $0x52c] sm:$0xff]
    %v289 = vld [vmem:[#allocation4 + $0x534] sm:$0xff]
    %v290 = vld [vmem:[#allocation4 + $0x53c] sm:$0xf]
    %v291 = vld [vmem:[#allocation4 + $0x540] sm:$0xff]
    %v292 = vld [vmem:[#allocation4 + $0x548] sm:$0xff]
    %v293 = vld [vmem:[#allocation4 + $0x550] sm:$0xff]
    %v294 = vld [vmem:[#allocation4 + $0x558] sm:$0xf]
    %v295 = vld [vmem:[#allocation4 + $0x55c] sm:$0xff]
    %v296 = vld [vmem:[#allocation4 + $0x564] sm:$0xff]
    %v297 = vld [vmem:[#allocation4 + $0x56c] sm:$0xff]
    %v298 = vld [vmem:[#allocation4 + $0x574] sm:$0xf]
    %v299 = vld [vmem:[#allocation4 + $0x578] sm:$0xff]
    %v300 = vld [vmem:[#allocation4 + $0x580] sm:$0xff]
    %v301 = vld [vmem:[#allocation4 + $0x588] sm:$0xff]
    %v302 = vld [vmem:[#allocation4 + $0x590] sm:$0xf]
    %v303 = vld [vmem:[#allocation4 + $0x594] sm:$0xff]
    %v304 = vld [vmem:[#allocation4 + $0x59c] sm:$0xff]
    %v305 = vld [vmem:[#allocation4 + $0x5a4] sm:$0xff]
    %v306 = vld [vmem:[#allocation4 + $0x5ac] sm:$0xf]
    %v307 = vld [vmem:[#allocation4 + $0x5b0] sm:$0xff]
    %v308 = vld [vmem:[#allocation4 + $0x5b8] sm:$0xff]
    %v309 = vld [vmem:[#allocation4 + $0x5c0] sm:$0xff]
    %v310 = vld [vmem:[#allocation4 + $0x5c8] sm:$0xf]
    %v311 = vld [vmem:[#allocation4 + $0x5cc] sm:$0xff]
    %v312 = vld [vmem:[#allocation4 + $0x5d4] sm:$0xff]
    %v313 = vld [vmem:[#allocation4 + $0x5dc] sm:$0xff]
    %v314 = vld [vmem:[#allocation4 + $0x5e4] sm:$0xf]
    %v315 = vld [vmem:[#allocation4 + $0x5e8] sm:$0xff]
    %v316 = vld [vmem:[#allocation4 + $0x5f0] sm:$0xff]
    %v317 = vld [vmem:[#allocation4 + $0x5f8] sm:$0xff]
    %v318 = vld [vmem:[#allocation4 + $0x600] sm:$0xf]
    %v319 = vld [vmem:[#allocation4 + $0x604] sm:$0xff]
    %v320 = vld [vmem:[#allocation4 + $0x60c] sm:$0xff]
    %v321 = vld [vmem:[#allocation4 + $0x614] sm:$0xff]
    %v322 = vld [vmem:[#allocation4 + $0x61c] sm:$0xf]
    %v323 = vld [vmem:[#allocation4 + $0x620] sm:$0xff]
    %v324 = vld [vmem:[#allocation4 + $0x628] sm:$0xff]
    %v325 = vld [vmem:[#allocation4 + $0x630] sm:$0xff]
    %v326 = vld [vmem:[#allocation4 + $0x638] sm:$0xf]
    %v327 = vld [vmem:[#allocation4 + $0x63c] sm:$0xff]
    %v328 = vld [vmem:[#allocation4 + $0x644] sm:$0xff]
    %v329 = vld [vmem:[#allocation4 + $0x64c] sm:$0xff]
    %v330 = vld [vmem:[#allocation4 + $0x654] sm:$0xf]
    %v331 = vld [vmem:[#allocation4 + $0x658] sm:$0xff]
    %v332 = vld [vmem:[#allocation4 + $0x660] sm:$0xff]
    %v333 = vld [vmem:[#allocation4 + $0x668] sm:$0xff]
    %v334 = vld [vmem:[#allocation4 + $0x670] sm:$0xf]
    %v335 = vld [vmem:[#allocation4 + $0x674] sm:$0xff]
    %v336 = vld [vmem:[#allocation4 + $0x67c] sm:$0xff]
    %v337 = vld [vmem:[#allocation4 + $0x684] sm:$0xff]
    %v338 = vld [vmem:[#allocation4 + $0x68c] sm:$0xf]
    %v339 = vld [vmem:[#allocation4 + $0x690] sm:$0xff]
    %v340 = vld [vmem:[#allocation4 + $0x698] sm:$0xff]
    %v341 = vld [vmem:[#allocation4 + $0x6a0] sm:$0xff]
    %v342 = vld [vmem:[#allocation4 + $0x6a8] sm:$0xf]
    %v343 = vld [vmem:[#allocation4 + $0x6ac] sm:$0xff]
    %v344 = vld [vmem:[#allocation4 + $0x6b4] sm:$0xff]
    %v345 = vld [vmem:[#allocation4 + $0x6bc] sm:$0xff]
    %v346 = vld [vmem:[#allocation4 + $0x6c4] sm:$0xf]
    %v347 = vld [vmem:[#allocation4 + $0x6c8] sm:$0xff]
    %v348 = vld [vmem:[#allocation4 + $0x6d0] sm:$0xff]
    %v349 = vld [vmem:[#allocation4 + $0x6d8] sm:$0xff]
    %v350 = vld [vmem:[#allocation4 + $0x6e0] sm:$0xf]
    %v351 = vld [vmem:[#allocation4 + $0x6e4] sm:$0xff]
    %v352 = vld [vmem:[#allocation4 + $0x6ec] sm:$0xff]
    %v353 = vld [vmem:[#allocation4 + $0x6f4] sm:$0xff]
    %v354 = vld [vmem:[#allocation4 + $0x6fc] sm:$0xf]
    %v355 = vld [vmem:[#allocation4 + $0x700] sm:$0xff]
    %v356 = vld [vmem:[#allocation4 + $0x708] sm:$0xff]
    %v357 = vld [vmem:[#allocation4 + $0x710] sm:$0xff]
    %v358 = vld [vmem:[#allocation4 + $0x718] sm:$0xf]
    %v359 = vld [vmem:[#allocation4 + $0x71c] sm:$0xff]
    %v360 = vld [vmem:[#allocation4 + $0x724] sm:$0xff]
    %v361 = vld [vmem:[#allocation4 + $0x72c] sm:$0xff]
    %v362 = vld [vmem:[#allocation4 + $0x734] sm:$0xf]
    %v363 = vld [vmem:[#allocation4 + $0x738] sm:$0xff]
    %v364 = vld [vmem:[#allocation4 + $0x740] sm:$0xff]
    %v365 = vld [vmem:[#allocation4 + $0x748] sm:$0xff]
    %v366 = vld [vmem:[#allocation4 + $0x750] sm:$0xf]
    %v367 = vld [vmem:[#allocation4 + $0x754] sm:$0xff]
    %v368 = vld [vmem:[#allocation4 + $0x75c] sm:$0xff]
    %v369 = vld [vmem:[#allocation4 + $0x764] sm:$0xff]
    %v370 = vld [vmem:[#allocation4 + $0x76c] sm:$0xf]
    %v371 = vld [vmem:[#allocation4 + $0x770] sm:$0xff]
    %v372 = vld [vmem:[#allocation4 + $0x778] sm:$0xff]
    %v373 = vld [vmem:[#allocation4 + $0x780] sm:$0xff]
    %v374 = vld [vmem:[#allocation4 + $0x788] sm:$0xf]
    %v375 = vld [vmem:[#allocation4 + $0x78c] sm:$0xff]
    %v376 = vld [vmem:[#allocation4 + $0x794] sm:$0xff]
    %v377 = vld [vmem:[#allocation4 + $0x79c] sm:$0xff]
    %v378 = vld [vmem:[#allocation4 + $0x7a4] sm:$0xf]
    %v379 = vld [vmem:[#allocation4 + $0x7a8] sm:$0xff]
    %v380 = vld [vmem:[#allocation4 + $0x7b0] sm:$0xff]
    %v381 = vld [vmem:[#allocation4 + $0x7b8] sm:$0xff]
    %v382 = vld [vmem:[#allocation4 + $0x7c0] sm:$0xf]
    %v383 = vld [vmem:[#allocation4 + $0x7c4] sm:$0xff]
    %v384 = vld [vmem:[#allocation4 + $0x7cc] sm:$0xff]
    %v385 = vld [vmem:[#allocation4 + $0x7d4] sm:$0xff]
    %v386 = vld [vmem:[#allocation4 + $0x7dc] sm:$0xf]
    %v387 = vld [vmem:[#allocation4 + $0x7e0] sm:$0xff]
    %v388 = vld [vmem:[#allocation4 + $0x7e8] sm:$0xff]
    %v389 = vld [vmem:[#allocation4 + $0x7f0] sm:$0xff]
    %v390 = vld [vmem:[#allocation4 + $0x7f8] sm:$0xf]
    %v391 = vld [vmem:[#allocation4 + $0x7fc] sm:$0xff]
    %v392 = vld [vmem:[#allocation4 + $0x804] sm:$0xff]
    %v393 = vld [vmem:[#allocation4 + $0x80c] sm:$0xff]
    %v394 = vld [vmem:[#allocation4 + $0x814] sm:$0xf]
    %v395 = vld [vmem:[#allocation4 + $0x818] sm:$0xff]
    %v396 = vld [vmem:[#allocation4 + $0x820] sm:$0xff]
    %v397 = vld [vmem:[#allocation4 + $0x828] sm:$0xff]
    %v398 = vld [vmem:[#allocation4 + $0x830] sm:$0xf]
    %v399 = vld [vmem:[#allocation4 + $0x834] sm:$0xff]
    %v400 = vld [vmem:[#allocation4 + $0x83c] sm:$0xff]
    %v401 = vld [vmem:[#allocation4 + $0x844] sm:$0xff]
    %v402 = vld [vmem:[#allocation4 + $0x84c] sm:$0xf]
    %v403 = vld [vmem:[#allocation4 + $0x850] sm:$0xff]
    %v404 = vld [vmem:[#allocation4 + $0x858] sm:$0xff]
    %v405 = vld [vmem:[#allocation4 + $0x860] sm:$0xff]
    %v406 = vld [vmem:[#allocation4 + $0x868] sm:$0xf]
    %v407 = vld [vmem:[#allocation4 + $0x86c] sm:$0xff]
    %v408 = vld [vmem:[#allocation4 + $0x874] sm:$0xff]
    %v409 = vld [vmem:[#allocation4 + $0x87c] sm:$0xff]
    %v410 = vld [vmem:[#allocation4 + $0x884] sm:$0xf]
    %v411 = vld [vmem:[#allocation4 + $0x888] sm:$0xff]
    %v412 = vld [vmem:[#allocation4 + $0x890] sm:$0xff]
    %v413 = vld [vmem:[#allocation4 + $0x898] sm:$0xff]
    %v414 = vld [vmem:[#allocation4 + $0x8a0] sm:$0xf]
    %v415 = vld [vmem:[#allocation4 + $0x8a4] sm:$0xff]
    %v416 = vld [vmem:[#allocation4 + $0x8ac] sm:$0xff]
    %v417 = vld [vmem:[#allocation4 + $0x8b4] sm:$0xff]
    %v418 = vld [vmem:[#allocation4 + $0x8bc] sm:$0xf]
    %v419 = vld [vmem:[#allocation4 + $0x8c0] sm:$0xff]
    %v420 = vld [vmem:[#allocation4 + $0x8c8] sm:$0xff]
    %v421 = vld [vmem:[#allocation4 + $0x8d0] sm:$0xff]
    %v422 = vld [vmem:[#allocation4 + $0x8d8] sm:$0xf]
    %v423 = vld [vmem:[#allocation4 + $0x8dc] sm:$0xff]
    %v424 = vld [vmem:[#allocation4 + $0x8e4] sm:$0xff]
    %v425 = vld [vmem:[#allocation4 + $0x8ec] sm:$0xff]
    %v426 = vld [vmem:[#allocation4 + $0x8f4] sm:$0xf]
    %v427 = vld [vmem:[#allocation4 + $0x8f8] sm:$0xff]
    %v428 = vld [vmem:[#allocation4 + $0x900] sm:$0xff]
    %v429 = vld [vmem:[#allocation4 + $0x908] sm:$0xff]
    %v430 = vld [vmem:[#allocation4 + $0x910] sm:$0xf]
    %v431 = vld [vmem:[#allocation4 + $0x914] sm:$0xff]
    %v432 = vld [vmem:[#allocation4 + $0x91c] sm:$0xff]
    %v433 = vld [vmem:[#allocation4 + $0x924] sm:$0xff]
    %v434 = vld [vmem:[#allocation4 + $0x92c] sm:$0xf]
    %v435 = vld [vmem:[#allocation4 + $0x930] sm:$0xff]
    %v436 = vld [vmem:[#allocation4 + $0x938] sm:$0xff]
    %v437 = vld [vmem:[#allocation4 + $0x940] sm:$0xff]
    %v438 = vld [vmem:[#allocation4 + $0x948] sm:$0xf]
    %v439 = vld [vmem:[#allocation4 + $0x94c] sm:$0xff]
    %v440 = vld [vmem:[#allocation4 + $0x954] sm:$0xff]
    %v441 = vld [vmem:[#allocation4 + $0x95c] sm:$0xff]
    %v442 = vld [vmem:[#allocation4 + $0x964] sm:$0xf]
    %v443 = vld [vmem:[#allocation4 + $0x968] sm:$0xff]
    %v444 = vld [vmem:[#allocation4 + $0x970] sm:$0xff]
    %v445 = vld [vmem:[#allocation4 + $0x978] sm:$0xff]
    %v446 = vld [vmem:[#allocation4 + $0x980] sm:$0xf]
    %v447 = vld [vmem:[#allocation4 + $0x984] sm:$0xff]
    %v448 = vld [vmem:[#allocation4 + $0x98c] sm:$0xff]
    %v449 = vld [vmem:[#allocation4 + $0x994] sm:$0xff]
    %v450 = vld [vmem:[#allocation4 + $0x99c] sm:$0xf]
    %v451 = vld [vmem:[#allocation4 + $0x9a0] sm:$0xff]
    %v452 = vld [vmem:[#allocation4 + $0x9a8] sm:$0xff]
    %v453 = vld [vmem:[#allocation4 + $0x9b0] sm:$0xff]
    %v454 = vld [vmem:[#allocation4 + $0x9b8] sm:$0xf]
    %v455 = vld [vmem:[#allocation4 + $0x9bc] sm:$0xff]
    %v456 = vld [vmem:[#allocation4 + $0x9c4] sm:$0xff]
    %v457 = vld [vmem:[#allocation4 + $0x9cc] sm:$0xff]
    %v458 = vld [vmem:[#allocation4 + $0x9d4] sm:$0xf]
    %v459 = vld [vmem:[#allocation4 + $0x9d8] sm:$0xff]
    %v460 = vld [vmem:[#allocation4 + $0x9e0] sm:$0xff]
    %v461 = vld [vmem:[#allocation4 + $0x9e8] sm:$0xff]
    %v462 = vld [vmem:[#allocation4 + $0x9f0] sm:$0xf]
    %v463 = vld [vmem:[#allocation4 + $0x9f4] sm:$0xff]
    %v464 = vld [vmem:[#allocation4 + $0x9fc] sm:$0xff]
    %v465 = vld [vmem:[#allocation4 + $0xa04] sm:$0xff]
    %v466 = vld [vmem:[#allocation4 + $0xa0c] sm:$0xf]
    %v467 = vld [vmem:[#allocation4 + $0xa10] sm:$0xff]
    %v468 = vld [vmem:[#allocation4 + $0xa18] sm:$0xff]
    %v469 = vld [vmem:[#allocation4 + $0xa20] sm:$0xff]
    %v470 = vld [vmem:[#allocation4 + $0xa28] sm:$0xf]
    %v471 = vld [vmem:[#allocation4 + $0xa2c] sm:$0xff]
    %v472 = vld [vmem:[#allocation4 + $0xa34] sm:$0xff]
    %v473 = vld [vmem:[#allocation4 + $0xa3c] sm:$0xff]
    %v474 = vld [vmem:[#allocation4 + $0xa44] sm:$0xf]
    %v475 = vld [vmem:[#allocation4 + $0xa48] sm:$0xff]
    %v476 = vld [vmem:[#allocation4 + $0xa50] sm:$0xff]
    %v477 = vld [vmem:[#allocation4 + $0xa58] sm:$0xff]
    %v478 = vld [vmem:[#allocation4 + $0xa60] sm:$0xf]
    %v479 = vld [vmem:[#allocation4 + $0xa64] sm:$0xff]
    %v480 = vld [vmem:[#allocation4 + $0xa6c] sm:$0xff]
    %v481 = vld [vmem:[#allocation4 + $0xa74] sm:$0xff]
    %v482 = vld [vmem:[#allocation4 + $0xa7c] sm:$0xf]
    %484 = vst [vmem:[#allocation1] ss:$4 sm:$0xff] %v97
    %s486 = scalar_lea.vmem [#allocation1], 32
    %487 = vst [vmem:[%s486] ss:$4 sm:$0xff] %v98
    %v488 = vld.sshfl [vmem:[#allocation1] sm:$0xff pattern:$0x73625140]
    %v489 = vld.sshfl [vmem:[#allocation1 + $0x8] sm:$0xff pattern:$0x73625140]
    %v490 = vld.sshfl [vmem:[#allocation1 + $0x10] sm:$0xff pattern:$0x73625140]
    %v491 = vld.sshfl [vmem:[#allocation1 + $0x18] sm:$0xff pattern:$0x73625140]
    %v492 = vld.sshfl [vmem:[#allocation1 + $0x20] sm:$0xff pattern:$0x73625140]
    %v493 = vld.sshfl [vmem:[#allocation1 + $0x28] sm:$0xff pattern:$0x73625140]
    %v884 = vunpack.c.l.b16 %v99
    %v885 = vunpack.c.h.b16 %v99
    %v886 = vunpack.c.l.b16 %v100
    %v887 = vunpack.c.h.b16 %v100
    %v888 = vunpack.c.l.b16 %v101
    %v889 = vunpack.c.h.b16 %v101
    %v890 = vunpack.c.l.b16 %v102
    %v891 = vunpack.c.l.b16 %v103
    %v892 = vunpack.c.h.b16 %v103
    %v893 = vunpack.c.l.b16 %v104
    %v894 = vunpack.c.h.b16 %v104
    %v895 = vunpack.c.l.b16 %v105
    %v896 = vunpack.c.h.b16 %v105
    %v897 = vunpack.c.l.b16 %v106
    %v898 = vunpack.c.l.b16 %v107
    %v899 = vunpack.c.h.b16 %v107
    %v900 = vunpack.c.l.b16 %v108
    %v901 = vunpack.c.h.b16 %v108
    %v902 = vunpack.c.l.b16 %v109
    %v903 = vunpack.c.h.b16 %v109
    %v904 = vunpack.c.l.b16 %v110
    %v905 = vunpack.c.l.b16 %v111
    %v906 = vunpack.c.h.b16 %v111
    %v907 = vunpack.c.l.b16 %v112
    %v908 = vunpack.c.h.b16 %v112
    %v909 = vunpack.c.l.b16 %v113
    %v910 = vunpack.c.h.b16 %v113
    %v911 = vunpack.c.l.b16 %v114
    %v912 = vunpack.c.l.b16 %v115
    %v913 = vunpack.c.h.b16 %v115
    %v914 = vunpack.c.l.b16 %v116
    %v915 = vunpack.c.h.b16 %v116
    %v916 = vunpack.c.l.b16 %v117
    %v917 = vunpack.c.h.b16 %v117
    %v918 = vunpack.c.l.b16 %v118
    %v919 = vunpack.c.l.b16 %v119
    %v920 = vunpack.c.h.b16 %v119
    %v921 = vunpack.c.l.b16 %v120
    %v922 = vunpack.c.h.b16 %v120
    %v923 = vunpack.c.l.b16 %v121
    %v924 = vunpack.c.h.b16 %v121
    %v925 = vunpack.c.l.b16 %v122
    %v926 = vunpack.c.l.b16 %v123
    %v927 = vunpack.c.h.b16 %v123
    %v928 = vunpack.c.l.b16 %v124
    %v929 = vunpack.c.h.b16 %v124
    %v930 = vunpack.c.l.b16 %v125
    %v931 = vunpack.c.h.b16 %v125
    %v932 = vunpack.c.l.b16 %v126
    %v933 = vunpack.c.l.b16 %v127
    %v934 = vunpack.c.h.b16 %v127
    %v935 = vunpack.c.l.b16 %v128
    %v936 = vunpack.c.h.b16 %v128
    %v937 = vunpack.c.l.b16 %v129
    %v938 = vunpack.c.h.b16 %v129
    %v939 = vunpack.c.l.b16 %v130
    %v940 = vunpack.c.l.b16 %v131
    %v941 = vunpack.c.h.b16 %v131
    %v942 = vunpack.c.l.b16 %v132
    %v943 = vunpack.c.h.b16 %v132
    %v944 = vunpack.c.l.b16 %v133
    %v945 = vunpack.c.h.b16 %v133
    %v946 = vunpack.c.l.b16 %v134
    %v947 = vunpack.c.l.b16 %v135
    %v948 = vunpack.c.h.b16 %v135
    %v949 = vunpack.c.l.b16 %v136
    %v950 = vunpack.c.h.b16 %v136
    %v951 = vunpack.c.l.b16 %v137
    %v952 = vunpack.c.h.b16 %v137
    %v953 = vunpack.c.l.b16 %v138
    %v954 = vunpack.c.l.b16 %v139
    %v955 = vunpack.c.h.b16 %v139
    %v956 = vunpack.c.l.b16 %v140
    %v957 = vunpack.c.h.b16 %v140
    %v958 = vunpack.c.l.b16 %v141
    %v959 = vunpack.c.h.b16 %v141
    %v960 = vunpack.c.l.b16 %v142
    %v961 = vunpack.c.l.b16 %v143
    %v962 = vunpack.c.h.b16 %v143
    %v963 = vunpack.c.l.b16 %v144
    %v964 = vunpack.c.h.b16 %v144
    %v965 = vunpack.c.l.b16 %v145
    %v966 = vunpack.c.h.b16 %v145
    %v967 = vunpack.c.l.b16 %v146
    %v968 = vunpack.c.l.b16 %v147
    %v969 = vunpack.c.h.b16 %v147
    %v970 = vunpack.c.l.b16 %v148
    %v971 = vunpack.c.h.b16 %v148
    %v972 = vunpack.c.l.b16 %v149
    %v973 = vunpack.c.h.b16 %v149
    %v974 = vunpack.c.l.b16 %v150
    %v975 = vunpack.c.l.b16 %v151
    %v976 = vunpack.c.h.b16 %v151
    %v977 = vunpack.c.l.b16 %v152
    %v978 = vunpack.c.h.b16 %v152
    %v979 = vunpack.c.l.b16 %v153
    %v980 = vunpack.c.h.b16 %v153
    %v981 = vunpack.c.l.b16 %v154
    %v982 = vunpack.c.l.b16 %v155
    %v983 = vunpack.c.h.b16 %v155
    %v984 = vunpack.c.l.b16 %v156
    %v985 = vunpack.c.h.b16 %v156
    %v986 = vunpack.c.l.b16 %v157
    %v987 = vunpack.c.h.b16 %v157
    %v988 = vunpack.c.l.b16 %v158
    %v989 = vunpack.c.l.b16 %v159
    %v990 = vunpack.c.h.b16 %v159
    %v991 = vunpack.c.l.b16 %v160
    %v992 = vunpack.c.h.b16 %v160
    %v993 = vunpack.c.l.b16 %v161
    %v994 = vunpack.c.h.b16 %v161
    %v995 = vunpack.c.l.b16 %v162
    %v996 = vunpack.c.l.b16 %v163
    %v997 = vunpack.c.h.b16 %v163
    %v998 = vunpack.c.l.b16 %v164
    %v999 = vunpack.c.h.b16 %v164
    %v1000 = vunpack.c.l.b16 %v165
    %v1001 = vunpack.c.h.b16 %v165
    %v1002 = vunpack.c.l.b16 %v166
    %v1003 = vunpack.c.l.b16 %v167
    %v1004 = vunpack.c.h.b16 %v167
    %v1005 = vunpack.c.l.b16 %v168
    %v1006 = vunpack.c.h.b16 %v168
    %v1007 = vunpack.c.l.b16 %v169
    %v1008 = vunpack.c.h.b16 %v169
    %v1009 = vunpack.c.l.b16 %v170
    %v1010 = vunpack.c.l.b16 %v171
    %v1011 = vunpack.c.h.b16 %v171
    %v1012 = vunpack.c.l.b16 %v172
    %v1013 = vunpack.c.h.b16 %v172
    %v1014 = vunpack.c.l.b16 %v173
    %v1015 = vunpack.c.h.b16 %v173
    %v1016 = vunpack.c.l.b16 %v174
    %v1017 = vunpack.c.l.b16 %v175
    %v1018 = vunpack.c.h.b16 %v175
    %v1019 = vunpack.c.l.b16 %v176
    %v1020 = vunpack.c.h.b16 %v176
    %v1021 = vunpack.c.l.b16 %v177
    %v1022 = vunpack.c.h.b16 %v177
    %v1023 = vunpack.c.l.b16 %v178
    %v1024 = vunpack.c.l.b16 %v179
    %v1025 = vunpack.c.h.b16 %v179
    %v1026 = vunpack.c.l.b16 %v180
    %v1027 = vunpack.c.h.b16 %v180
    %v1028 = vunpack.c.l.b16 %v181
    %v1029 = vunpack.c.h.b16 %v181
    %v1030 = vunpack.c.l.b16 %v182
    %v1031 = vunpack.c.l.b16 %v183
    %v1032 = vunpack.c.h.b16 %v183
    %v1033 = vunpack.c.l.b16 %v184
    %v1034 = vunpack.c.h.b16 %v184
    %v1035 = vunpack.c.l.b16 %v185
    %v1036 = vunpack.c.h.b16 %v185
    %v1037 = vunpack.c.l.b16 %v186
    %v1038 = vunpack.c.l.b16 %v187
    %v1039 = vunpack.c.h.b16 %v187
    %v1040 = vunpack.c.l.b16 %v188
    %v1041 = vunpack.c.h.b16 %v188
    %v1042 = vunpack.c.l.b16 %v189
    %v1043 = vunpack.c.h.b16 %v189
    %v1044 = vunpack.c.l.b16 %v190
    %v1045 = vunpack.c.l.b16 %v191
    %v1046 = vunpack.c.h.b16 %v191
    %v1047 = vunpack.c.l.b16 %v192
    %v1048 = vunpack.c.h.b16 %v192
    %v1049 = vunpack.c.l.b16 %v193
    %v1050 = vunpack.c.h.b16 %v193
    %v1051 = vunpack.c.l.b16 %v194
    %v1052 = vunpack.c.l.b16 %v195
    %v1053 = vunpack.c.h.b16 %v195
    %v1054 = vunpack.c.l.b16 %v196
    %v1055 = vunpack.c.h.b16 %v196
    %v1056 = vunpack.c.l.b16 %v197
    %v1057 = vunpack.c.h.b16 %v197
    %v1058 = vunpack.c.l.b16 %v198
    %v1059 = vunpack.c.l.b16 %v199
    %v1060 = vunpack.c.h.b16 %v199
    %v1061 = vunpack.c.l.b16 %v200
    %v1062 = vunpack.c.h.b16 %v200
    %v1063 = vunpack.c.l.b16 %v201
    %v1064 = vunpack.c.h.b16 %v201
    %v1065 = vunpack.c.l.b16 %v202
    %v1066 = vunpack.c.l.b16 %v203
    %v1067 = vunpack.c.h.b16 %v203
    %v1068 = vunpack.c.l.b16 %v204
    %v1069 = vunpack.c.h.b16 %v204
    %v1070 = vunpack.c.l.b16 %v205
    %v1071 = vunpack.c.h.b16 %v205
    %v1072 = vunpack.c.l.b16 %v206
    %v1073 = vunpack.c.l.b16 %v207
    %v1074 = vunpack.c.h.b16 %v207
    %v1075 = vunpack.c.l.b16 %v208
    %v1076 = vunpack.c.h.b16 %v208
    %v1077 = vunpack.c.l.b16 %v209
    %v1078 = vunpack.c.h.b16 %v209
    %v1079 = vunpack.c.l.b16 %v210
    %v1080 = vunpack.c.l.b16 %v211
    %v1081 = vunpack.c.h.b16 %v211
    %v1082 = vunpack.c.l.b16 %v212
    %v1083 = vunpack.c.h.b16 %v212
    %v1084 = vunpack.c.l.b16 %v213
    %v1085 = vunpack.c.h.b16 %v213
    %v1086 = vunpack.c.l.b16 %v214
    %v1087 = vunpack.c.l.b16 %v215
    %v1088 = vunpack.c.h.b16 %v215
    %v1089 = vunpack.c.l.b16 %v216
    %v1090 = vunpack.c.h.b16 %v216
    %v1091 = vunpack.c.l.b16 %v217
    %v1092 = vunpack.c.h.b16 %v217
    %v1093 = vunpack.c.l.b16 %v218
    %v1094 = vunpack.c.l.b16 %v219
    %v1095 = vunpack.c.h.b16 %v219
    %v1096 = vunpack.c.l.b16 %v220
    %v1097 = vunpack.c.h.b16 %v220
    %v1098 = vunpack.c.l.b16 %v221
    %v1099 = vunpack.c.h.b16 %v221
    %v1100 = vunpack.c.l.b16 %v222
    %v1101 = vunpack.c.l.b16 %v223
    %v1102 = vunpack.c.h.b16 %v223
    %v1103 = vunpack.c.l.b16 %v224
    %v1104 = vunpack.c.h.b16 %v224
    %v1105 = vunpack.c.l.b16 %v225
    %v1106 = vunpack.c.h.b16 %v225
    %v1107 = vunpack.c.l.b16 %v226
    %v1108 = vunpack.c.l.b16 %v227
    %v1109 = vunpack.c.h.b16 %v227
    %v1110 = vunpack.c.l.b16 %v228
    %v1111 = vunpack.c.h.b16 %v228
    %v1112 = vunpack.c.l.b16 %v229
    %v1113 = vunpack.c.h.b16 %v229
    %v1114 = vunpack.c.l.b16 %v230
    %v1115 = vunpack.c.l.b16 %v231
    %v1116 = vunpack.c.h.b16 %v231
    %v1117 = vunpack.c.l.b16 %v232
    %v1118 = vunpack.c.h.b16 %v232
    %v1119 = vunpack.c.l.b16 %v233
    %v1120 = vunpack.c.h.b16 %v233
    %v1121 = vunpack.c.l.b16 %v234
    %v1122 = vunpack.c.l.b16 %v235
    %v1123 = vunpack.c.h.b16 %v235
    %v1124 = vunpack.c.l.b16 %v236
    %v1125 = vunpack.c.h.b16 %v236
    %v1126 = vunpack.c.l.b16 %v237
    %v1127 = vunpack.c.h.b16 %v237
    %v1128 = vunpack.c.l.b16 %v238
    %v1129 = vunpack.c.l.b16 %v239
    %v1130 = vunpack.c.h.b16 %v239
    %v1131 = vunpack.c.l.b16 %v240
    %v1132 = vunpack.c.h.b16 %v240
    %v1133 = vunpack.c.l.b16 %v241
    %v1134 = vunpack.c.h.b16 %v241
    %v1135 = vunpack.c.l.b16 %v242
    %v1136 = vunpack.c.l.b16 %v243
    %v1137 = vunpack.c.h.b16 %v243
    %v1138 = vunpack.c.l.b16 %v244
    %v1139 = vunpack.c.h.b16 %v244
    %v1140 = vunpack.c.l.b16 %v245
    %v1141 = vunpack.c.h.b16 %v245
    %v1142 = vunpack.c.l.b16 %v246
    %v1143 = vunpack.c.l.b16 %v247
    %v1144 = vunpack.c.h.b16 %v247
    %v1145 = vunpack.c.l.b16 %v248
    %v1146 = vunpack.c.h.b16 %v248
    %v1147 = vunpack.c.l.b16 %v249
    %v1148 = vunpack.c.h.b16 %v249
    %v1149 = vunpack.c.l.b16 %v250
    %v1150 = vunpack.c.l.b16 %v251
    %v1151 = vunpack.c.h.b16 %v251
    %v1152 = vunpack.c.l.b16 %v252
    %v1153 = vunpack.c.h.b16 %v252
    %v1154 = vunpack.c.l.b16 %v253
    %v1155 = vunpack.c.h.b16 %v253
    %v1156 = vunpack.c.l.b16 %v254
    %v1157 = vunpack.c.l.b16 %v255
    %v1158 = vunpack.c.h.b16 %v255
    %v1159 = vunpack.c.l.b16 %v256
    %v1160 = vunpack.c.h.b16 %v256
    %v1161 = vunpack.c.l.b16 %v257
    %v1162 = vunpack.c.h.b16 %v257
    %v1163 = vunpack.c.l.b16 %v258
    %v1164 = vunpack.c.l.b16 %v259
    %v1165 = vunpack.c.h.b16 %v259
    %v1166 = vunpack.c.l.b16 %v260
    %v1167 = vunpack.c.h.b16 %v260
    %v1168 = vunpack.c.l.b16 %v261
    %v1169 = vunpack.c.h.b16 %v261
    %v1170 = vunpack.c.l.b16 %v262
    %v1171 = vunpack.c.l.b16 %v263
    %v1172 = vunpack.c.h.b16 %v263
    %v1173 = vunpack.c.l.b16 %v264
    %v1174 = vunpack.c.h.b16 %v264
    %v1175 = vunpack.c.l.b16 %v265
    %v1176 = vunpack.c.h.b16 %v265
    %v1177 = vunpack.c.l.b16 %v266
    %v1178 = vunpack.c.l.b16 %v267
    %v1179 = vunpack.c.h.b16 %v267
    %v1180 = vunpack.c.l.b16 %v268
    %v1181 = vunpack.c.h.b16 %v268
    %v1182 = vunpack.c.l.b16 %v269
    %v1183 = vunpack.c.h.b16 %v269
    %v1184 = vunpack.c.l.b16 %v270
    %v1185 = vunpack.c.l.b16 %v271
    %v1186 = vunpack.c.h.b16 %v271
    %v1187 = vunpack.c.l.b16 %v272
    %v1188 = vunpack.c.h.b16 %v272
    %v1189 = vunpack.c.l.b16 %v273
    %v1190 = vunpack.c.h.b16 %v273
    %v1191 = vunpack.c.l.b16 %v274
    %v1192 = vunpack.c.l.b16 %v275
    %v1193 = vunpack.c.h.b16 %v275
    %v1194 = vunpack.c.l.b16 %v276
    %v1195 = vunpack.c.h.b16 %v276
    %v1196 = vunpack.c.l.b16 %v277
    %v1197 = vunpack.c.h.b16 %v277
    %v1198 = vunpack.c.l.b16 %v278
    %v1199 = vunpack.c.l.b16 %v279
    %v1200 = vunpack.c.h.b16 %v279
    %v1201 = vunpack.c.l.b16 %v280
    %v1202 = vunpack.c.h.b16 %v280
    %v1203 = vunpack.c.l.b16 %v281
    %v1204 = vunpack.c.h.b16 %v281
    %v1205 = vunpack.c.l.b16 %v282
    %v1206 = vunpack.c.l.b16 %v283
    %v1207 = vunpack.c.h.b16 %v283
    %v1208 = vunpack.c.l.b16 %v284
    %v1209 = vunpack.c.h.b16 %v284
    %v1210 = vunpack.c.l.b16 %v285
    %v1211 = vunpack.c.h.b16 %v285
    %v1212 = vunpack.c.l.b16 %v286
    %v1213 = vunpack.c.l.b16 %v287
    %v1214 = vunpack.c.h.b16 %v287
    %v1215 = vunpack.c.l.b16 %v288
    %v1216 = vunpack.c.h.b16 %v288
    %v1217 = vunpack.c.l.b16 %v289
    %v1218 = vunpack.c.h.b16 %v289
    %v1219 = vunpack.c.l.b16 %v290
    %v1220 = vunpack.c.l.b16 %v291
    %v1221 = vunpack.c.h.b16 %v291
    %v1222 = vunpack.c.l.b16 %v292
    %v1223 = vunpack.c.h.b16 %v292
    %v1224 = vunpack.c.l.b16 %v293
    %v1225 = vunpack.c.h.b16 %v293
    %v1226 = vunpack.c.l.b16 %v294
    %v1227 = vunpack.c.l.b16 %v295
    %v1228 = vunpack.c.h.b16 %v295
    %v1229 = vunpack.c.l.b16 %v296
    %v1230 = vunpack.c.h.b16 %v296
    %v1231 = vunpack.c.l.b16 %v297
    %v1232 = vunpack.c.h.b16 %v297
    %v1233 = vunpack.c.l.b16 %v298
    %v1234 = vunpack.c.l.b16 %v299
    %v1235 = vunpack.c.h.b16 %v299
    %v1236 = vunpack.c.l.b16 %v300
    %v1237 = vunpack.c.h.b16 %v300
    %v1238 = vunpack.c.l.b16 %v301
    %v1239 = vunpack.c.h.b16 %v301
    %v1240 = vunpack.c.l.b16 %v302
    %v1241 = vunpack.c.l.b16 %v303
    %v1242 = vunpack.c.h.b16 %v303
    %v1243 = vunpack.c.l.b16 %v304
    %v1244 = vunpack.c.h.b16 %v304
    %v1245 = vunpack.c.l.b16 %v305
    %v1246 = vunpack.c.h.b16 %v305
    %v1247 = vunpack.c.l.b16 %v306
    %v1248 = vunpack.c.l.b16 %v307
    %v1249 = vunpack.c.h.b16 %v307
    %v1250 = vunpack.c.l.b16 %v308
    %v1251 = vunpack.c.h.b16 %v308
    %v1252 = vunpack.c.l.b16 %v309
    %v1253 = vunpack.c.h.b16 %v309
    %v1254 = vunpack.c.l.b16 %v310
    %v1255 = vunpack.c.l.b16 %v311
    %v1256 = vunpack.c.h.b16 %v311
    %v1257 = vunpack.c.l.b16 %v312
    %v1258 = vunpack.c.h.b16 %v312
    %v1259 = vunpack.c.l.b16 %v313
    %v1260 = vunpack.c.h.b16 %v313
    %v1261 = vunpack.c.l.b16 %v314
    %v1262 = vunpack.c.l.b16 %v315
    %v1263 = vunpack.c.h.b16 %v315
    %v1264 = vunpack.c.l.b16 %v316
    %v1265 = vunpack.c.h.b16 %v316
    %v1266 = vunpack.c.l.b16 %v317
    %v1267 = vunpack.c.h.b16 %v317
    %v1268 = vunpack.c.l.b16 %v318
    %v1269 = vunpack.c.l.b16 %v319
    %v1270 = vunpack.c.h.b16 %v319
    %v1271 = vunpack.c.l.b16 %v320
    %v1272 = vunpack.c.h.b16 %v320
    %v1273 = vunpack.c.l.b16 %v321
    %v1274 = vunpack.c.h.b16 %v321
    %v1275 = vunpack.c.l.b16 %v322
    %v1276 = vunpack.c.l.b16 %v323
    %v1277 = vunpack.c.h.b16 %v323
    %v1278 = vunpack.c.l.b16 %v324
    %v1279 = vunpack.c.h.b16 %v324
    %v1280 = vunpack.c.l.b16 %v325
    %v1281 = vunpack.c.h.b16 %v325
    %v1282 = vunpack.c.l.b16 %v326
    %v1283 = vunpack.c.l.b16 %v327
    %v1284 = vunpack.c.h.b16 %v327
    %v1285 = vunpack.c.l.b16 %v328
    %v1286 = vunpack.c.h.b16 %v328
    %v1287 = vunpack.c.l.b16 %v329
    %v1288 = vunpack.c.h.b16 %v329
    %v1289 = vunpack.c.l.b16 %v330
    %v1290 = vunpack.c.l.b16 %v331
    %v1291 = vunpack.c.h.b16 %v331
    %v1292 = vunpack.c.l.b16 %v332
    %v1293 = vunpack.c.h.b16 %v332
    %v1294 = vunpack.c.l.b16 %v333
    %v1295 = vunpack.c.h.b16 %v333
    %v1296 = vunpack.c.l.b16 %v334
    %v1297 = vunpack.c.l.b16 %v335
    %v1298 = vunpack.c.h.b16 %v335
    %v1299 = vunpack.c.l.b16 %v336
    %v1300 = vunpack.c.h.b16 %v336
    %v1301 = vunpack.c.l.b16 %v337
    %v1302 = vunpack.c.h.b16 %v337
    %v1303 = vunpack.c.l.b16 %v338
    %v1304 = vunpack.c.l.b16 %v339
    %v1305 = vunpack.c.h.b16 %v339
    %v1306 = vunpack.c.l.b16 %v340
    %v1307 = vunpack.c.h.b16 %v340
    %v1308 = vunpack.c.l.b16 %v341
    %v1309 = vunpack.c.h.b16 %v341
    %v1310 = vunpack.c.l.b16 %v342
    %v1311 = vunpack.c.l.b16 %v343
    %v1312 = vunpack.c.h.b16 %v343
    %v1313 = vunpack.c.l.b16 %v344
    %v1314 = vunpack.c.h.b16 %v344
    %v1315 = vunpack.c.l.b16 %v345
    %v1316 = vunpack.c.h.b16 %v345
    %v1317 = vunpack.c.l.b16 %v346
    %v1318 = vunpack.c.l.b16 %v347
    %v1319 = vunpack.c.h.b16 %v347
    %v1320 = vunpack.c.l.b16 %v348
    %v1321 = vunpack.c.h.b16 %v348
    %v1322 = vunpack.c.l.b16 %v349
    %v1323 = vunpack.c.h.b16 %v349
    %v1324 = vunpack.c.l.b16 %v350
    %v1325 = vunpack.c.l.b16 %v351
    %v1326 = vunpack.c.h.b16 %v351
    %v1327 = vunpack.c.l.b16 %v352
    %v1328 = vunpack.c.h.b16 %v352
    %v1329 = vunpack.c.l.b16 %v353
    %v1330 = vunpack.c.h.b16 %v353
    %v1331 = vunpack.c.l.b16 %v354
    %v1332 = vunpack.c.l.b16 %v355
    %v1333 = vunpack.c.h.b16 %v355
    %v1334 = vunpack.c.l.b16 %v356
    %v1335 = vunpack.c.h.b16 %v356
    %v1336 = vunpack.c.l.b16 %v357
    %v1337 = vunpack.c.h.b16 %v357
    %v1338 = vunpack.c.l.b16 %v358
    %v1339 = vunpack.c.l.b16 %v359
    %v1340 = vunpack.c.h.b16 %v359
    %v1341 = vunpack.c.l.b16 %v360
    %v1342 = vunpack.c.h.b16 %v360
    %v1343 = vunpack.c.l.b16 %v361
    %v1344 = vunpack.c.h.b16 %v361
    %v1345 = vunpack.c.l.b16 %v362
    %v1346 = vunpack.c.l.b16 %v363
    %v1347 = vunpack.c.h.b16 %v363
    %v1348 = vunpack.c.l.b16 %v364
    %v1349 = vunpack.c.h.b16 %v364
    %v1350 = vunpack.c.l.b16 %v365
    %v1351 = vunpack.c.h.b16 %v365
    %v1352 = vunpack.c.l.b16 %v366
    %v1353 = vunpack.c.l.b16 %v367
    %v1354 = vunpack.c.h.b16 %v367
    %v1355 = vunpack.c.l.b16 %v368
    %v1356 = vunpack.c.h.b16 %v368
    %v1357 = vunpack.c.l.b16 %v369
    %v1358 = vunpack.c.h.b16 %v369
    %v1359 = vunpack.c.l.b16 %v370
    %v1360 = vunpack.c.l.b16 %v371
    %v1361 = vunpack.c.h.b16 %v371
    %v1362 = vunpack.c.l.b16 %v372
    %v1363 = vunpack.c.h.b16 %v372
    %v1364 = vunpack.c.l.b16 %v373
    %v1365 = vunpack.c.h.b16 %v373
    %v1366 = vunpack.c.l.b16 %v374
    %v1367 = vunpack.c.l.b16 %v375
    %v1368 = vunpack.c.h.b16 %v375
    %v1369 = vunpack.c.l.b16 %v376
    %v1370 = vunpack.c.h.b16 %v376
    %v1371 = vunpack.c.l.b16 %v377
    %v1372 = vunpack.c.h.b16 %v377
    %v1373 = vunpack.c.l.b16 %v378
    %v1374 = vunpack.c.l.b16 %v379
    %v1375 = vunpack.c.h.b16 %v379
    %v1376 = vunpack.c.l.b16 %v380
    %v1377 = vunpack.c.h.b16 %v380
    %v1378 = vunpack.c.l.b16 %v381
    %v1379 = vunpack.c.h.b16 %v381
    %v1380 = vunpack.c.l.b16 %v382
    %v1381 = vunpack.c.l.b16 %v383
    %v1382 = vunpack.c.h.b16 %v383
    %v1383 = vunpack.c.l.b16 %v384
    %v1384 = vunpack.c.h.b16 %v384
    %v1385 = vunpack.c.l.b16 %v385
    %v1386 = vunpack.c.h.b16 %v385
    %v1387 = vunpack.c.l.b16 %v386
    %v1388 = vunpack.c.l.b16 %v387
    %v1389 = vunpack.c.h.b16 %v387
    %v1390 = vunpack.c.l.b16 %v388
    %v1391 = vunpack.c.h.b16 %v388
    %v1392 = vunpack.c.l.b16 %v389
    %v1393 = vunpack.c.h.b16 %v389
    %v1394 = vunpack.c.l.b16 %v390
    %v1395 = vunpack.c.l.b16 %v391
    %v1396 = vunpack.c.h.b16 %v391
    %v1397 = vunpack.c.l.b16 %v392
    %v1398 = vunpack.c.h.b16 %v392
    %v1399 = vunpack.c.l.b16 %v393
    %v1400 = vunpack.c.h.b16 %v393
    %v1401 = vunpack.c.l.b16 %v394
    %v1402 = vunpack.c.l.b16 %v395
    %v1403 = vunpack.c.h.b16 %v395
    %v1404 = vunpack.c.l.b16 %v396
    %v1405 = vunpack.c.h.b16 %v396
    %v1406 = vunpack.c.l.b16 %v397
    %v1407 = vunpack.c.h.b16 %v397
    %v1408 = vunpack.c.l.b16 %v398
    %v1409 = vunpack.c.l.b16 %v399
    %v1410 = vunpack.c.h.b16 %v399
    %v1411 = vunpack.c.l.b16 %v400
    %v1412 = vunpack.c.h.b16 %v400
    %v1413 = vunpack.c.l.b16 %v401
    %v1414 = vunpack.c.h.b16 %v401
    %v1415 = vunpack.c.l.b16 %v402
    %v1416 = vunpack.c.l.b16 %v403
    %v1417 = vunpack.c.h.b16 %v403
    %v1418 = vunpack.c.l.b16 %v404
    %v1419 = vunpack.c.h.b16 %v404
    %v1420 = vunpack.c.l.b16 %v405
    %v1421 = vunpack.c.h.b16 %v405
    %v1422 = vunpack.c.l.b16 %v406
    %v1423 = vunpack.c.l.b16 %v407
    %v1424 = vunpack.c.h.b16 %v407
    %v1425 = vunpack.c.l.b16 %v408
    %v1426 = vunpack.c.h.b16 %v408
    %v1427 = vunpack.c.l.b16 %v409
    %v1428 = vunpack.c.h.b16 %v409
    %v1429 = vunpack.c.l.b16 %v410
    %v1430 = vunpack.c.l.b16 %v411
    %v1431 = vunpack.c.h.b16 %v411
    %v1432 = vunpack.c.l.b16 %v412
    %v1433 = vunpack.c.h.b16 %v412
    %v1434 = vunpack.c.l.b16 %v413
    %v1435 = vunpack.c.h.b16 %v413
    %v1436 = vunpack.c.l.b16 %v414
    %v1437 = vunpack.c.l.b16 %v415
    %v1438 = vunpack.c.h.b16 %v415
    %v1439 = vunpack.c.l.b16 %v416
    %v1440 = vunpack.c.h.b16 %v416
    %v1441 = vunpack.c.l.b16 %v417
    %v1442 = vunpack.c.h.b16 %v417
    %v1443 = vunpack.c.l.b16 %v418
    %v1444 = vunpack.c.l.b16 %v419
    %v1445 = vunpack.c.h.b16 %v419
    %v1446 = vunpack.c.l.b16 %v420
    %v1447 = vunpack.c.h.b16 %v420
    %v1448 = vunpack.c.l.b16 %v421
    %v1449 = vunpack.c.h.b16 %v421
    %v1450 = vunpack.c.l.b16 %v422
    %v1451 = vunpack.c.l.b16 %v423
    %v1452 = vunpack.c.h.b16 %v423
    %v1453 = vunpack.c.l.b16 %v424
    %v1454 = vunpack.c.h.b16 %v424
    %v1455 = vunpack.c.l.b16 %v425
    %v1456 = vunpack.c.h.b16 %v425
    %v1457 = vunpack.c.l.b16 %v426
    %v1458 = vunpack.c.l.b16 %v427
    %v1459 = vunpack.c.h.b16 %v427
    %v1460 = vunpack.c.l.b16 %v428
    %v1461 = vunpack.c.h.b16 %v428
    %v1462 = vunpack.c.l.b16 %v429
    %v1463 = vunpack.c.h.b16 %v429
    %v1464 = vunpack.c.l.b16 %v430
    %v1465 = vunpack.c.l.b16 %v431
    %v1466 = vunpack.c.h.b16 %v431
    %v1467 = vunpack.c.l.b16 %v432
    %v1468 = vunpack.c.h.b16 %v432
    %v1469 = vunpack.c.l.b16 %v433
    %v1470 = vunpack.c.h.b16 %v433
    %v1471 = vunpack.c.l.b16 %v434
    %v1472 = vunpack.c.l.b16 %v435
    %v1473 = vunpack.c.h.b16 %v435
    %v1474 = vunpack.c.l.b16 %v436
    %v1475 = vunpack.c.h.b16 %v436
    %v1476 = vunpack.c.l.b16 %v437
    %v1477 = vunpack.c.h.b16 %v437
    %v1478 = vunpack.c.l.b16 %v438
    %v1479 = vunpack.c.l.b16 %v439
    %v1480 = vunpack.c.h.b16 %v439
    %v1481 = vunpack.c.l.b16 %v440
    %v1482 = vunpack.c.h.b16 %v440
    %v1483 = vunpack.c.l.b16 %v441
    %v1484 = vunpack.c.h.b16 %v441
    %v1485 = vunpack.c.l.b16 %v442
    %v1486 = vunpack.c.l.b16 %v443
    %v1487 = vunpack.c.h.b16 %v443
    %v1488 = vunpack.c.l.b16 %v444
    %v1489 = vunpack.c.h.b16 %v444
    %v1490 = vunpack.c.l.b16 %v445
    %v1491 = vunpack.c.h.b16 %v445
    %v1492 = vunpack.c.l.b16 %v446
    %v1493 = vunpack.c.l.b16 %v447
    %v1494 = vunpack.c.h.b16 %v447
    %v1495 = vunpack.c.l.b16 %v448
    %v1496 = vunpack.c.h.b16 %v448
    %v1497 = vunpack.c.l.b16 %v449
    %v1498 = vunpack.c.h.b16 %v449
    %v1499 = vunpack.c.l.b16 %v450
    %v1500 = vunpack.c.l.b16 %v451
    %v1501 = vunpack.c.h.b16 %v451
    %v1502 = vunpack.c.l.b16 %v452
    %v1503 = vunpack.c.h.b16 %v452
    %v1504 = vunpack.c.l.b16 %v453
    %v1505 = vunpack.c.h.b16 %v453
    %v1506 = vunpack.c.l.b16 %v454
    %v1507 = vunpack.c.l.b16 %v455
    %v1508 = vunpack.c.h.b16 %v455
    %v1509 = vunpack.c.l.b16 %v456
    %v1510 = vunpack.c.h.b16 %v456
    %v1511 = vunpack.c.l.b16 %v457
    %v1512 = vunpack.c.h.b16 %v457
    %v1513 = vunpack.c.l.b16 %v458
    %v1514 = vunpack.c.l.b16 %v459
    %v1515 = vunpack.c.h.b16 %v459
    %v1516 = vunpack.c.l.b16 %v460
    %v1517 = vunpack.c.h.b16 %v460
    %v1518 = vunpack.c.l.b16 %v461
    %v1519 = vunpack.c.h.b16 %v461
    %v1520 = vunpack.c.l.b16 %v462
    %v1521 = vunpack.c.l.b16 %v463
    %v1522 = vunpack.c.h.b16 %v463
    %v1523 = vunpack.c.l.b16 %v464
    %v1524 = vunpack.c.h.b16 %v464
    %v1525 = vunpack.c.l.b16 %v465
    %v1526 = vunpack.c.h.b16 %v465
    %v1527 = vunpack.c.l.b16 %v466
    %v1528 = vunpack.c.l.b16 %v467
    %v1529 = vunpack.c.h.b16 %v467
    %v1530 = vunpack.c.l.b16 %v468
    %v1531 = vunpack.c.h.b16 %v468
    %v1532 = vunpack.c.l.b16 %v469
    %v1533 = vunpack.c.h.b16 %v469
    %v1534 = vunpack.c.l.b16 %v470
    %v1535 = vunpack.c.l.b16 %v471
    %v1536 = vunpack.c.h.b16 %v471
    %v1537 = vunpack.c.l.b16 %v472
    %v1538 = vunpack.c.h.b16 %v472
    %v1539 = vunpack.c.l.b16 %v473
    %v1540 = vunpack.c.h.b16 %v473
    %v1541 = vunpack.c.l.b16 %v474
    %v1542 = vunpack.c.l.b16 %v475
    %v1543 = vunpack.c.h.b16 %v475
    %v1544 = vunpack.c.l.b16 %v476
    %v1545 = vunpack.c.h.b16 %v476
    %v1546 = vunpack.c.l.b16 %v477
    %v1547 = vunpack.c.h.b16 %v477
    %v1548 = vunpack.c.l.b16 %v478
    %v1549 = vunpack.c.l.b16 %v479
    %v1550 = vunpack.c.h.b16 %v479
    %v1551 = vunpack.c.l.b16 %v480
    %v1552 = vunpack.c.h.b16 %v480
    %v1553 = vunpack.c.l.b16 %v481
    %v1554 = vunpack.c.h.b16 %v481
    %v1555 = vunpack.c.l.b16 %v482
    %v1556 = vpack.c.b16 %v891, %v884
    %v1557 = vpack.c.b16 %v892, %v885
    %v1558 = vpack.c.b16 %v893, %v886
    %v1559 = vpack.c.b16 %v894, %v887
    %v1560 = vpack.c.b16 %v895, %v888
    %v1561 = vpack.c.b16 %v896, %v889
    %v1562 = vpack.c.b16 %v897, %v890
    %v1563 = vpack.c.b16 %v905, %v898
    %v1564 = vpack.c.b16 %v906, %v899
    %v1565 = vpack.c.b16 %v907, %v900
    %v1566 = vpack.c.b16 %v908, %v901
    %v1567 = vpack.c.b16 %v909, %v902
    %v1568 = vpack.c.b16 %v910, %v903
    %v1569 = vpack.c.b16 %v911, %v904
    %v1570 = vpack.c.b16 %v919, %v912
    %v1571 = vpack.c.b16 %v920, %v913
    %v1572 = vpack.c.b16 %v921, %v914
    %v1573 = vpack.c.b16 %v922, %v915
    %v1574 = vpack.c.b16 %v923, %v916
    %v1575 = vpack.c.b16 %v924, %v917
    %v1576 = vpack.c.b16 %v925, %v918
    %v1577 = vpack.c.b16 %v933, %v926
    %v1578 = vpack.c.b16 %v934, %v927
    %v1579 = vpack.c.b16 %v935, %v928
    %v1580 = vpack.c.b16 %v936, %v929
    %v1581 = vpack.c.b16 %v937, %v930
    %v1582 = vpack.c.b16 %v938, %v931
    %v1583 = vpack.c.b16 %v939, %v932
    %v1584 = vpack.c.b16 %v947, %v940
    %v1585 = vpack.c.b16 %v948, %v941
    %v1586 = vpack.c.b16 %v949, %v942
    %v1587 = vpack.c.b16 %v950, %v943
    %v1588 = vpack.c.b16 %v951, %v944
    %v1589 = vpack.c.b16 %v952, %v945
    %v1590 = vpack.c.b16 %v953, %v946
    %v1591 = vpack.c.b16 %v961, %v954
    %v1592 = vpack.c.b16 %v962, %v955
    %v1593 = vpack.c.b16 %v963, %v956
    %v1594 = vpack.c.b16 %v964, %v957
    %v1595 = vpack.c.b16 %v965, %v958
    %v1596 = vpack.c.b16 %v966, %v959
    %v1597 = vpack.c.b16 %v967, %v960
    %v1598 = vpack.c.b16 %v975, %v968
    %v1599 = vpack.c.b16 %v976, %v969
    %v1600 = vpack.c.b16 %v977, %v970
    %v1601 = vpack.c.b16 %v978, %v971
    %v1602 = vpack.c.b16 %v979, %v972
    %v1603 = vpack.c.b16 %v980, %v973
    %v1604 = vpack.c.b16 %v981, %v974
    %v1605 = vpack.c.b16 %v989, %v982
    %v1606 = vpack.c.b16 %v990, %v983
    %v1607 = vpack.c.b16 %v991, %v984
    %v1608 = vpack.c.b16 %v992, %v985
    %v1609 = vpack.c.b16 %v993, %v986
    %v1610 = vpack.c.b16 %v994, %v987
    %v1611 = vpack.c.b16 %v995, %v988
    %v1612 = vpack.c.b16 %v1003, %v996
    %v1613 = vpack.c.b16 %v1004, %v997
    %v1614 = vpack.c.b16 %v1005, %v998
    %v1615 = vpack.c.b16 %v1006, %v999
    %v1616 = vpack.c.b16 %v1007, %v1000
    %v1617 = vpack.c.b16 %v1008, %v1001
    %v1618 = vpack.c.b16 %v1009, %v1002
    %v1619 = vpack.c.b16 %v1017, %v1010
    %v1620 = vpack.c.b16 %v1018, %v1011
    %v1621 = vpack.c.b16 %v1019, %v1012
    %v1622 = vpack.c.b16 %v1020, %v1013
    %v1623 = vpack.c.b16 %v1021, %v1014
    %v1624 = vpack.c.b16 %v1022, %v1015
    %v1625 = vpack.c.b16 %v1023, %v1016
    %v1626 = vpack.c.b16 %v1031, %v1024
    %v1627 = vpack.c.b16 %v1032, %v1025
    %v1628 = vpack.c.b16 %v1033, %v1026
    %v1629 = vpack.c.b16 %v1034, %v1027
    %v1630 = vpack.c.b16 %v1035, %v1028
    %v1631 = vpack.c.b16 %v1036, %v1029
    %v1632 = vpack.c.b16 %v1037, %v1030
    %v1633 = vpack.c.b16 %v1045, %v1038
    %v1634 = vpack.c.b16 %v1046, %v1039
    %v1635 = vpack.c.b16 %v1047, %v1040
    %v1636 = vpack.c.b16 %v1048, %v1041
    %v1637 = vpack.c.b16 %v1049, %v1042
    %v1638 = vpack.c.b16 %v1050, %v1043
    %v1639 = vpack.c.b16 %v1051, %v1044
    %v1640 = vpack.c.b16 %v1059, %v1052
    %v1641 = vpack.c.b16 %v1060, %v1053
    %v1642 = vpack.c.b16 %v1061, %v1054
    %v1643 = vpack.c.b16 %v1062, %v1055
    %v1644 = vpack.c.b16 %v1063, %v1056
    %v1645 = vpack.c.b16 %v1064, %v1057
    %v1646 = vpack.c.b16 %v1065, %v1058
    %v1647 = vpack.c.b16 %v1073, %v1066
    %v1648 = vpack.c.b16 %v1074, %v1067
    %v1649 = vpack.c.b16 %v1075, %v1068
    %v1650 = vpack.c.b16 %v1076, %v1069
    %v1651 = vpack.c.b16 %v1077, %v1070
    %v1652 = vpack.c.b16 %v1078, %v1071
    %v1653 = vpack.c.b16 %v1079, %v1072
    %v1654 = vpack.c.b16 %v1087, %v1080
    %v1655 = vpack.c.b16 %v1088, %v1081
    %v1656 = vpack.c.b16 %v1089, %v1082
    %v1657 = vpack.c.b16 %v1090, %v1083
    %v1658 = vpack.c.b16 %v1091, %v1084
    %v1659 = vpack.c.b16 %v1092, %v1085
    %v1660 = vpack.c.b16 %v1093, %v1086
    %v1661 = vpack.c.b16 %v1101, %v1094
    %v1662 = vpack.c.b16 %v1102, %v1095
    %v1663 = vpack.c.b16 %v1103, %v1096
    %v1664 = vpack.c.b16 %v1104, %v1097
    %v1665 = vpack.c.b16 %v1105, %v1098
    %v1666 = vpack.c.b16 %v1106, %v1099
    %v1667 = vpack.c.b16 %v1107, %v1100
    %v1668 = vpack.c.b16 %v1115, %v1108
    %v1669 = vpack.c.b16 %v1116, %v1109
    %v1670 = vpack.c.b16 %v1117, %v1110
    %v1671 = vpack.c.b16 %v1118, %v1111
    %v1672 = vpack.c.b16 %v1119, %v1112
    %v1673 = vpack.c.b16 %v1120, %v1113
    %v1674 = vpack.c.b16 %v1121, %v1114
    %v1675 = vpack.c.b16 %v1129, %v1122
    %v1676 = vpack.c.b16 %v1130, %v1123
    %v1677 = vpack.c.b16 %v1131, %v1124
    %v1678 = vpack.c.b16 %v1132, %v1125
    %v1679 = vpack.c.b16 %v1133, %v1126
    %v1680 = vpack.c.b16 %v1134, %v1127
    %v1681 = vpack.c.b16 %v1135, %v1128
    %v1682 = vpack.c.b16 %v1143, %v1136
    %v1683 = vpack.c.b16 %v1144, %v1137
    %v1684 = vpack.c.b16 %v1145, %v1138
    %v1685 = vpack.c.b16 %v1146, %v1139
    %v1686 = vpack.c.b16 %v1147, %v1140
    %v1687 = vpack.c.b16 %v1148, %v1141
    %v1688 = vpack.c.b16 %v1149, %v1142
    %v1689 = vpack.c.b16 %v1157, %v1150
    %v1690 = vpack.c.b16 %v1158, %v1151
    %v1691 = vpack.c.b16 %v1159, %v1152
    %v1692 = vpack.c.b16 %v1160, %v1153
    %v1693 = vpack.c.b16 %v1161, %v1154
    %v1694 = vpack.c.b16 %v1162, %v1155
    %v1695 = vpack.c.b16 %v1163, %v1156
    %v1696 = vpack.c.b16 %v1171, %v1164
    %v1697 = vpack.c.b16 %v1172, %v1165
    %v1698 = vpack.c.b16 %v1173, %v1166
    %v1699 = vpack.c.b16 %v1174, %v1167
    %v1700 = vpack.c.b16 %v1175, %v1168
    %v1701 = vpack.c.b16 %v1176, %v1169
    %v1702 = vpack.c.b16 %v1177, %v1170
    %v1703 = vpack.c.b16 %v1185, %v1178
    %v1704 = vpack.c.b16 %v1186, %v1179
    %v1705 = vpack.c.b16 %v1187, %v1180
    %v1706 = vpack.c.b16 %v1188, %v1181
    %v1707 = vpack.c.b16 %v1189, %v1182
    %v1708 = vpack.c.b16 %v1190, %v1183
    %v1709 = vpack.c.b16 %v1191, %v1184
    %v1710 = vpack.c.b16 %v1199, %v1192
    %v1711 = vpack.c.b16 %v1200, %v1193
    %v1712 = vpack.c.b16 %v1201, %v1194
    %v1713 = vpack.c.b16 %v1202, %v1195
    %v1714 = vpack.c.b16 %v1203, %v1196
    %v1715 = vpack.c.b16 %v1204, %v1197
    %v1716 = vpack.c.b16 %v1205, %v1198
    %v1717 = vpack.c.b16 %v1213, %v1206
    %v1718 = vpack.c.b16 %v1214, %v1207
    %v1719 = vpack.c.b16 %v1215, %v1208
    %v1720 = vpack.c.b16 %v1216, %v1209
    %v1721 = vpack.c.b16 %v1217, %v1210
    %v1722 = vpack.c.b16 %v1218, %v1211
    %v1723 = vpack.c.b16 %v1219, %v1212
    %v1724 = vpack.c.b16 %v1227, %v1220
    %v1725 = vpack.c.b16 %v1228, %v1221
    %v1726 = vpack.c.b16 %v1229, %v1222
    %v1727 = vpack.c.b16 %v1230, %v1223
    %v1728 = vpack.c.b16 %v1231, %v1224
    %v1729 = vpack.c.b16 %v1232, %v1225
    %v1730 = vpack.c.b16 %v1233, %v1226
    %v1731 = vpack.c.b16 %v1241, %v1234
    %v1732 = vpack.c.b16 %v1242, %v1235
    %v1733 = vpack.c.b16 %v1243, %v1236
    %v1734 = vpack.c.b16 %v1244, %v1237
    %v1735 = vpack.c.b16 %v1245, %v1238
    %v1736 = vpack.c.b16 %v1246, %v1239
    %v1737 = vpack.c.b16 %v1247, %v1240
    %v1738 = vpack.c.b16 %v1255, %v1248
    %v1739 = vpack.c.b16 %v1256, %v1249
    %v1740 = vpack.c.b16 %v1257, %v1250
    %v1741 = vpack.c.b16 %v1258, %v1251
    %v1742 = vpack.c.b16 %v1259, %v1252
    %v1743 = vpack.c.b16 %v1260, %v1253
    %v1744 = vpack.c.b16 %v1261, %v1254
    %v1745 = vpack.c.b16 %v1269, %v1262
    %v1746 = vpack.c.b16 %v1270, %v1263
    %v1747 = vpack.c.b16 %v1271, %v1264
    %v1748 = vpack.c.b16 %v1272, %v1265
    %v1749 = vpack.c.b16 %v1273, %v1266
    %v1750 = vpack.c.b16 %v1274, %v1267
    %v1751 = vpack.c.b16 %v1275, %v1268
    %v1752 = vpack.c.b16 %v1283, %v1276
    %v1753 = vpack.c.b16 %v1284, %v1277
    %v1754 = vpack.c.b16 %v1285, %v1278
    %v1755 = vpack.c.b16 %v1286, %v1279
    %v1756 = vpack.c.b16 %v1287, %v1280
    %v1757 = vpack.c.b16 %v1288, %v1281
    %v1758 = vpack.c.b16 %v1289, %v1282
    %v1759 = vpack.c.b16 %v1297, %v1290
    %v1760 = vpack.c.b16 %v1298, %v1291
    %v1761 = vpack.c.b16 %v1299, %v1292
    %v1762 = vpack.c.b16 %v1300, %v1293
    %v1763 = vpack.c.b16 %v1301, %v1294
    %v1764 = vpack.c.b16 %v1302, %v1295
    %v1765 = vpack.c.b16 %v1303, %v1296
    %v1766 = vpack.c.b16 %v1311, %v1304
    %v1767 = vpack.c.b16 %v1312, %v1305
    %v1768 = vpack.c.b16 %v1313, %v1306
    %v1769 = vpack.c.b16 %v1314, %v1307
    %v1770 = vpack.c.b16 %v1315, %v1308
    %v1771 = vpack.c.b16 %v1316, %v1309
    %v1772 = vpack.c.b16 %v1317, %v1310
    %v1773 = vpack.c.b16 %v1325, %v1318
    %v1774 = vpack.c.b16 %v1326, %v1319
    %v1775 = vpack.c.b16 %v1327, %v1320
    %v1776 = vpack.c.b16 %v1328, %v1321
    %v1777 = vpack.c.b16 %v1329, %v1322
    %v1778 = vpack.c.b16 %v1330, %v1323
    %v1779 = vpack.c.b16 %v1331, %v1324
    %v1780 = vpack.c.b16 %v1339, %v1332
    %v1781 = vpack.c.b16 %v1340, %v1333
    %v1782 = vpack.c.b16 %v1341, %v1334
    %v1783 = vpack.c.b16 %v1342, %v1335
    %v1784 = vpack.c.b16 %v1343, %v1336
    %v1785 = vpack.c.b16 %v1344, %v1337
    %v1786 = vpack.c.b16 %v1345, %v1338
    %v1787 = vpack.c.b16 %v1353, %v1346
    %v1788 = vpack.c.b16 %v1354, %v1347
    %v1789 = vpack.c.b16 %v1355, %v1348
    %v1790 = vpack.c.b16 %v1356, %v1349
    %v1791 = vpack.c.b16 %v1357, %v1350
    %v1792 = vpack.c.b16 %v1358, %v1351
    %v1793 = vpack.c.b16 %v1359, %v1352
    %v1794 = vpack.c.b16 %v1367, %v1360
    %v1795 = vpack.c.b16 %v1368, %v1361
    %v1796 = vpack.c.b16 %v1369, %v1362
    %v1797 = vpack.c.b16 %v1370, %v1363
    %v1798 = vpack.c.b16 %v1371, %v1364
    %v1799 = vpack.c.b16 %v1372, %v1365
    %v1800 = vpack.c.b16 %v1373, %v1366
    %v1801 = vpack.c.b16 %v1381, %v1374
    %v1802 = vpack.c.b16 %v1382, %v1375
    %v1803 = vpack.c.b16 %v1383, %v1376
    %v1804 = vpack.c.b16 %v1384, %v1377
    %v1805 = vpack.c.b16 %v1385, %v1378
    %v1806 = vpack.c.b16 %v1386, %v1379
    %v1807 = vpack.c.b16 %v1387, %v1380
    %v1808 = vpack.c.b16 %v1395, %v1388
    %v1809 = vpack.c.b16 %v1396, %v1389
    %v1810 = vpack.c.b16 %v1397, %v1390
    %v1811 = vpack.c.b16 %v1398, %v1391
    %v1812 = vpack.c.b16 %v1399, %v1392
    %v1813 = vpack.c.b16 %v1400, %v1393
    %v1814 = vpack.c.b16 %v1401, %v1394
    %v1815 = vpack.c.b16 %v1409, %v1402
    %v1816 = vpack.c.b16 %v1410, %v1403
    %v1817 = vpack.c.b16 %v1411, %v1404
    %v1818 = vpack.c.b16 %v1412, %v1405
    %v1819 = vpack.c.b16 %v1413, %v1406
    %v1820 = vpack.c.b16 %v1414, %v1407
    %v1821 = vpack.c.b16 %v1415, %v1408
    %v1822 = vpack.c.b16 %v1423, %v1416
    %v1823 = vpack.c.b16 %v1424, %v1417
    %v1824 = vpack.c.b16 %v1425, %v1418
    %v1825 = vpack.c.b16 %v1426, %v1419
    %v1826 = vpack.c.b16 %v1427, %v1420
    %v1827 = vpack.c.b16 %v1428, %v1421
    %v1828 = vpack.c.b16 %v1429, %v1422
    %v1829 = vpack.c.b16 %v1437, %v1430
    %v1830 = vpack.c.b16 %v1438, %v1431
    %v1831 = vpack.c.b16 %v1439, %v1432
    %v1832 = vpack.c.b16 %v1440, %v1433
    %v1833 = vpack.c.b16 %v1441, %v1434
    %v1834 = vpack.c.b16 %v1442, %v1435
    %v1835 = vpack.c.b16 %v1443, %v1436
    %v1836 = vpack.c.b16 %v1451, %v1444
    %v1837 = vpack.c.b16 %v1452, %v1445
    %v1838 = vpack.c.b16 %v1453, %v1446
    %v1839 = vpack.c.b16 %v1454, %v1447
    %v1840 = vpack.c.b16 %v1455, %v1448
    %v1841 = vpack.c.b16 %v1456, %v1449
    %v1842 = vpack.c.b16 %v1457, %v1450
    %v1843 = vpack.c.b16 %v1465, %v1458
    %v1844 = vpack.c.b16 %v1466, %v1459
    %v1845 = vpack.c.b16 %v1467, %v1460
    %v1846 = vpack.c.b16 %v1468, %v1461
    %v1847 = vpack.c.b16 %v1469, %v1462
    %v1848 = vpack.c.b16 %v1470, %v1463
    %v1849 = vpack.c.b16 %v1471, %v1464
    %v1850 = vpack.c.b16 %v1479, %v1472
    %v1851 = vpack.c.b16 %v1480, %v1473
    %v1852 = vpack.c.b16 %v1481, %v1474
    %v1853 = vpack.c.b16 %v1482, %v1475
    %v1854 = vpack.c.b16 %v1483, %v1476
    %v1855 = vpack.c.b16 %v1484, %v1477
    %v1856 = vpack.c.b16 %v1485, %v1478
    %v1857 = vpack.c.b16 %v1493, %v1486
    %v1858 = vpack.c.b16 %v1494, %v1487
    %v1859 = vpack.c.b16 %v1495, %v1488
    %v1860 = vpack.c.b16 %v1496, %v1489
    %v1861 = vpack.c.b16 %v1497, %v1490
    %v1862 = vpack.c.b16 %v1498, %v1491
    %v1863 = vpack.c.b16 %v1499, %v1492
    %v1864 = vpack.c.b16 %v1507, %v1500
    %v1865 = vpack.c.b16 %v1508, %v1501
    %v1866 = vpack.c.b16 %v1509, %v1502
    %v1867 = vpack.c.b16 %v1510, %v1503
    %v1868 = vpack.c.b16 %v1511, %v1504
    %v1869 = vpack.c.b16 %v1512, %v1505
    %v1870 = vpack.c.b16 %v1513, %v1506
    %v1871 = vpack.c.b16 %v1521, %v1514
    %v1872 = vpack.c.b16 %v1522, %v1515
    %v1873 = vpack.c.b16 %v1523, %v1516
    %v1874 = vpack.c.b16 %v1524, %v1517
    %v1875 = vpack.c.b16 %v1525, %v1518
    %v1876 = vpack.c.b16 %v1526, %v1519
    %v1877 = vpack.c.b16 %v1527, %v1520
    %v1878 = vpack.c.b16 %v1535, %v1528
    %v1879 = vpack.c.b16 %v1536, %v1529
    %v1880 = vpack.c.b16 %v1537, %v1530
    %v1881 = vpack.c.b16 %v1538, %v1531
    %v1882 = vpack.c.b16 %v1539, %v1532
    %v1883 = vpack.c.b16 %v1540, %v1533
    %v1884 = vpack.c.b16 %v1541, %v1534
    %v1885 = vpack.c.b16 %v1549, %v1542
    %v1886 = vpack.c.b16 %v1550, %v1543
    %v1887 = vpack.c.b16 %v1551, %v1544
    %v1888 = vpack.c.b16 %v1552, %v1545
    %v1889 = vpack.c.b16 %v1553, %v1546
    %v1890 = vpack.c.b16 %v1554, %v1547
    %v1891 = vpack.c.b16 %v1555, %v1548
    %2228 = vmatpush.bf16.msra.mxu0 %v1605
    %2229 = vmatpush.bf16.msra.mxu0 %v1598
    %2230 = vmatpush.bf16.msra.mxu0 %v1591
    %2231 = vmatpush.bf16.msra.mxu0 %v1584
    %2232 = vmatpush.bf16.msra.mxu0 %v1577
    %2233 = vmatpush.bf16.msra.mxu0 %v1570
    %2234 = vmatpush.bf16.msra.mxu0 %v1563
    %2235 = vmatpush.bf16.msra.mxu0 %v1556
    %2236 = vmatmul.bf16.gmra.mxu0 %v488
    %v2237 = vpop.f32.mrf.mxu0
    %v2238 = vadd.f32 0.0, %v2237
    %v2239 = vpop.f32.mrf.mxu0
    %2240 = vdwg.mxu0
    %2241 = vmatpush.bf16.msra.mxu0 %v1661
    %2242 = vmatpush.bf16.msra.mxu0 %v1654
    %2243 = vmatpush.bf16.msra.mxu0 %v1647
    %2244 = vmatpush.bf16.msra.mxu0 %v1640
    %2245 = vmatpush.bf16.msra.mxu0 %v1633
    %2246 = vmatpush.bf16.msra.mxu0 %v1626
    %2247 = vmatpush.bf16.msra.mxu0 %v1619
    %2248 = vmatpush.bf16.msra.mxu0 %v1612
    %2249 = vmatmul.bf16.gmra.mxu0 %v489
    %v2250 = vpop.f32.mrf.mxu0
    %v2251 = vadd.f32 %v2238, %v2250
    %v2252 = vpop.f32.mrf.mxu0
    %2253 = vdwg.mxu0
    %2254 = vmatpush.bf16.msra.mxu0 %v1717
    %2255 = vmatpush.bf16.msra.mxu0 %v1710
    %2256 = vmatpush.bf16.msra.mxu0 %v1703
    %2257 = vmatpush.bf16.msra.mxu0 %v1696
    %2258 = vmatpush.bf16.msra.mxu0 %v1689
    %2259 = vmatpush.bf16.msra.mxu0 %v1682
    %2260 = vmatpush.bf16.msra.mxu0 %v1675
    %2261 = vmatpush.bf16.msra.mxu0 %v1668
    %2262 = vmatmul.bf16.gmra.mxu0 %v490
    %v2263 = vpop.f32.mrf.mxu0
    %v2264 = vadd.f32 %v2251, %v2263
    %v2265 = vpop.f32.mrf.mxu0
    %2266 = vdwg.mxu0
    %2267 = vmatpush.bf16.msra.mxu0 %v1773
    %2268 = vmatpush.bf16.msra.mxu0 %v1766
    %2269 = vmatpush.bf16.msra.mxu0 %v1759
    %2270 = vmatpush.bf16.msra.mxu0 %v1752
    %2271 = vmatpush.bf16.msra.mxu0 %v1745
    %2272 = vmatpush.bf16.msra.mxu0 %v1738
    %2273 = vmatpush.bf16.msra.mxu0 %v1731
    %2274 = vmatpush.bf16.msra.mxu0 %v1724
    %2275 = vmatmul.bf16.gmra.mxu0 %v491
    %v2276 = vpop.f32.mrf.mxu0
    %v2277 = vadd.f32 %v2264, %v2276
    %v2278 = vpop.f32.mrf.mxu0
    %2279 = vdwg.mxu0
    %2280 = vmatpush.bf16.msra.mxu0 %v1829
    %2281 = vmatpush.bf16.msra.mxu0 %v1822
    %2282 = vmatpush.bf16.msra.mxu0 %v1815
    %2283 = vmatpush.bf16.msra.mxu0 %v1808
    %2284 = vmatpush.bf16.msra.mxu0 %v1801
    %2285 = vmatpush.bf16.msra.mxu0 %v1794
    %2286 = vmatpush.bf16.msra.mxu0 %v1787
    %2287 = vmatpush.bf16.msra.mxu0 %v1780
    %2288 = vmatmul.bf16.gmra.mxu0 %v492
    %v2289 = vpop.f32.mrf.mxu0
    %v2290 = vadd.f32 %v2277, %v2289
    %v2291 = vpop.f32.mrf.mxu0
    %2292 = vdwg.mxu0
    %2293 = vmatpush.bf16.msra.mxu0 %v1885
    %2294 = vmatpush.bf16.msra.mxu0 %v1878
    %2295 = vmatpush.bf16.msra.mxu0 %v1871
    %2296 = vmatpush.bf16.msra.mxu0 %v1864
    %2297 = vmatpush.bf16.msra.mxu0 %v1857
    %2298 = vmatpush.bf16.msra.mxu0 %v1850
    %2299 = vmatpush.bf16.msra.mxu0 %v1843
    %2300 = vmatpush.bf16.msra.mxu0 %v1836
    %2301 = vmatmul.bf16.gmra.mxu0 %v493
    %v2302 = vpop.f32.mrf.mxu0
    %v2303 = vadd.f32 %v2290, %v2302
    %v2304 = vpop.f32.mrf.mxu0
    %2305 = vdwg.mxu0
    %2306 = vmatpush.bf16.msra.mxu0 %v1606
    %2307 = vmatpush.bf16.msra.mxu0 %v1599
    %2308 = vmatpush.bf16.msra.mxu0 %v1592
    %2309 = vmatpush.bf16.msra.mxu0 %v1585
    %2310 = vmatpush.bf16.msra.mxu0 %v1578
    %2311 = vmatpush.bf16.msra.mxu0 %v1571
    %2312 = vmatpush.bf16.msra.mxu0 %v1564
    %2313 = vmatpush.bf16.msra.mxu0 %v1557
    %2314 = vmatmul.bf16.gmra.mxu0 %v488
    %v2315 = vpop.f32.mrf.mxu0
    %v2316 = vadd.f32 0.0, %v2315
    %v2317 = vpop.f32.mrf.mxu0
    %2318 = vdwg.mxu0
    %2319 = vmatpush.bf16.msra.mxu0 %v1662
    %2320 = vmatpush.bf16.msra.mxu0 %v1655
    %2321 = vmatpush.bf16.msra.mxu0 %v1648
    %2322 = vmatpush.bf16.msra.mxu0 %v1641
    %2323 = vmatpush.bf16.msra.mxu0 %v1634
    %2324 = vmatpush.bf16.msra.mxu0 %v1627
    %2325 = vmatpush.bf16.msra.mxu0 %v1620
    %2326 = vmatpush.bf16.msra.mxu0 %v1613
    %2327 = vmatmul.bf16.gmra.mxu0 %v489
    %v2328 = vpop.f32.mrf.mxu0
    %v2329 = vadd.f32 %v2316, %v2328
    %v2330 = vpop.f32.mrf.mxu0
    %2331 = vdwg.mxu0
    %2332 = vmatpush.bf16.msra.mxu0 %v1718
    %2333 = vmatpush.bf16.msra.mxu0 %v1711
    %2334 = vmatpush.bf16.msra.mxu0 %v1704
    %2335 = vmatpush.bf16.msra.mxu0 %v1697
    %2336 = vmatpush.bf16.msra.mxu0 %v1690
    %2337 = vmatpush.bf16.msra.mxu0 %v1683
    %2338 = vmatpush.bf16.msra.mxu0 %v1676
    %2339 = vmatpush.bf16.msra.mxu0 %v1669
    %2340 = vmatmul.bf16.gmra.mxu0 %v490
    %v2341 = vpop.f32.mrf.mxu0
    %v2342 = vadd.f32 %v2329, %v2341
    %v2343 = vpop.f32.mrf.mxu0
    %2344 = vdwg.mxu0
    %2345 = vmatpush.bf16.msra.mxu0 %v1774
    %2346 = vmatpush.bf16.msra.mxu0 %v1767
    %2347 = vmatpush.bf16.msra.mxu0 %v1760
    %2348 = vmatpush.bf16.msra.mxu0 %v1753
    %2349 = vmatpush.bf16.msra.mxu0 %v1746
    %2350 = vmatpush.bf16.msra.mxu0 %v1739
    %2351 = vmatpush.bf16.msra.mxu0 %v1732
    %2352 = vmatpush.bf16.msra.mxu0 %v1725
    %2353 = vmatmul.bf16.gmra.mxu0 %v491
    %v2354 = vpop.f32.mrf.mxu0
    %v2355 = vadd.f32 %v2342, %v2354
    %v2356 = vpop.f32.mrf.mxu0
    %2357 = vdwg.mxu0
    %2358 = vmatpush.bf16.msra.mxu0 %v1830
    %2359 = vmatpush.bf16.msra.mxu0 %v1823
    %2360 = vmatpush.bf16.msra.mxu0 %v1816
    %2361 = vmatpush.bf16.msra.mxu0 %v1809
    %2362 = vmatpush.bf16.msra.mxu0 %v1802
    %2363 = vmatpush.bf16.msra.mxu0 %v1795
    %2364 = vmatpush.bf16.msra.mxu0 %v1788
    %2365 = vmatpush.bf16.msra.mxu0 %v1781
    %2366 = vmatmul.bf16.gmra.mxu0 %v492
    %v2367 = vpop.f32.mrf.mxu0
    %v2368 = vadd.f32 %v2355, %v2367
    %v2369 = vpop.f32.mrf.mxu0
    %2370 = vdwg.mxu0
    %2371 = vmatpush.bf16.msra.mxu0 %v1886
    %2372 = vmatpush.bf16.msra.mxu0 %v1879
    %2373 = vmatpush.bf16.msra.mxu0 %v1872
    %2374 = vmatpush.bf16.msra.mxu0 %v1865
    %2375 = vmatpush.bf16.msra.mxu0 %v1858
    %2376 = vmatpush.bf16.msra.mxu0 %v1851
    %2377 = vmatpush.bf16.msra.mxu0 %v1844
    %2378 = vmatpush.bf16.msra.mxu0 %v1837
    %2379 = vmatmul.bf16.gmra.mxu0 %v493
    %v2380 = vpop.f32.mrf.mxu0
    %v2381 = vadd.f32 %v2368, %v2380
    %v2382 = vpop.f32.mrf.mxu0
    %2383 = vdwg.mxu0
    %2384 = vmatpush.bf16.msra.mxu0 %v1607
    %2385 = vmatpush.bf16.msra.mxu0 %v1600
    %2386 = vmatpush.bf16.msra.mxu0 %v1593
    %2387 = vmatpush.bf16.msra.mxu0 %v1586
    %2388 = vmatpush.bf16.msra.mxu0 %v1579
    %2389 = vmatpush.bf16.msra.mxu0 %v1572
    %2390 = vmatpush.bf16.msra.mxu0 %v1565
    %2391 = vmatpush.bf16.msra.mxu0 %v1558
    %2392 = vmatmul.bf16.gmra.mxu0 %v488
    %v2393 = vpop.f32.mrf.mxu0
    %v2394 = vadd.f32 0.0, %v2393
    %v2395 = vpop.f32.mrf.mxu0
    %2396 = vdwg.mxu0
    %2397 = vmatpush.bf16.msra.mxu0 %v1663
    %2398 = vmatpush.bf16.msra.mxu0 %v1656
    %2399 = vmatpush.bf16.msra.mxu0 %v1649
    %2400 = vmatpush.bf16.msra.mxu0 %v1642
    %2401 = vmatpush.bf16.msra.mxu0 %v1635
    %2402 = vmatpush.bf16.msra.mxu0 %v1628
    %2403 = vmatpush.bf16.msra.mxu0 %v1621
    %2404 = vmatpush.bf16.msra.mxu0 %v1614
    %2405 = vmatmul.bf16.gmra.mxu0 %v489
    %v2406 = vpop.f32.mrf.mxu0
    %v2407 = vadd.f32 %v2394, %v2406
    %v2408 = vpop.f32.mrf.mxu0
    %2409 = vdwg.mxu0
    %2410 = vmatpush.bf16.msra.mxu0 %v1719
    %2411 = vmatpush.bf16.msra.mxu0 %v1712
    %2412 = vmatpush.bf16.msra.mxu0 %v1705
    %2413 = vmatpush.bf16.msra.mxu0 %v1698
    %2414 = vmatpush.bf16.msra.mxu0 %v1691
    %2415 = vmatpush.bf16.msra.mxu0 %v1684
    %2416 = vmatpush.bf16.msra.mxu0 %v1677
    %2417 = vmatpush.bf16.msra.mxu0 %v1670
    %2418 = vmatmul.bf16.gmra.mxu0 %v490
    %v2419 = vpop.f32.mrf.mxu0
    %v2420 = vadd.f32 %v2407, %v2419
    %v2421 = vpop.f32.mrf.mxu0
    %2422 = vdwg.mxu0
    %2423 = vmatpush.bf16.msra.mxu0 %v1775
    %2424 = vmatpush.bf16.msra.mxu0 %v1768
    %2425 = vmatpush.bf16.msra.mxu0 %v1761
    %2426 = vmatpush.bf16.msra.mxu0 %v1754
    %2427 = vmatpush.bf16.msra.mxu0 %v1747
    %2428 = vmatpush.bf16.msra.mxu0 %v1740
    %2429 = vmatpush.bf16.msra.mxu0 %v1733
    %2430 = vmatpush.bf16.msra.mxu0 %v1726
    %2431 = vmatmul.bf16.gmra.mxu0 %v491
    %v2432 = vpop.f32.mrf.mxu0
    %v2433 = vadd.f32 %v2420, %v2432
    %v2434 = vpop.f32.mrf.mxu0
    %2435 = vdwg.mxu0
    %2436 = vmatpush.bf16.msra.mxu0 %v1831
    %2437 = vmatpush.bf16.msra.mxu0 %v1824
    %2438 = vmatpush.bf16.msra.mxu0 %v1817
    %2439 = vmatpush.bf16.msra.mxu0 %v1810
    %2440 = vmatpush.bf16.msra.mxu0 %v1803
    %2441 = vmatpush.bf16.msra.mxu0 %v1796
    %2442 = vmatpush.bf16.msra.mxu0 %v1789
    %2443 = vmatpush.bf16.msra.mxu0 %v1782
    %2444 = vmatmul.bf16.gmra.mxu0 %v492
    %v2445 = vpop.f32.mrf.mxu0
    %v2446 = vadd.f32 %v2433, %v2445
    %v2447 = vpop.f32.mrf.mxu0
    %2448 = vdwg.mxu0
    %2449 = vmatpush.bf16.msra.mxu0 %v1887
    %2450 = vmatpush.bf16.msra.mxu0 %v1880
    %2451 = vmatpush.bf16.msra.mxu0 %v1873
    %2452 = vmatpush.bf16.msra.mxu0 %v1866
    %2453 = vmatpush.bf16.msra.mxu0 %v1859
    %2454 = vmatpush.bf16.msra.mxu0 %v1852
    %2455 = vmatpush.bf16.msra.mxu0 %v1845
    %2456 = vmatpush.bf16.msra.mxu0 %v1838
    %2457 = vmatmul.bf16.gmra.mxu0 %v493
    %v2458 = vpop.f32.mrf.mxu0
    %v2459 = vadd.f32 %v2446, %v2458
    %v2460 = vpop.f32.mrf.mxu0
    %2461 = vdwg.mxu0
    %2462 = vmatpush.bf16.msra.mxu0 %v1608
    %2463 = vmatpush.bf16.msra.mxu0 %v1601
    %2464 = vmatpush.bf16.msra.mxu0 %v1594
    %2465 = vmatpush.bf16.msra.mxu0 %v1587
    %2466 = vmatpush.bf16.msra.mxu0 %v1580
    %2467 = vmatpush.bf16.msra.mxu0 %v1573
    %2468 = vmatpush.bf16.msra.mxu0 %v1566
    %2469 = vmatpush.bf16.msra.mxu0 %v1559
    %2470 = vmatmul.bf16.gmra.mxu0 %v488
    %v2471 = vpop.f32.mrf.mxu0
    %v2472 = vadd.f32 0.0, %v2471
    %v2473 = vpop.f32.mrf.mxu0
    %2474 = vdwg.mxu0
    %2475 = vmatpush.bf16.msra.mxu0 %v1664
    %2476 = vmatpush.bf16.msra.mxu0 %v1657
    %2477 = vmatpush.bf16.msra.mxu0 %v1650
    %2478 = vmatpush.bf16.msra.mxu0 %v1643
    %2479 = vmatpush.bf16.msra.mxu0 %v1636
    %2480 = vmatpush.bf16.msra.mxu0 %v1629
    %2481 = vmatpush.bf16.msra.mxu0 %v1622
    %2482 = vmatpush.bf16.msra.mxu0 %v1615
    %2483 = vmatmul.bf16.gmra.mxu0 %v489
    %v2484 = vpop.f32.mrf.mxu0
    %v2485 = vadd.f32 %v2472, %v2484
    %v2486 = vpop.f32.mrf.mxu0
    %2487 = vdwg.mxu0
    %2488 = vmatpush.bf16.msra.mxu0 %v1720
    %2489 = vmatpush.bf16.msra.mxu0 %v1713
    %2490 = vmatpush.bf16.msra.mxu0 %v1706
    %2491 = vmatpush.bf16.msra.mxu0 %v1699
    %2492 = vmatpush.bf16.msra.mxu0 %v1692
    %2493 = vmatpush.bf16.msra.mxu0 %v1685
    %2494 = vmatpush.bf16.msra.mxu0 %v1678
    %2495 = vmatpush.bf16.msra.mxu0 %v1671
    %2496 = vmatmul.bf16.gmra.mxu0 %v490
    %v2497 = vpop.f32.mrf.mxu0
    %v2498 = vadd.f32 %v2485, %v2497
    %v2499 = vpop.f32.mrf.mxu0
    %2500 = vdwg.mxu0
    %2501 = vmatpush.bf16.msra.mxu0 %v1776
    %2502 = vmatpush.bf16.msra.mxu0 %v1769
    %2503 = vmatpush.bf16.msra.mxu0 %v1762
    %2504 = vmatpush.bf16.msra.mxu0 %v1755
    %2505 = vmatpush.bf16.msra.mxu0 %v1748
    %2506 = vmatpush.bf16.msra.mxu0 %v1741
    %2507 = vmatpush.bf16.msra.mxu0 %v1734
    %2508 = vmatpush.bf16.msra.mxu0 %v1727
    %2509 = vmatmul.bf16.gmra.mxu0 %v491
    %v2510 = vpop.f32.mrf.mxu0
    %v2511 = vadd.f32 %v2498, %v2510
    %v2512 = vpop.f32.mrf.mxu0
    %2513 = vdwg.mxu0
    %2514 = vmatpush.bf16.msra.mxu0 %v1832
    %2515 = vmatpush.bf16.msra.mxu0 %v1825
    %2516 = vmatpush.bf16.msra.mxu0 %v1818
    %2517 = vmatpush.bf16.msra.mxu0 %v1811
    %2518 = vmatpush.bf16.msra.mxu0 %v1804
    %2519 = vmatpush.bf16.msra.mxu0 %v1797
    %2520 = vmatpush.bf16.msra.mxu0 %v1790
    %2521 = vmatpush.bf16.msra.mxu0 %v1783
    %2522 = vmatmul.bf16.gmra.mxu0 %v492
    %v2523 = vpop.f32.mrf.mxu0
    %v2524 = vadd.f32 %v2511, %v2523
    %v2525 = vpop.f32.mrf.mxu0
    %2526 = vdwg.mxu0
    %2527 = vmatpush.bf16.msra.mxu0 %v1888
    %2528 = vmatpush.bf16.msra.mxu0 %v1881
    %2529 = vmatpush.bf16.msra.mxu0 %v1874
    %2530 = vmatpush.bf16.msra.mxu0 %v1867
    %2531 = vmatpush.bf16.msra.mxu0 %v1860
    %2532 = vmatpush.bf16.msra.mxu0 %v1853
    %2533 = vmatpush.bf16.msra.mxu0 %v1846
    %2534 = vmatpush.bf16.msra.mxu0 %v1839
    %2535 = vmatmul.bf16.gmra.mxu0 %v493
    %v2536 = vpop.f32.mrf.mxu0
    %v2537 = vadd.f32 %v2524, %v2536
    %v2538 = vpop.f32.mrf.mxu0
    %2539 = vdwg.mxu0
    %2540 = vmatpush.bf16.msra.mxu0 %v1609
    %2541 = vmatpush.bf16.msra.mxu0 %v1602
    %2542 = vmatpush.bf16.msra.mxu0 %v1595
    %2543 = vmatpush.bf16.msra.mxu0 %v1588
    %2544 = vmatpush.bf16.msra.mxu0 %v1581
    %2545 = vmatpush.bf16.msra.mxu0 %v1574
    %2546 = vmatpush.bf16.msra.mxu0 %v1567
    %2547 = vmatpush.bf16.msra.mxu0 %v1560
    %2548 = vmatmul.bf16.gmra.mxu0 %v488
    %v2549 = vpop.f32.mrf.mxu0
    %v2550 = vadd.f32 0.0, %v2549
    %v2551 = vpop.f32.mrf.mxu0
    %2552 = vdwg.mxu0
    %2553 = vmatpush.bf16.msra.mxu0 %v1665
    %2554 = vmatpush.bf16.msra.mxu0 %v1658
    %2555 = vmatpush.bf16.msra.mxu0 %v1651
    %2556 = vmatpush.bf16.msra.mxu0 %v1644
    %2557 = vmatpush.bf16.msra.mxu0 %v1637
    %2558 = vmatpush.bf16.msra.mxu0 %v1630
    %2559 = vmatpush.bf16.msra.mxu0 %v1623
    %2560 = vmatpush.bf16.msra.mxu0 %v1616
    %2561 = vmatmul.bf16.gmra.mxu0 %v489
    %v2562 = vpop.f32.mrf.mxu0
    %v2563 = vadd.f32 %v2550, %v2562
    %v2564 = vpop.f32.mrf.mxu0
    %2565 = vdwg.mxu0
    %2566 = vmatpush.bf16.msra.mxu0 %v1721
    %2567 = vmatpush.bf16.msra.mxu0 %v1714
    %2568 = vmatpush.bf16.msra.mxu0 %v1707
    %2569 = vmatpush.bf16.msra.mxu0 %v1700
    %2570 = vmatpush.bf16.msra.mxu0 %v1693
    %2571 = vmatpush.bf16.msra.mxu0 %v1686
    %2572 = vmatpush.bf16.msra.mxu0 %v1679
    %2573 = vmatpush.bf16.msra.mxu0 %v1672
    %2574 = vmatmul.bf16.gmra.mxu0 %v490
    %v2575 = vpop.f32.mrf.mxu0
    %v2576 = vadd.f32 %v2563, %v2575
    %v2577 = vpop.f32.mrf.mxu0
    %2578 = vdwg.mxu0
    %2579 = vmatpush.bf16.msra.mxu0 %v1777
    %2580 = vmatpush.bf16.msra.mxu0 %v1770
    %2581 = vmatpush.bf16.msra.mxu0 %v1763
    %2582 = vmatpush.bf16.msra.mxu0 %v1756
    %2583 = vmatpush.bf16.msra.mxu0 %v1749
    %2584 = vmatpush.bf16.msra.mxu0 %v1742
    %2585 = vmatpush.bf16.msra.mxu0 %v1735
    %2586 = vmatpush.bf16.msra.mxu0 %v1728
    %2587 = vmatmul.bf16.gmra.mxu0 %v491
    %v2588 = vpop.f32.mrf.mxu0
    %v2589 = vadd.f32 %v2576, %v2588
    %v2590 = vpop.f32.mrf.mxu0
    %2591 = vdwg.mxu0
    %2592 = vmatpush.bf16.msra.mxu0 %v1833
    %2593 = vmatpush.bf16.msra.mxu0 %v1826
    %2594 = vmatpush.bf16.msra.mxu0 %v1819
    %2595 = vmatpush.bf16.msra.mxu0 %v1812
    %2596 = vmatpush.bf16.msra.mxu0 %v1805
    %2597 = vmatpush.bf16.msra.mxu0 %v1798
    %2598 = vmatpush.bf16.msra.mxu0 %v1791
    %2599 = vmatpush.bf16.msra.mxu0 %v1784
    %2600 = vmatmul.bf16.gmra.mxu0 %v492
    %v2601 = vpop.f32.mrf.mxu0
    %v2602 = vadd.f32 %v2589, %v2601
    %v2603 = vpop.f32.mrf.mxu0
    %2604 = vdwg.mxu0
    %2605 = vmatpush.bf16.msra.mxu0 %v1889
    %2606 = vmatpush.bf16.msra.mxu0 %v1882
    %2607 = vmatpush.bf16.msra.mxu0 %v1875
    %2608 = vmatpush.bf16.msra.mxu0 %v1868
    %2609 = vmatpush.bf16.msra.mxu0 %v1861
    %2610 = vmatpush.bf16.msra.mxu0 %v1854
    %2611 = vmatpush.bf16.msra.mxu0 %v1847
    %2612 = vmatpush.bf16.msra.mxu0 %v1840
    %2613 = vmatmul.bf16.gmra.mxu0 %v493
    %v2614 = vpop.f32.mrf.mxu0
    %v2615 = vadd.f32 %v2602, %v2614
    %v2616 = vpop.f32.mrf.mxu0
    %2617 = vdwg.mxu0
    %2618 = vmatpush.bf16.msra.mxu0 %v1610
    %2619 = vmatpush.bf16.msra.mxu0 %v1603
    %2620 = vmatpush.bf16.msra.mxu0 %v1596
    %2621 = vmatpush.bf16.msra.mxu0 %v1589
    %2622 = vmatpush.bf16.msra.mxu0 %v1582
    %2623 = vmatpush.bf16.msra.mxu0 %v1575
    %2624 = vmatpush.bf16.msra.mxu0 %v1568
    %2625 = vmatpush.bf16.msra.mxu0 %v1561
    %2626 = vmatmul.bf16.gmra.mxu0 %v488
    %v2627 = vpop.f32.mrf.mxu0
    %v2628 = vadd.f32 0.0, %v2627
    %v2629 = vpop.f32.mrf.mxu0
    %2630 = vdwg.mxu0
    %2631 = vmatpush.bf16.msra.mxu0 %v1666
    %2632 = vmatpush.bf16.msra.mxu0 %v1659
    %2633 = vmatpush.bf16.msra.mxu0 %v1652
    %2634 = vmatpush.bf16.msra.mxu0 %v1645
    %2635 = vmatpush.bf16.msra.mxu0 %v1638
    %2636 = vmatpush.bf16.msra.mxu0 %v1631
    %2637 = vmatpush.bf16.msra.mxu0 %v1624
    %2638 = vmatpush.bf16.msra.mxu0 %v1617
    %2639 = vmatmul.bf16.gmra.mxu0 %v489
    %v2640 = vpop.f32.mrf.mxu0
    %v2641 = vadd.f32 %v2628, %v2640
    %v2642 = vpop.f32.mrf.mxu0
    %2643 = vdwg.mxu0
    %2644 = vmatpush.bf16.msra.mxu0 %v1722
    %2645 = vmatpush.bf16.msra.mxu0 %v1715
    %2646 = vmatpush.bf16.msra.mxu0 %v1708
    %2647 = vmatpush.bf16.msra.mxu0 %v1701
    %2648 = vmatpush.bf16.msra.mxu0 %v1694
    %2649 = vmatpush.bf16.msra.mxu0 %v1687
    %2650 = vmatpush.bf16.msra.mxu0 %v1680
    %2651 = vmatpush.bf16.msra.mxu0 %v1673
    %2652 = vmatmul.bf16.gmra.mxu0 %v490
    %v2653 = vpop.f32.mrf.mxu0
    %v2654 = vadd.f32 %v2641, %v2653
    %v2655 = vpop.f32.mrf.mxu0
    %2656 = vdwg.mxu0
    %2657 = vmatpush.bf16.msra.mxu0 %v1778
    %2658 = vmatpush.bf16.msra.mxu0 %v1771
    %2659 = vmatpush.bf16.msra.mxu0 %v1764
    %2660 = vmatpush.bf16.msra.mxu0 %v1757
    %2661 = vmatpush.bf16.msra.mxu0 %v1750
    %2662 = vmatpush.bf16.msra.mxu0 %v1743
    %2663 = vmatpush.bf16.msra.mxu0 %v1736
    %2664 = vmatpush.bf16.msra.mxu0 %v1729
    %2665 = vmatmul.bf16.gmra.mxu0 %v491
    %v2666 = vpop.f32.mrf.mxu0
    %v2667 = vadd.f32 %v2654, %v2666
    %v2668 = vpop.f32.mrf.mxu0
    %2669 = vdwg.mxu0
    %2670 = vmatpush.bf16.msra.mxu0 %v1834
    %2671 = vmatpush.bf16.msra.mxu0 %v1827
    %2672 = vmatpush.bf16.msra.mxu0 %v1820
    %2673 = vmatpush.bf16.msra.mxu0 %v1813
    %2674 = vmatpush.bf16.msra.mxu0 %v1806
    %2675 = vmatpush.bf16.msra.mxu0 %v1799
    %2676 = vmatpush.bf16.msra.mxu0 %v1792
    %2677 = vmatpush.bf16.msra.mxu0 %v1785
    %2678 = vmatmul.bf16.gmra.mxu0 %v492
    %v2679 = vpop.f32.mrf.mxu0
    %v2680 = vadd.f32 %v2667, %v2679
    %v2681 = vpop.f32.mrf.mxu0
    %2682 = vdwg.mxu0
    %2683 = vmatpush.bf16.msra.mxu0 %v1890
    %2684 = vmatpush.bf16.msra.mxu0 %v1883
    %2685 = vmatpush.bf16.msra.mxu0 %v1876
    %2686 = vmatpush.bf16.msra.mxu0 %v1869
    %2687 = vmatpush.bf16.msra.mxu0 %v1862
    %2688 = vmatpush.bf16.msra.mxu0 %v1855
    %2689 = vmatpush.bf16.msra.mxu0 %v1848
    %2690 = vmatpush.bf16.msra.mxu0 %v1841
    %2691 = vmatmul.bf16.gmra.mxu0 %v493
    %v2692 = vpop.f32.mrf.mxu0
    %v2693 = vadd.f32 %v2680, %v2692
    %v2694 = vpop.f32.mrf.mxu0
    %2695 = vdwg.mxu0
    %2696 = vmatpush.bf16.msra.mxu0 %v1611
    %2697 = vmatpush.bf16.msra.mxu0 %v1604
    %2698 = vmatpush.bf16.msra.mxu0 %v1597
    %2699 = vmatpush.bf16.msra.mxu0 %v1590
    %2700 = vmatpush.bf16.msra.mxu0 %v1583
    %2701 = vmatpush.bf16.msra.mxu0 %v1576
    %2702 = vmatpush.bf16.msra.mxu0 %v1569
    %2703 = vmatpush.bf16.msra.mxu0 %v1562
    %2704 = vmatmul.bf16.gmra.mxu0 %v488
    %v2705 = vpop.f32.mrf.mxu0
    %v2706 = vadd.f32 0.0, %v2705
    %v2707 = vpop.f32.mrf.mxu0
    %2708 = vdwg.mxu0
    %2709 = vmatpush.bf16.msra.mxu0 %v1667
    %2710 = vmatpush.bf16.msra.mxu0 %v1660
    %2711 = vmatpush.bf16.msra.mxu0 %v1653
    %2712 = vmatpush.bf16.msra.mxu0 %v1646
    %2713 = vmatpush.bf16.msra.mxu0 %v1639
    %2714 = vmatpush.bf16.msra.mxu0 %v1632
    %2715 = vmatpush.bf16.msra.mxu0 %v1625
    %2716 = vmatpush.bf16.msra.mxu0 %v1618
    %2717 = vmatmul.bf16.gmra.mxu0 %v489
    %v2718 = vpop.f32.mrf.mxu0
    %v2719 = vadd.f32 %v2706, %v2718
    %v2720 = vpop.f32.mrf.mxu0
    %2721 = vdwg.mxu0
    %2722 = vmatpush.bf16.msra.mxu0 %v1723
    %2723 = vmatpush.bf16.msra.mxu0 %v1716
    %2724 = vmatpush.bf16.msra.mxu0 %v1709
    %2725 = vmatpush.bf16.msra.mxu0 %v1702
    %2726 = vmatpush.bf16.msra.mxu0 %v1695
    %2727 = vmatpush.bf16.msra.mxu0 %v1688
    %2728 = vmatpush.bf16.msra.mxu0 %v1681
    %2729 = vmatpush.bf16.msra.mxu0 %v1674
    %2730 = vmatmul.bf16.gmra.mxu0 %v490
    %v2731 = vpop.f32.mrf.mxu0
    %v2732 = vadd.f32 %v2719, %v2731
    %v2733 = vpop.f32.mrf.mxu0
    %2734 = vdwg.mxu0
    %2735 = vmatpush.bf16.msra.mxu0 %v1779
    %2736 = vmatpush.bf16.msra.mxu0 %v1772
    %2737 = vmatpush.bf16.msra.mxu0 %v1765
    %2738 = vmatpush.bf16.msra.mxu0 %v1758
    %2739 = vmatpush.bf16.msra.mxu0 %v1751
    %2740 = vmatpush.bf16.msra.mxu0 %v1744
    %2741 = vmatpush.bf16.msra.mxu0 %v1737
    %2742 = vmatpush.bf16.msra.mxu0 %v1730
    %2743 = vmatmul.bf16.gmra.mxu0 %v491
    %v2744 = vpop.f32.mrf.mxu0
    %v2745 = vadd.f32 %v2732, %v2744
    %v2746 = vpop.f32.mrf.mxu0
    %2747 = vdwg.mxu0
    %2748 = vmatpush.bf16.msra.mxu0 %v1835
    %2749 = vmatpush.bf16.msra.mxu0 %v1828
    %2750 = vmatpush.bf16.msra.mxu0 %v1821
    %2751 = vmatpush.bf16.msra.mxu0 %v1814
    %2752 = vmatpush.bf16.msra.mxu0 %v1807
    %2753 = vmatpush.bf16.msra.mxu0 %v1800
    %2754 = vmatpush.bf16.msra.mxu0 %v1793
    %2755 = vmatpush.bf16.msra.mxu0 %v1786
    %2756 = vmatmul.bf16.gmra.mxu0 %v492
    %v2757 = vpop.f32.mrf.mxu0
    %v2758 = vadd.f32 %v2745, %v2757
    %v2759 = vpop.f32.mrf.mxu0
    %2760 = vdwg.mxu0
    %2761 = vmatpush.bf16.msra.mxu0 %v1891
    %2762 = vmatpush.bf16.msra.mxu0 %v1884
    %2763 = vmatpush.bf16.msra.mxu0 %v1877
    %2764 = vmatpush.bf16.msra.mxu0 %v1870
    %2765 = vmatpush.bf16.msra.mxu0 %v1863
    %2766 = vmatpush.bf16.msra.mxu0 %v1856
    %2767 = vmatpush.bf16.msra.mxu0 %v1849
    %2768 = vmatpush.bf16.msra.mxu0 %v1842
    %2769 = vmatmul.bf16.gmra.mxu0 %v493
    %v2770 = vpop.f32.mrf.mxu0
    %v2771 = vadd.f32 %v2758, %v2770
    %v2772 = vpop.f32.mrf.mxu0
    %2773 = vdwg.mxu0
    %v2774 = vld [vmem:[#allocation9] sm:$0x3f]
    %v2776 = vperm.slane %v2774, 0
    %v2777 = vperm.slane %v2774, 1
    %v2778 = vperm.slane %v2774, 2
    %v2779 = vperm.slane %v2774, 3
    %v2780 = vperm.slane %v2774, 4
    %v2781 = vperm.slane %v2774, 5
    %v2788 = vadd.f32 %v2303, %v2776
    %v2789 = vadd.f32 %v2381, %v2777
    %v2790 = vadd.f32 %v2459, %v2778
    %v2791 = vadd.f32 %v2537, %v2779
    %v2792 = vadd.f32 %v2615, %v2780
    %v2793 = vadd.f32 %v2693, %v2781
    %s2794 = smul.u32 4, 96
    %s2795 = smul.u32 %s2794, 6
    %s2796 = sshll.u32 %s2795, 4
    %2797 = dma.done [#allocation3], %s2796
    %v2798 = vld [vmem:[#allocation2] sm:$0xff]
    %v2799 = vld [vmem:[#allocation2 + $0x8] sm:$0xff]
    %v2800 = vld [vmem:[#allocation2 + $0x10] sm:$0xff]
    %v2801 = vld [vmem:[#allocation2 + $0x18] sm:$0xff]
    %v2802 = vld [vmem:[#allocation2 + $0x20] sm:$0xff]
    %v2803 = vld [vmem:[#allocation2 + $0x28] sm:$0xff]
    %v2804 = vld [vmem:[#allocation2 + $0x30] sm:$0xff]
    %v2805 = vld [vmem:[#allocation2 + $0x38] sm:$0xff]
    %v2806 = vld [vmem:[#allocation2 + $0x40] sm:$0xff]
    %v2807 = vld [vmem:[#allocation2 + $0x48] sm:$0xff]
    %v2808 = vld [vmem:[#allocation2 + $0x50] sm:$0xff]
    %v2809 = vld [vmem:[#allocation2 + $0x58] sm:$0xff]
    %v2810 = vld [vmem:[#allocation2 + $0x60] sm:$0xff]
    %v2811 = vld [vmem:[#allocation2 + $0x68] sm:$0xff]
    %v2812 = vld [vmem:[#allocation2 + $0x70] sm:$0xff]
    %v2813 = vld [vmem:[#allocation2 + $0x78] sm:$0xff]
    %v2814 = vld [vmem:[#allocation2 + $0x80] sm:$0xff]
    %v2815 = vld [vmem:[#allocation2 + $0x88] sm:$0xff]
    %v2816 = vld [vmem:[#allocation2 + $0x90] sm:$0xff]
    %v2817 = vld [vmem:[#allocation2 + $0x98] sm:$0xff]
    %v2818 = vld [vmem:[#allocation2 + $0xa0] sm:$0xff]
    %v2819 = vld [vmem:[#allocation2 + $0xa8] sm:$0xff]
    %v2820 = vld [vmem:[#allocation2 + $0xb0] sm:$0xff]
    %v2821 = vld [vmem:[#allocation2 + $0xb8] sm:$0xff]
    %v2822 = vld [vmem:[#allocation2 + $0xc0] sm:$0xff]
    %v2823 = vld [vmem:[#allocation2 + $0xc8] sm:$0xff]
    %v2824 = vld [vmem:[#allocation2 + $0xd0] sm:$0xff]
    %v2825 = vld [vmem:[#allocation2 + $0xd8] sm:$0xff]
    %v2826 = vld [vmem:[#allocation2 + $0xe0] sm:$0xff]
    %v2827 = vld [vmem:[#allocation2 + $0xe8] sm:$0xff]
    %v2828 = vld [vmem:[#allocation2 + $0xf0] sm:$0xff]
    %v2829 = vld [vmem:[#allocation2 + $0xf8] sm:$0xff]
    %v2830 = vld [vmem:[#allocation2 + $0x100] sm:$0xff]
    %v2831 = vld [vmem:[#allocation2 + $0x108] sm:$0xff]
    %v2832 = vld [vmem:[#allocation2 + $0x110] sm:$0xff]
    %v2833 = vld [vmem:[#allocation2 + $0x118] sm:$0xff]
    %v2834 = vld [vmem:[#allocation2 + $0x120] sm:$0xff]
    %v2835 = vld [vmem:[#allocation2 + $0x128] sm:$0xff]
    %v2836 = vld [vmem:[#allocation2 + $0x130] sm:$0xff]
    %v2837 = vld [vmem:[#allocation2 + $0x138] sm:$0xff]
    %v2838 = vld [vmem:[#allocation2 + $0x140] sm:$0xff]
    %v2839 = vld [vmem:[#allocation2 + $0x148] sm:$0xff]
    %v2840 = vld [vmem:[#allocation2 + $0x150] sm:$0xff]
    %v2841 = vld [vmem:[#allocation2 + $0x158] sm:$0xff]
    %v2842 = vld [vmem:[#allocation2 + $0x160] sm:$0xff]
    %v2843 = vld [vmem:[#allocation2 + $0x168] sm:$0xff]
    %v2844 = vld [vmem:[#allocation2 + $0x170] sm:$0xff]
    %v2845 = vld [vmem:[#allocation2 + $0x178] sm:$0xff]
    %v2846 = vld [vmem:[#allocation2 + $0x180] sm:$0xff]
    %v2847 = vld [vmem:[#allocation2 + $0x188] sm:$0xff]
    %v2848 = vld [vmem:[#allocation2 + $0x190] sm:$0xff]
    %v2849 = vld [vmem:[#allocation2 + $0x198] sm:$0xff]
    %v2850 = vld [vmem:[#allocation2 + $0x1a0] sm:$0xff]
    %v2851 = vld [vmem:[#allocation2 + $0x1a8] sm:$0xff]
    %v2852 = vld [vmem:[#allocation2 + $0x1b0] sm:$0xff]
    %v2853 = vld [vmem:[#allocation2 + $0x1b8] sm:$0xff]
    %v2854 = vld [vmem:[#allocation2 + $0x1c0] sm:$0xff]
    %v2855 = vld [vmem:[#allocation2 + $0x1c8] sm:$0xff]
    %v2856 = vld [vmem:[#allocation2 + $0x1d0] sm:$0xff]
    %v2857 = vld [vmem:[#allocation2 + $0x1d8] sm:$0xff]
    %v2858 = vld [vmem:[#allocation2 + $0x1e0] sm:$0xff]
    %v2859 = vld [vmem:[#allocation2 + $0x1e8] sm:$0xff]
    %v2860 = vld [vmem:[#allocation2 + $0x1f0] sm:$0xff]
    %v2861 = vld [vmem:[#allocation2 + $0x1f8] sm:$0xff]
    %v2862 = vld [vmem:[#allocation2 + $0x200] sm:$0xff]
    %v2863 = vld [vmem:[#allocation2 + $0x208] sm:$0xff]
    %v2864 = vld [vmem:[#allocation2 + $0x210] sm:$0xff]
    %v2865 = vld [vmem:[#allocation2 + $0x218] sm:$0xff]
    %v2866 = vld [vmem:[#allocation2 + $0x220] sm:$0xff]
    %v2867 = vld [vmem:[#allocation2 + $0x228] sm:$0xff]
    %v2868 = vld [vmem:[#allocation2 + $0x230] sm:$0xff]
    %v2869 = vld [vmem:[#allocation2 + $0x238] sm:$0xff]
    %v2870 = vld [vmem:[#allocation2 + $0x240] sm:$0xff]
    %v2871 = vld [vmem:[#allocation2 + $0x248] sm:$0xff]
    %v2872 = vld [vmem:[#allocation2 + $0x250] sm:$0xff]
    %v2873 = vld [vmem:[#allocation2 + $0x258] sm:$0xff]
    %v2874 = vld [vmem:[#allocation2 + $0x260] sm:$0xff]
    %v2875 = vld [vmem:[#allocation2 + $0x268] sm:$0xff]
    %v2876 = vld [vmem:[#allocation2 + $0x270] sm:$0xff]
    %v2877 = vld [vmem:[#allocation2 + $0x278] sm:$0xff]
    %v2878 = vld [vmem:[#allocation2 + $0x280] sm:$0xff]
    %v2879 = vld [vmem:[#allocation2 + $0x288] sm:$0xff]
    %v2880 = vld [vmem:[#allocation2 + $0x290] sm:$0xff]
    %v2881 = vld [vmem:[#allocation2 + $0x298] sm:$0xff]
    %v2882 = vld [vmem:[#allocation2 + $0x2a0] sm:$0xff]
    %v2883 = vld [vmem:[#allocation2 + $0x2a8] sm:$0xff]
    %v2884 = vld [vmem:[#allocation2 + $0x2b0] sm:$0xff]
    %v2885 = vld [vmem:[#allocation2 + $0x2b8] sm:$0xff]
    %v2886 = vld [vmem:[#allocation2 + $0x2c0] sm:$0xff]
    %v2887 = vld [vmem:[#allocation2 + $0x2c8] sm:$0xff]
    %v2888 = vld [vmem:[#allocation2 + $0x2d0] sm:$0xff]
    %v2889 = vld [vmem:[#allocation2 + $0x2d8] sm:$0xff]
    %v2890 = vld [vmem:[#allocation2 + $0x2e0] sm:$0xff]
    %v2891 = vld [vmem:[#allocation2 + $0x2e8] sm:$0xff]
    %v2892 = vld [vmem:[#allocation2 + $0x2f0] sm:$0xff]
    %v2893 = vld [vmem:[#allocation2 + $0x2f8] sm:$0xff]
    %v2894 = vld [vmem:[#allocation2 + $0x300] sm:$0xff]
    %v2895 = vld [vmem:[#allocation2 + $0x308] sm:$0xff]
    %v2896 = vld [vmem:[#allocation2 + $0x310] sm:$0xff]
    %v2897 = vld [vmem:[#allocation2 + $0x318] sm:$0xff]
    %v2898 = vld [vmem:[#allocation2 + $0x320] sm:$0xff]
    %v2899 = vld [vmem:[#allocation2 + $0x328] sm:$0xff]
    %v2900 = vld [vmem:[#allocation2 + $0x330] sm:$0xff]
    %v2901 = vld [vmem:[#allocation2 + $0x338] sm:$0xff]
    %v2902 = vld [vmem:[#allocation2 + $0x340] sm:$0xff]
    %v2903 = vld [vmem:[#allocation2 + $0x348] sm:$0xff]
    %v2904 = vld [vmem:[#allocation2 + $0x350] sm:$0xff]
    %v2905 = vld [vmem:[#allocation2 + $0x358] sm:$0xff]
    %v2906 = vld [vmem:[#allocation2 + $0x360] sm:$0xff]
    %v2907 = vld [vmem:[#allocation2 + $0x368] sm:$0xff]
    %v2908 = vld [vmem:[#allocation2 + $0x370] sm:$0xff]
    %v2909 = vld [vmem:[#allocation2 + $0x378] sm:$0xff]
    %v2910 = vld [vmem:[#allocation2 + $0x380] sm:$0xff]
    %v2911 = vld [vmem:[#allocation2 + $0x388] sm:$0xff]
    %v2912 = vld [vmem:[#allocation2 + $0x390] sm:$0xff]
    %v2913 = vld [vmem:[#allocation2 + $0x398] sm:$0xff]
    %v2914 = vld [vmem:[#allocation2 + $0x3a0] sm:$0xff]
    %v2915 = vld [vmem:[#allocation2 + $0x3a8] sm:$0xff]
    %v2916 = vld [vmem:[#allocation2 + $0x3b0] sm:$0xff]
    %v2917 = vld [vmem:[#allocation2 + $0x3b8] sm:$0xff]
    %v2918 = vld [vmem:[#allocation2 + $0x3c0] sm:$0xff]
    %v2919 = vld [vmem:[#allocation2 + $0x3c8] sm:$0xff]
    %v2920 = vld [vmem:[#allocation2 + $0x3d0] sm:$0xff]
    %v2921 = vld [vmem:[#allocation2 + $0x3d8] sm:$0xff]
    %v2922 = vld [vmem:[#allocation2 + $0x3e0] sm:$0xff]
    %v2923 = vld [vmem:[#allocation2 + $0x3e8] sm:$0xff]
    %v2924 = vld [vmem:[#allocation2 + $0x3f0] sm:$0xff]
    %v2925 = vld [vmem:[#allocation2 + $0x3f8] sm:$0xff]
    %v2926 = vld [vmem:[#allocation2 + $0x400] sm:$0xff]
    %v2927 = vld [vmem:[#allocation2 + $0x408] sm:$0xff]
    %v2928 = vld [vmem:[#allocation2 + $0x410] sm:$0xff]
    %v2929 = vld [vmem:[#allocation2 + $0x418] sm:$0xff]
    %v2930 = vld [vmem:[#allocation2 + $0x420] sm:$0xff]
    %v2931 = vld [vmem:[#allocation2 + $0x428] sm:$0xff]
    %v2932 = vld [vmem:[#allocation2 + $0x430] sm:$0xff]
    %v2933 = vld [vmem:[#allocation2 + $0x438] sm:$0xff]
    %v2934 = vld [vmem:[#allocation2 + $0x440] sm:$0xff]
    %v2935 = vld [vmem:[#allocation2 + $0x448] sm:$0xff]
    %v2936 = vld [vmem:[#allocation2 + $0x450] sm:$0xff]
    %v2937 = vld [vmem:[#allocation2 + $0x458] sm:$0xff]
    %v2938 = vld [vmem:[#allocation2 + $0x460] sm:$0xff]
    %v2939 = vld [vmem:[#allocation2 + $0x468] sm:$0xff]
    %v2940 = vld [vmem:[#allocation2 + $0x470] sm:$0xff]
    %v2941 = vld [vmem:[#allocation2 + $0x478] sm:$0xff]
    %v2942 = vld [vmem:[#allocation2 + $0x480] sm:$0xff]
    %v2943 = vld [vmem:[#allocation2 + $0x488] sm:$0xff]
    %v2944 = vld [vmem:[#allocation2 + $0x490] sm:$0xff]
    %v2945 = vld [vmem:[#allocation2 + $0x498] sm:$0xff]
    %v2946 = vld [vmem:[#allocation2 + $0x4a0] sm:$0xff]
    %v2947 = vld [vmem:[#allocation2 + $0x4a8] sm:$0xff]
    %v2948 = vld [vmem:[#allocation2 + $0x4b0] sm:$0xff]
    %v2949 = vld [vmem:[#allocation2 + $0x4b8] sm:$0xff]
    %v2950 = vld [vmem:[#allocation2 + $0x4c0] sm:$0xff]
    %v2951 = vld [vmem:[#allocation2 + $0x4c8] sm:$0xff]
    %v2952 = vld [vmem:[#allocation2 + $0x4d0] sm:$0xff]
    %v2953 = vld [vmem:[#allocation2 + $0x4d8] sm:$0xff]
    %v2954 = vld [vmem:[#allocation2 + $0x4e0] sm:$0xff]
    %v2955 = vld [vmem:[#allocation2 + $0x4e8] sm:$0xff]
    %v2956 = vld [vmem:[#allocation2 + $0x4f0] sm:$0xff]
    %v2957 = vld [vmem:[#allocation2 + $0x4f8] sm:$0xff]
    %v2958 = vld [vmem:[#allocation2 + $0x500] sm:$0xff]
    %v2959 = vld [vmem:[#allocation2 + $0x508] sm:$0xff]
    %v2960 = vld [vmem:[#allocation2 + $0x510] sm:$0xff]
    %v2961 = vld [vmem:[#allocation2 + $0x518] sm:$0xff]
    %v2962 = vld [vmem:[#allocation2 + $0x520] sm:$0xff]
    %v2963 = vld [vmem:[#allocation2 + $0x528] sm:$0xff]
    %v2964 = vld [vmem:[#allocation2 + $0x530] sm:$0xff]
    %v2965 = vld [vmem:[#allocation2 + $0x538] sm:$0xff]
    %v2966 = vld [vmem:[#allocation2 + $0x540] sm:$0xff]
    %v2967 = vld [vmem:[#allocation2 + $0x548] sm:$0xff]
    %v2968 = vld [vmem:[#allocation2 + $0x550] sm:$0xff]
    %v2969 = vld [vmem:[#allocation2 + $0x558] sm:$0xff]
    %v2970 = vld [vmem:[#allocation2 + $0x560] sm:$0xff]
    %v2971 = vld [vmem:[#allocation2 + $0x568] sm:$0xff]
    %v2972 = vld [vmem:[#allocation2 + $0x570] sm:$0xff]
    %v2973 = vld [vmem:[#allocation2 + $0x578] sm:$0xff]
    %v2974 = vld [vmem:[#allocation2 + $0x580] sm:$0xff]
    %v2975 = vld [vmem:[#allocation2 + $0x588] sm:$0xff]
    %v2976 = vld [vmem:[#allocation2 + $0x590] sm:$0xff]
    %v2977 = vld [vmem:[#allocation2 + $0x598] sm:$0xff]
    %v2978 = vld [vmem:[#allocation2 + $0x5a0] sm:$0xff]
    %v2979 = vld [vmem:[#allocation2 + $0x5a8] sm:$0xff]
    %v2980 = vld [vmem:[#allocation2 + $0x5b0] sm:$0xff]
    %v2981 = vld [vmem:[#allocation2 + $0x5b8] sm:$0xff]
    %v2982 = vld [vmem:[#allocation2 + $0x5c0] sm:$0xff]
    %v2983 = vld [vmem:[#allocation2 + $0x5c8] sm:$0xff]
    %v2984 = vld [vmem:[#allocation2 + $0x5d0] sm:$0xff]
    %v2985 = vld [vmem:[#allocation2 + $0x5d8] sm:$0xff]
    %v2986 = vld [vmem:[#allocation2 + $0x5e0] sm:$0xff]
    %v2987 = vld [vmem:[#allocation2 + $0x5e8] sm:$0xff]
    %v2988 = vld [vmem:[#allocation2 + $0x5f0] sm:$0xff]
    %v2989 = vld [vmem:[#allocation2 + $0x5f8] sm:$0xff]
    %v2990 = vld [vmem:[#allocation2 + $0x600] sm:$0xff]
    %v2991 = vld [vmem:[#allocation2 + $0x608] sm:$0xff]
    %v2992 = vld [vmem:[#allocation2 + $0x610] sm:$0xff]
    %v2993 = vld [vmem:[#allocation2 + $0x618] sm:$0xff]
    %v2994 = vld [vmem:[#allocation2 + $0x620] sm:$0xff]
    %v2995 = vld [vmem:[#allocation2 + $0x628] sm:$0xff]
    %v2996 = vld [vmem:[#allocation2 + $0x630] sm:$0xff]
    %v2997 = vld [vmem:[#allocation2 + $0x638] sm:$0xff]
    %v2998 = vld [vmem:[#allocation2 + $0x640] sm:$0xff]
    %v2999 = vld [vmem:[#allocation2 + $0x648] sm:$0xff]
    %v3000 = vld [vmem:[#allocation2 + $0x650] sm:$0xff]
    %v3001 = vld [vmem:[#allocation2 + $0x658] sm:$0xff]
    %v3002 = vld [vmem:[#allocation2 + $0x660] sm:$0xff]
    %v3003 = vld [vmem:[#allocation2 + $0x668] sm:$0xff]
    %v3004 = vld [vmem:[#allocation2 + $0x670] sm:$0xff]
    %v3005 = vld [vmem:[#allocation2 + $0x678] sm:$0xff]
    %v3006 = vld [vmem:[#allocation2 + $0x680] sm:$0xff]
    %v3007 = vld [vmem:[#allocation2 + $0x688] sm:$0xff]
    %v3008 = vld [vmem:[#allocation2 + $0x690] sm:$0xff]
    %v3009 = vld [vmem:[#allocation2 + $0x698] sm:$0xff]
    %v3010 = vld [vmem:[#allocation2 + $0x6a0] sm:$0xff]
    %v3011 = vld [vmem:[#allocation2 + $0x6a8] sm:$0xff]
    %v3012 = vld [vmem:[#allocation2 + $0x6b0] sm:$0xff]
    %v3013 = vld [vmem:[#allocation2 + $0x6b8] sm:$0xff]
    %v3014 = vld [vmem:[#allocation2 + $0x6c0] sm:$0xff]
    %v3015 = vld [vmem:[#allocation2 + $0x6c8] sm:$0xff]
    %v3016 = vld [vmem:[#allocation2 + $0x6d0] sm:$0xff]
    %v3017 = vld [vmem:[#allocation2 + $0x6d8] sm:$0xff]
    %v3018 = vld [vmem:[#allocation2 + $0x6e0] sm:$0xff]
    %v3019 = vld [vmem:[#allocation2 + $0x6e8] sm:$0xff]
    %v3020 = vld [vmem:[#allocation2 + $0x6f0] sm:$0xff]
    %v3021 = vld [vmem:[#allocation2 + $0x6f8] sm:$0xff]
    %v3022 = vld [vmem:[#allocation2 + $0x700] sm:$0xff]
    %v3023 = vld [vmem:[#allocation2 + $0x708] sm:$0xff]
    %v3024 = vld [vmem:[#allocation2 + $0x710] sm:$0xff]
    %v3025 = vld [vmem:[#allocation2 + $0x718] sm:$0xff]
    %v3026 = vld [vmem:[#allocation2 + $0x720] sm:$0xff]
    %v3027 = vld [vmem:[#allocation2 + $0x728] sm:$0xff]
    %v3028 = vld [vmem:[#allocation2 + $0x730] sm:$0xff]
    %v3029 = vld [vmem:[#allocation2 + $0x738] sm:$0xff]
    %v3030 = vld [vmem:[#allocation2 + $0x740] sm:$0xff]
    %v3031 = vld [vmem:[#allocation2 + $0x748] sm:$0xff]
    %v3032 = vld [vmem:[#allocation2 + $0x750] sm:$0xff]
    %v3033 = vld [vmem:[#allocation2 + $0x758] sm:$0xff]
    %v3034 = vld [vmem:[#allocation2 + $0x760] sm:$0xff]
    %v3035 = vld [vmem:[#allocation2 + $0x768] sm:$0xff]
    %v3036 = vld [vmem:[#allocation2 + $0x770] sm:$0xff]
    %v3037 = vld [vmem:[#allocation2 + $0x778] sm:$0xff]
    %v3038 = vld [vmem:[#allocation2 + $0x780] sm:$0xff]
    %v3039 = vld [vmem:[#allocation2 + $0x788] sm:$0xff]
    %v3040 = vld [vmem:[#allocation2 + $0x790] sm:$0xff]
    %v3041 = vld [vmem:[#allocation2 + $0x798] sm:$0xff]
    %v3042 = vld [vmem:[#allocation2 + $0x7a0] sm:$0xff]
    %v3043 = vld [vmem:[#allocation2 + $0x7a8] sm:$0xff]
    %v3044 = vld [vmem:[#allocation2 + $0x7b0] sm:$0xff]
    %v3045 = vld [vmem:[#allocation2 + $0x7b8] sm:$0xff]
    %v3046 = vld [vmem:[#allocation2 + $0x7c0] sm:$0xff]
    %v3047 = vld [vmem:[#allocation2 + $0x7c8] sm:$0xff]
    %v3048 = vld [vmem:[#allocation2 + $0x7d0] sm:$0xff]
    %v3049 = vld [vmem:[#allocation2 + $0x7d8] sm:$0xff]
    %v3050 = vld [vmem:[#allocation2 + $0x7e0] sm:$0xff]
    %v3051 = vld [vmem:[#allocation2 + $0x7e8] sm:$0xff]
    %v3052 = vld [vmem:[#allocation2 + $0x7f0] sm:$0xff]
    %v3053 = vld [vmem:[#allocation2 + $0x7f8] sm:$0xff]
    %v3054 = vld [vmem:[#allocation2 + $0x800] sm:$0xff]
    %v3055 = vld [vmem:[#allocation2 + $0x808] sm:$0xff]
    %v3056 = vld [vmem:[#allocation2 + $0x810] sm:$0xff]
    %v3057 = vld [vmem:[#allocation2 + $0x818] sm:$0xff]
    %v3058 = vld [vmem:[#allocation2 + $0x820] sm:$0xff]
    %v3059 = vld [vmem:[#allocation2 + $0x828] sm:$0xff]
    %v3060 = vld [vmem:[#allocation2 + $0x830] sm:$0xff]
    %v3061 = vld [vmem:[#allocation2 + $0x838] sm:$0xff]
    %v3062 = vld [vmem:[#allocation2 + $0x840] sm:$0xff]
    %v3063 = vld [vmem:[#allocation2 + $0x848] sm:$0xff]
    %v3064 = vld [vmem:[#allocation2 + $0x850] sm:$0xff]
    %v3065 = vld [vmem:[#allocation2 + $0x858] sm:$0xff]
    %v3066 = vld [vmem:[#allocation2 + $0x860] sm:$0xff]
    %v3067 = vld [vmem:[#allocation2 + $0x868] sm:$0xff]
    %v3068 = vld [vmem:[#allocation2 + $0x870] sm:$0xff]
    %v3069 = vld [vmem:[#allocation2 + $0x878] sm:$0xff]
    %v3070 = vld [vmem:[#allocation2 + $0x880] sm:$0xff]
    %v3071 = vld [vmem:[#allocation2 + $0x888] sm:$0xff]
    %v3072 = vld [vmem:[#allocation2 + $0x890] sm:$0xff]
    %v3073 = vld [vmem:[#allocation2 + $0x898] sm:$0xff]
    %v3074 = vld [vmem:[#allocation2 + $0x8a0] sm:$0xff]
    %v3075 = vld [vmem:[#allocation2 + $0x8a8] sm:$0xff]
    %v3076 = vld [vmem:[#allocation2 + $0x8b0] sm:$0xff]
    %v3077 = vld [vmem:[#allocation2 + $0x8b8] sm:$0xff]
    %v3078 = vld [vmem:[#allocation2 + $0x8c0] sm:$0xff]
    %v3079 = vld [vmem:[#allocation2 + $0x8c8] sm:$0xff]
    %v3080 = vld [vmem:[#allocation2 + $0x8d0] sm:$0xff]
    %v3081 = vld [vmem:[#allocation2 + $0x8d8] sm:$0xff]
    %v3082 = vld [vmem:[#allocation2 + $0x8e0] sm:$0xff]
    %v3083 = vld [vmem:[#allocation2 + $0x8e8] sm:$0xff]
    %v3084 = vld [vmem:[#allocation2 + $0x8f0] sm:$0xff]
    %v3085 = vld [vmem:[#allocation2 + $0x8f8] sm:$0xff]
    %v3086 = vld [vmem:[%s1] sm:$0x3f]
    %3088 = vst [vmem:[#allocation1] ss:$9 sm:$0xff] %v3086
    %v3089 = vld [vmem:[#allocation1] sm:$0xff]
    %v3090 = vld [vmem:[#allocation1 + $0x9] sm:$0xff]
    %v3091 = vld [vmem:[#allocation1 + $0x12] sm:$0xff]
    %v3092 = vld [vmem:[#allocation1 + $0x1b] sm:$0xff]
    %v3093 = vld [vmem:[#allocation1 + $0x24] sm:$0xff]
    %v3094 = vld [vmem:[#allocation1 + $0x2d] sm:$0xff]
    %v3389 = vunpack.c.l.b16 %v2798
    %v3390 = vunpack.c.h.b16 %v2798
    %v3391 = vunpack.c.l.b16 %v2799
    %v3392 = vunpack.c.h.b16 %v2799
    %v3393 = vunpack.c.l.b16 %v2800
    %v3394 = vunpack.c.h.b16 %v2800
    %v3395 = vunpack.c.l.b16 %v2801
    %v3396 = vunpack.c.h.b16 %v2801
    %v3397 = vunpack.c.l.b16 %v2802
    %v3398 = vunpack.c.h.b16 %v2802
    %v3399 = vunpack.c.l.b16 %v2803
    %v3400 = vunpack.c.h.b16 %v2803
    %v3401 = vunpack.c.l.b16 %v2804
    %v3402 = vunpack.c.h.b16 %v2804
    %v3403 = vunpack.c.l.b16 %v2805
    %v3404 = vunpack.c.h.b16 %v2805
    %v3405 = vunpack.c.l.b16 %v2806
    %v3406 = vunpack.c.h.b16 %v2806
    %v3407 = vunpack.c.l.b16 %v2807
    %v3408 = vunpack.c.h.b16 %v2807
    %v3409 = vunpack.c.l.b16 %v2808
    %v3410 = vunpack.c.h.b16 %v2808
    %v3411 = vunpack.c.l.b16 %v2809
    %v3412 = vunpack.c.h.b16 %v2809
    %v3413 = vunpack.c.l.b16 %v2810
    %v3414 = vunpack.c.h.b16 %v2810
    %v3415 = vunpack.c.l.b16 %v2811
    %v3416 = vunpack.c.h.b16 %v2811
    %v3417 = vunpack.c.l.b16 %v2812
    %v3418 = vunpack.c.h.b16 %v2812
    %v3419 = vunpack.c.l.b16 %v2813
    %v3420 = vunpack.c.h.b16 %v2813
    %v3421 = vunpack.c.l.b16 %v2814
    %v3422 = vunpack.c.h.b16 %v2814
    %v3423 = vunpack.c.l.b16 %v2815
    %v3424 = vunpack.c.h.b16 %v2815
    %v3425 = vunpack.c.l.b16 %v2816
    %v3426 = vunpack.c.h.b16 %v2816
    %v3427 = vunpack.c.l.b16 %v2817
    %v3428 = vunpack.c.h.b16 %v2817
    %v3429 = vunpack.c.l.b16 %v2818
    %v3430 = vunpack.c.h.b16 %v2818
    %v3431 = vunpack.c.l.b16 %v2819
    %v3432 = vunpack.c.h.b16 %v2819
    %v3433 = vunpack.c.l.b16 %v2820
    %v3434 = vunpack.c.h.b16 %v2820
    %v3435 = vunpack.c.l.b16 %v2821
    %v3436 = vunpack.c.h.b16 %v2821
    %v3437 = vunpack.c.l.b16 %v2822
    %v3438 = vunpack.c.h.b16 %v2822
    %v3439 = vunpack.c.l.b16 %v2823
    %v3440 = vunpack.c.h.b16 %v2823
    %v3441 = vunpack.c.l.b16 %v2824
    %v3442 = vunpack.c.h.b16 %v2824
    %v3443 = vunpack.c.l.b16 %v2825
    %v3444 = vunpack.c.h.b16 %v2825
    %v3445 = vunpack.c.l.b16 %v2826
    %v3446 = vunpack.c.h.b16 %v2826
    %v3447 = vunpack.c.l.b16 %v2827
    %v3448 = vunpack.c.h.b16 %v2827
    %v3449 = vunpack.c.l.b16 %v2828
    %v3450 = vunpack.c.h.b16 %v2828
    %v3451 = vunpack.c.l.b16 %v2829
    %v3452 = vunpack.c.h.b16 %v2829
    %v3453 = vunpack.c.l.b16 %v2830
    %v3454 = vunpack.c.h.b16 %v2830
    %v3455 = vunpack.c.l.b16 %v2831
    %v3456 = vunpack.c.h.b16 %v2831
    %v3457 = vunpack.c.l.b16 %v2832
    %v3458 = vunpack.c.h.b16 %v2832
    %v3459 = vunpack.c.l.b16 %v2833
    %v3460 = vunpack.c.h.b16 %v2833
    %v3461 = vunpack.c.l.b16 %v2834
    %v3462 = vunpack.c.h.b16 %v2834
    %v3463 = vunpack.c.l.b16 %v2835
    %v3464 = vunpack.c.h.b16 %v2835
    %v3465 = vunpack.c.l.b16 %v2836
    %v3466 = vunpack.c.h.b16 %v2836
    %v3467 = vunpack.c.l.b16 %v2837
    %v3468 = vunpack.c.h.b16 %v2837
    %v3469 = vunpack.c.l.b16 %v2838
    %v3470 = vunpack.c.h.b16 %v2838
    %v3471 = vunpack.c.l.b16 %v2839
    %v3472 = vunpack.c.h.b16 %v2839
    %v3473 = vunpack.c.l.b16 %v2840
    %v3474 = vunpack.c.h.b16 %v2840
    %v3475 = vunpack.c.l.b16 %v2841
    %v3476 = vunpack.c.h.b16 %v2841
    %v3477 = vunpack.c.l.b16 %v2842
    %v3478 = vunpack.c.h.b16 %v2842
    %v3479 = vunpack.c.l.b16 %v2843
    %v3480 = vunpack.c.h.b16 %v2843
    %v3481 = vunpack.c.l.b16 %v2844
    %v3482 = vunpack.c.h.b16 %v2844
    %v3483 = vunpack.c.l.b16 %v2845
    %v3484 = vunpack.c.h.b16 %v2845
    %v3485 = vunpack.c.l.b16 %v2846
    %v3486 = vunpack.c.h.b16 %v2846
    %v3487 = vunpack.c.l.b16 %v2847
    %v3488 = vunpack.c.h.b16 %v2847
    %v3489 = vunpack.c.l.b16 %v2848
    %v3490 = vunpack.c.h.b16 %v2848
    %v3491 = vunpack.c.l.b16 %v2849
    %v3492 = vunpack.c.h.b16 %v2849
    %v3493 = vunpack.c.l.b16 %v2850
    %v3494 = vunpack.c.h.b16 %v2850
    %v3495 = vunpack.c.l.b16 %v2851
    %v3496 = vunpack.c.h.b16 %v2851
    %v3497 = vunpack.c.l.b16 %v2852
    %v3498 = vunpack.c.h.b16 %v2852
    %v3499 = vunpack.c.l.b16 %v2853
    %v3500 = vunpack.c.h.b16 %v2853
    %v3501 = vunpack.c.l.b16 %v2854
    %v3502 = vunpack.c.h.b16 %v2854
    %v3503 = vunpack.c.l.b16 %v2855
    %v3504 = vunpack.c.h.b16 %v2855
    %v3505 = vunpack.c.l.b16 %v2856
    %v3506 = vunpack.c.h.b16 %v2856
    %v3507 = vunpack.c.l.b16 %v2857
    %v3508 = vunpack.c.h.b16 %v2857
    %v3509 = vunpack.c.l.b16 %v2858
    %v3510 = vunpack.c.h.b16 %v2858
    %v3511 = vunpack.c.l.b16 %v2859
    %v3512 = vunpack.c.h.b16 %v2859
    %v3513 = vunpack.c.l.b16 %v2860
    %v3514 = vunpack.c.h.b16 %v2860
    %v3515 = vunpack.c.l.b16 %v2861
    %v3516 = vunpack.c.h.b16 %v2861
    %v3517 = vunpack.c.l.b16 %v2862
    %v3518 = vunpack.c.h.b16 %v2862
    %v3519 = vunpack.c.l.b16 %v2863
    %v3520 = vunpack.c.h.b16 %v2863
    %v3521 = vunpack.c.l.b16 %v2864
    %v3522 = vunpack.c.h.b16 %v2864
    %v3523 = vunpack.c.l.b16 %v2865
    %v3524 = vunpack.c.h.b16 %v2865
    %v3525 = vunpack.c.l.b16 %v2866
    %v3526 = vunpack.c.h.b16 %v2866
    %v3527 = vunpack.c.l.b16 %v2867
    %v3528 = vunpack.c.h.b16 %v2867
    %v3529 = vunpack.c.l.b16 %v2868
    %v3530 = vunpack.c.h.b16 %v2868
    %v3531 = vunpack.c.l.b16 %v2869
    %v3532 = vunpack.c.h.b16 %v2869
    %v3533 = vunpack.c.l.b16 %v2870
    %v3534 = vunpack.c.h.b16 %v2870
    %v3535 = vunpack.c.l.b16 %v2871
    %v3536 = vunpack.c.h.b16 %v2871
    %v3537 = vunpack.c.l.b16 %v2872
    %v3538 = vunpack.c.h.b16 %v2872
    %v3539 = vunpack.c.l.b16 %v2873
    %v3540 = vunpack.c.h.b16 %v2873
    %v3541 = vunpack.c.l.b16 %v2874
    %v3542 = vunpack.c.h.b16 %v2874
    %v3543 = vunpack.c.l.b16 %v2875
    %v3544 = vunpack.c.h.b16 %v2875
    %v3545 = vunpack.c.l.b16 %v2876
    %v3546 = vunpack.c.h.b16 %v2876
    %v3547 = vunpack.c.l.b16 %v2877
    %v3548 = vunpack.c.h.b16 %v2877
    %v3549 = vunpack.c.l.b16 %v2878
    %v3550 = vunpack.c.h.b16 %v2878
    %v3551 = vunpack.c.l.b16 %v2879
    %v3552 = vunpack.c.h.b16 %v2879
    %v3553 = vunpack.c.l.b16 %v2880
    %v3554 = vunpack.c.h.b16 %v2880
    %v3555 = vunpack.c.l.b16 %v2881
    %v3556 = vunpack.c.h.b16 %v2881
    %v3557 = vunpack.c.l.b16 %v2882
    %v3558 = vunpack.c.h.b16 %v2882
    %v3559 = vunpack.c.l.b16 %v2883
    %v3560 = vunpack.c.h.b16 %v2883
    %v3561 = vunpack.c.l.b16 %v2884
    %v3562 = vunpack.c.h.b16 %v2884
    %v3563 = vunpack.c.l.b16 %v2885
    %v3564 = vunpack.c.h.b16 %v2885
    %v3565 = vunpack.c.l.b16 %v2886
    %v3566 = vunpack.c.h.b16 %v2886
    %v3567 = vunpack.c.l.b16 %v2887
    %v3568 = vunpack.c.h.b16 %v2887
    %v3569 = vunpack.c.l.b16 %v2888
    %v3570 = vunpack.c.h.b16 %v2888
    %v3571 = vunpack.c.l.b16 %v2889
    %v3572 = vunpack.c.h.b16 %v2889
    %v3573 = vunpack.c.l.b16 %v2890
    %v3574 = vunpack.c.h.b16 %v2890
    %v3575 = vunpack.c.l.b16 %v2891
    %v3576 = vunpack.c.h.b16 %v2891
    %v3577 = vunpack.c.l.b16 %v2892
    %v3578 = vunpack.c.h.b16 %v2892
    %v3579 = vunpack.c.l.b16 %v2893
    %v3580 = vunpack.c.h.b16 %v2893
    %v3581 = vunpack.c.l.b16 %v2894
    %v3582 = vunpack.c.h.b16 %v2894
    %v3583 = vunpack.c.l.b16 %v2895
    %v3584 = vunpack.c.h.b16 %v2895
    %v3585 = vunpack.c.l.b16 %v2896
    %v3586 = vunpack.c.h.b16 %v2896
    %v3587 = vunpack.c.l.b16 %v2897
    %v3588 = vunpack.c.h.b16 %v2897
    %v3589 = vunpack.c.l.b16 %v2898
    %v3590 = vunpack.c.h.b16 %v2898
    %v3591 = vunpack.c.l.b16 %v2899
    %v3592 = vunpack.c.h.b16 %v2899
    %v3593 = vunpack.c.l.b16 %v2900
    %v3594 = vunpack.c.h.b16 %v2900
    %v3595 = vunpack.c.l.b16 %v2901
    %v3596 = vunpack.c.h.b16 %v2901
    %v3597 = vunpack.c.l.b16 %v2902
    %v3598 = vunpack.c.h.b16 %v2902
    %v3599 = vunpack.c.l.b16 %v2903
    %v3600 = vunpack.c.h.b16 %v2903
    %v3601 = vunpack.c.l.b16 %v2904
    %v3602 = vunpack.c.h.b16 %v2904
    %v3603 = vunpack.c.l.b16 %v2905
    %v3604 = vunpack.c.h.b16 %v2905
    %v3605 = vunpack.c.l.b16 %v2906
    %v3606 = vunpack.c.h.b16 %v2906
    %v3607 = vunpack.c.l.b16 %v2907
    %v3608 = vunpack.c.h.b16 %v2907
    %v3609 = vunpack.c.l.b16 %v2908
    %v3610 = vunpack.c.h.b16 %v2908
    %v3611 = vunpack.c.l.b16 %v2909
    %v3612 = vunpack.c.h.b16 %v2909
    %v3613 = vunpack.c.l.b16 %v2910
    %v3614 = vunpack.c.h.b16 %v2910
    %v3615 = vunpack.c.l.b16 %v2911
    %v3616 = vunpack.c.h.b16 %v2911
    %v3617 = vunpack.c.l.b16 %v2912
    %v3618 = vunpack.c.h.b16 %v2912
    %v3619 = vunpack.c.l.b16 %v2913
    %v3620 = vunpack.c.h.b16 %v2913
    %v3621 = vunpack.c.l.b16 %v2914
    %v3622 = vunpack.c.h.b16 %v2914
    %v3623 = vunpack.c.l.b16 %v2915
    %v3624 = vunpack.c.h.b16 %v2915
    %v3625 = vunpack.c.l.b16 %v2916
    %v3626 = vunpack.c.h.b16 %v2916
    %v3627 = vunpack.c.l.b16 %v2917
    %v3628 = vunpack.c.h.b16 %v2917
    %v3629 = vunpack.c.l.b16 %v2918
    %v3630 = vunpack.c.h.b16 %v2918
    %v3631 = vunpack.c.l.b16 %v2919
    %v3632 = vunpack.c.h.b16 %v2919
    %v3633 = vunpack.c.l.b16 %v2920
    %v3634 = vunpack.c.h.b16 %v2920
    %v3635 = vunpack.c.l.b16 %v2921
    %v3636 = vunpack.c.h.b16 %v2921
    %v3637 = vunpack.c.l.b16 %v2922
    %v3638 = vunpack.c.h.b16 %v2922
    %v3639 = vunpack.c.l.b16 %v2923
    %v3640 = vunpack.c.h.b16 %v2923
    %v3641 = vunpack.c.l.b16 %v2924
    %v3642 = vunpack.c.h.b16 %v2924
    %v3643 = vunpack.c.l.b16 %v2925
    %v3644 = vunpack.c.h.b16 %v2925
    %v3645 = vunpack.c.l.b16 %v2926
    %v3646 = vunpack.c.h.b16 %v2926
    %v3647 = vunpack.c.l.b16 %v2927
    %v3648 = vunpack.c.h.b16 %v2927
    %v3649 = vunpack.c.l.b16 %v2928
    %v3650 = vunpack.c.h.b16 %v2928
    %v3651 = vunpack.c.l.b16 %v2929
    %v3652 = vunpack.c.h.b16 %v2929
    %v3653 = vunpack.c.l.b16 %v2930
    %v3654 = vunpack.c.h.b16 %v2930
    %v3655 = vunpack.c.l.b16 %v2931
    %v3656 = vunpack.c.h.b16 %v2931
    %v3657 = vunpack.c.l.b16 %v2932
    %v3658 = vunpack.c.h.b16 %v2932
    %v3659 = vunpack.c.l.b16 %v2933
    %v3660 = vunpack.c.h.b16 %v2933
    %v3661 = vunpack.c.l.b16 %v2934
    %v3662 = vunpack.c.h.b16 %v2934
    %v3663 = vunpack.c.l.b16 %v2935
    %v3664 = vunpack.c.h.b16 %v2935
    %v3665 = vunpack.c.l.b16 %v2936
    %v3666 = vunpack.c.h.b16 %v2936
    %v3667 = vunpack.c.l.b16 %v2937
    %v3668 = vunpack.c.h.b16 %v2937
    %v3669 = vunpack.c.l.b16 %v2938
    %v3670 = vunpack.c.h.b16 %v2938
    %v3671 = vunpack.c.l.b16 %v2939
    %v3672 = vunpack.c.h.b16 %v2939
    %v3673 = vunpack.c.l.b16 %v2940
    %v3674 = vunpack.c.h.b16 %v2940
    %v3675 = vunpack.c.l.b16 %v2941
    %v3676 = vunpack.c.h.b16 %v2941
    %v3677 = vunpack.c.l.b16 %v2942
    %v3678 = vunpack.c.h.b16 %v2942
    %v3679 = vunpack.c.l.b16 %v2943
    %v3680 = vunpack.c.h.b16 %v2943
    %v3681 = vunpack.c.l.b16 %v2944
    %v3682 = vunpack.c.h.b16 %v2944
    %v3683 = vunpack.c.l.b16 %v2945
    %v3684 = vunpack.c.h.b16 %v2945
    %v3685 = vunpack.c.l.b16 %v2946
    %v3686 = vunpack.c.h.b16 %v2946
    %v3687 = vunpack.c.l.b16 %v2947
    %v3688 = vunpack.c.h.b16 %v2947
    %v3689 = vunpack.c.l.b16 %v2948
    %v3690 = vunpack.c.h.b16 %v2948
    %v3691 = vunpack.c.l.b16 %v2949
    %v3692 = vunpack.c.h.b16 %v2949
    %v3693 = vunpack.c.l.b16 %v2950
    %v3694 = vunpack.c.h.b16 %v2950
    %v3695 = vunpack.c.l.b16 %v2951
    %v3696 = vunpack.c.h.b16 %v2951
    %v3697 = vunpack.c.l.b16 %v2952
    %v3698 = vunpack.c.h.b16 %v2952
    %v3699 = vunpack.c.l.b16 %v2953
    %v3700 = vunpack.c.h.b16 %v2953
    %v3701 = vunpack.c.l.b16 %v2954
    %v3702 = vunpack.c.h.b16 %v2954
    %v3703 = vunpack.c.l.b16 %v2955
    %v3704 = vunpack.c.h.b16 %v2955
    %v3705 = vunpack.c.l.b16 %v2956
    %v3706 = vunpack.c.h.b16 %v2956
    %v3707 = vunpack.c.l.b16 %v2957
    %v3708 = vunpack.c.h.b16 %v2957
    %v3709 = vunpack.c.l.b16 %v2958
    %v3710 = vunpack.c.h.b16 %v2958
    %v3711 = vunpack.c.l.b16 %v2959
    %v3712 = vunpack.c.h.b16 %v2959
    %v3713 = vunpack.c.l.b16 %v2960
    %v3714 = vunpack.c.h.b16 %v2960
    %v3715 = vunpack.c.l.b16 %v2961
    %v3716 = vunpack.c.h.b16 %v2961
    %v3717 = vunpack.c.l.b16 %v2962
    %v3718 = vunpack.c.h.b16 %v2962
    %v3719 = vunpack.c.l.b16 %v2963
    %v3720 = vunpack.c.h.b16 %v2963
    %v3721 = vunpack.c.l.b16 %v2964
    %v3722 = vunpack.c.h.b16 %v2964
    %v3723 = vunpack.c.l.b16 %v2965
    %v3724 = vunpack.c.h.b16 %v2965
    %v3725 = vunpack.c.l.b16 %v2966
    %v3726 = vunpack.c.h.b16 %v2966
    %v3727 = vunpack.c.l.b16 %v2967
    %v3728 = vunpack.c.h.b16 %v2967
    %v3729 = vunpack.c.l.b16 %v2968
    %v3730 = vunpack.c.h.b16 %v2968
    %v3731 = vunpack.c.l.b16 %v2969
    %v3732 = vunpack.c.h.b16 %v2969
    %v3733 = vunpack.c.l.b16 %v2970
    %v3734 = vunpack.c.h.b16 %v2970
    %v3735 = vunpack.c.l.b16 %v2971
    %v3736 = vunpack.c.h.b16 %v2971
    %v3737 = vunpack.c.l.b16 %v2972
    %v3738 = vunpack.c.h.b16 %v2972
    %v3739 = vunpack.c.l.b16 %v2973
    %v3740 = vunpack.c.h.b16 %v2973
    %v3741 = vunpack.c.l.b16 %v2974
    %v3742 = vunpack.c.h.b16 %v2974
    %v3743 = vunpack.c.l.b16 %v2975
    %v3744 = vunpack.c.h.b16 %v2975
    %v3745 = vunpack.c.l.b16 %v2976
    %v3746 = vunpack.c.h.b16 %v2976
    %v3747 = vunpack.c.l.b16 %v2977
    %v3748 = vunpack.c.h.b16 %v2977
    %v3749 = vunpack.c.l.b16 %v2978
    %v3750 = vunpack.c.h.b16 %v2978
    %v3751 = vunpack.c.l.b16 %v2979
    %v3752 = vunpack.c.h.b16 %v2979
    %v3753 = vunpack.c.l.b16 %v2980
    %v3754 = vunpack.c.h.b16 %v2980
    %v3755 = vunpack.c.l.b16 %v2981
    %v3756 = vunpack.c.h.b16 %v2981
    %v3757 = vunpack.c.l.b16 %v2982
    %v3758 = vunpack.c.h.b16 %v2982
    %v3759 = vunpack.c.l.b16 %v2983
    %v3760 = vunpack.c.h.b16 %v2983
    %v3761 = vunpack.c.l.b16 %v2984
    %v3762 = vunpack.c.h.b16 %v2984
    %v3763 = vunpack.c.l.b16 %v2985
    %v3764 = vunpack.c.h.b16 %v2985
    %v3765 = vunpack.c.l.b16 %v2986
    %v3766 = vunpack.c.h.b16 %v2986
    %v3767 = vunpack.c.l.b16 %v2987
    %v3768 = vunpack.c.h.b16 %v2987
    %v3769 = vunpack.c.l.b16 %v2988
    %v3770 = vunpack.c.h.b16 %v2988
    %v3771 = vunpack.c.l.b16 %v2989
    %v3772 = vunpack.c.h.b16 %v2989
    %v3773 = vunpack.c.l.b16 %v2990
    %v3774 = vunpack.c.h.b16 %v2990
    %v3775 = vunpack.c.l.b16 %v2991
    %v3776 = vunpack.c.h.b16 %v2991
    %v3777 = vunpack.c.l.b16 %v2992
    %v3778 = vunpack.c.h.b16 %v2992
    %v3779 = vunpack.c.l.b16 %v2993
    %v3780 = vunpack.c.h.b16 %v2993
    %v3781 = vunpack.c.l.b16 %v2994
    %v3782 = vunpack.c.h.b16 %v2994
    %v3783 = vunpack.c.l.b16 %v2995
    %v3784 = vunpack.c.h.b16 %v2995
    %v3785 = vunpack.c.l.b16 %v2996
    %v3786 = vunpack.c.h.b16 %v2996
    %v3787 = vunpack.c.l.b16 %v2997
    %v3788 = vunpack.c.h.b16 %v2997
    %v3789 = vunpack.c.l.b16 %v2998
    %v3790 = vunpack.c.h.b16 %v2998
    %v3791 = vunpack.c.l.b16 %v2999
    %v3792 = vunpack.c.h.b16 %v2999
    %v3793 = vunpack.c.l.b16 %v3000
    %v3794 = vunpack.c.h.b16 %v3000
    %v3795 = vunpack.c.l.b16 %v3001
    %v3796 = vunpack.c.h.b16 %v3001
    %v3797 = vunpack.c.l.b16 %v3002
    %v3798 = vunpack.c.h.b16 %v3002
    %v3799 = vunpack.c.l.b16 %v3003
    %v3800 = vunpack.c.h.b16 %v3003
    %v3801 = vunpack.c.l.b16 %v3004
    %v3802 = vunpack.c.h.b16 %v3004
    %v3803 = vunpack.c.l.b16 %v3005
    %v3804 = vunpack.c.h.b16 %v3005
    %v3805 = vunpack.c.l.b16 %v3006
    %v3806 = vunpack.c.h.b16 %v3006
    %v3807 = vunpack.c.l.b16 %v3007
    %v3808 = vunpack.c.h.b16 %v3007
    %v3809 = vunpack.c.l.b16 %v3008
    %v3810 = vunpack.c.h.b16 %v3008
    %v3811 = vunpack.c.l.b16 %v3009
    %v3812 = vunpack.c.h.b16 %v3009
    %v3813 = vunpack.c.l.b16 %v3010
    %v3814 = vunpack.c.h.b16 %v3010
    %v3815 = vunpack.c.l.b16 %v3011
    %v3816 = vunpack.c.h.b16 %v3011
    %v3817 = vunpack.c.l.b16 %v3012
    %v3818 = vunpack.c.h.b16 %v3012
    %v3819 = vunpack.c.l.b16 %v3013
    %v3820 = vunpack.c.h.b16 %v3013
    %v3821 = vunpack.c.l.b16 %v3014
    %v3822 = vunpack.c.h.b16 %v3014
    %v3823 = vunpack.c.l.b16 %v3015
    %v3824 = vunpack.c.h.b16 %v3015
    %v3825 = vunpack.c.l.b16 %v3016
    %v3826 = vunpack.c.h.b16 %v3016
    %v3827 = vunpack.c.l.b16 %v3017
    %v3828 = vunpack.c.h.b16 %v3017
    %v3829 = vunpack.c.l.b16 %v3018
    %v3830 = vunpack.c.h.b16 %v3018
    %v3831 = vunpack.c.l.b16 %v3019
    %v3832 = vunpack.c.h.b16 %v3019
    %v3833 = vunpack.c.l.b16 %v3020
    %v3834 = vunpack.c.h.b16 %v3020
    %v3835 = vunpack.c.l.b16 %v3021
    %v3836 = vunpack.c.h.b16 %v3021
    %v3837 = vunpack.c.l.b16 %v3022
    %v3838 = vunpack.c.h.b16 %v3022
    %v3839 = vunpack.c.l.b16 %v3023
    %v3840 = vunpack.c.h.b16 %v3023
    %v3841 = vunpack.c.l.b16 %v3024
    %v3842 = vunpack.c.h.b16 %v3024
    %v3843 = vunpack.c.l.b16 %v3025
    %v3844 = vunpack.c.h.b16 %v3025
    %v3845 = vunpack.c.l.b16 %v3026
    %v3846 = vunpack.c.h.b16 %v3026
    %v3847 = vunpack.c.l.b16 %v3027
    %v3848 = vunpack.c.h.b16 %v3027
    %v3849 = vunpack.c.l.b16 %v3028
    %v3850 = vunpack.c.h.b16 %v3028
    %v3851 = vunpack.c.l.b16 %v3029
    %v3852 = vunpack.c.h.b16 %v3029
    %v3853 = vunpack.c.l.b16 %v3030
    %v3854 = vunpack.c.h.b16 %v3030
    %v3855 = vunpack.c.l.b16 %v3031
    %v3856 = vunpack.c.h.b16 %v3031
    %v3857 = vunpack.c.l.b16 %v3032
    %v3858 = vunpack.c.h.b16 %v3032
    %v3859 = vunpack.c.l.b16 %v3033
    %v3860 = vunpack.c.h.b16 %v3033
    %v3861 = vunpack.c.l.b16 %v3034
    %v3862 = vunpack.c.h.b16 %v3034
    %v3863 = vunpack.c.l.b16 %v3035
    %v3864 = vunpack.c.h.b16 %v3035
    %v3865 = vunpack.c.l.b16 %v3036
    %v3866 = vunpack.c.h.b16 %v3036
    %v3867 = vunpack.c.l.b16 %v3037
    %v3868 = vunpack.c.h.b16 %v3037
    %v3869 = vunpack.c.l.b16 %v3038
    %v3870 = vunpack.c.h.b16 %v3038
    %v3871 = vunpack.c.l.b16 %v3039
    %v3872 = vunpack.c.h.b16 %v3039
    %v3873 = vunpack.c.l.b16 %v3040
    %v3874 = vunpack.c.h.b16 %v3040
    %v3875 = vunpack.c.l.b16 %v3041
    %v3876 = vunpack.c.h.b16 %v3041
    %v3877 = vunpack.c.l.b16 %v3042
    %v3878 = vunpack.c.h.b16 %v3042
    %v3879 = vunpack.c.l.b16 %v3043
    %v3880 = vunpack.c.h.b16 %v3043
    %v3881 = vunpack.c.l.b16 %v3044
    %v3882 = vunpack.c.h.b16 %v3044
    %v3883 = vunpack.c.l.b16 %v3045
    %v3884 = vunpack.c.h.b16 %v3045
    %v3885 = vunpack.c.l.b16 %v3046
    %v3886 = vunpack.c.h.b16 %v3046
    %v3887 = vunpack.c.l.b16 %v3047
    %v3888 = vunpack.c.h.b16 %v3047
    %v3889 = vunpack.c.l.b16 %v3048
    %v3890 = vunpack.c.h.b16 %v3048
    %v3891 = vunpack.c.l.b16 %v3049
    %v3892 = vunpack.c.h.b16 %v3049
    %v3893 = vunpack.c.l.b16 %v3050
    %v3894 = vunpack.c.h.b16 %v3050
    %v3895 = vunpack.c.l.b16 %v3051
    %v3896 = vunpack.c.h.b16 %v3051
    %v3897 = vunpack.c.l.b16 %v3052
    %v3898 = vunpack.c.h.b16 %v3052
    %v3899 = vunpack.c.l.b16 %v3053
    %v3900 = vunpack.c.h.b16 %v3053
    %v3901 = vunpack.c.l.b16 %v3054
    %v3902 = vunpack.c.h.b16 %v3054
    %v3903 = vunpack.c.l.b16 %v3055
    %v3904 = vunpack.c.h.b16 %v3055
    %v3905 = vunpack.c.l.b16 %v3056
    %v3906 = vunpack.c.h.b16 %v3056
    %v3907 = vunpack.c.l.b16 %v3057
    %v3908 = vunpack.c.h.b16 %v3057
    %v3909 = vunpack.c.l.b16 %v3058
    %v3910 = vunpack.c.h.b16 %v3058
    %v3911 = vunpack.c.l.b16 %v3059
    %v3912 = vunpack.c.h.b16 %v3059
    %v3913 = vunpack.c.l.b16 %v3060
    %v3914 = vunpack.c.h.b16 %v3060
    %v3915 = vunpack.c.l.b16 %v3061
    %v3916 = vunpack.c.h.b16 %v3061
    %v3917 = vunpack.c.l.b16 %v3062
    %v3918 = vunpack.c.h.b16 %v3062
    %v3919 = vunpack.c.l.b16 %v3063
    %v3920 = vunpack.c.h.b16 %v3063
    %v3921 = vunpack.c.l.b16 %v3064
    %v3922 = vunpack.c.h.b16 %v3064
    %v3923 = vunpack.c.l.b16 %v3065
    %v3924 = vunpack.c.h.b16 %v3065
    %v3925 = vunpack.c.l.b16 %v3066
    %v3926 = vunpack.c.h.b16 %v3066
    %v3927 = vunpack.c.l.b16 %v3067
    %v3928 = vunpack.c.h.b16 %v3067
    %v3929 = vunpack.c.l.b16 %v3068
    %v3930 = vunpack.c.h.b16 %v3068
    %v3931 = vunpack.c.l.b16 %v3069
    %v3932 = vunpack.c.h.b16 %v3069
    %v3933 = vunpack.c.l.b16 %v3070
    %v3934 = vunpack.c.h.b16 %v3070
    %v3935 = vunpack.c.l.b16 %v3071
    %v3936 = vunpack.c.h.b16 %v3071
    %v3937 = vunpack.c.l.b16 %v3072
    %v3938 = vunpack.c.h.b16 %v3072
    %v3939 = vunpack.c.l.b16 %v3073
    %v3940 = vunpack.c.h.b16 %v3073
    %v3941 = vunpack.c.l.b16 %v3074
    %v3942 = vunpack.c.h.b16 %v3074
    %v3943 = vunpack.c.l.b16 %v3075
    %v3944 = vunpack.c.h.b16 %v3075
    %v3945 = vunpack.c.l.b16 %v3076
    %v3946 = vunpack.c.h.b16 %v3076
    %v3947 = vunpack.c.l.b16 %v3077
    %v3948 = vunpack.c.h.b16 %v3077
    %v3949 = vunpack.c.l.b16 %v3078
    %v3950 = vunpack.c.h.b16 %v3078
    %v3951 = vunpack.c.l.b16 %v3079
    %v3952 = vunpack.c.h.b16 %v3079
    %v3953 = vunpack.c.l.b16 %v3080
    %v3954 = vunpack.c.h.b16 %v3080
    %v3955 = vunpack.c.l.b16 %v3081
    %v3956 = vunpack.c.h.b16 %v3081
    %v3957 = vunpack.c.l.b16 %v3082
    %v3958 = vunpack.c.h.b16 %v3082
    %v3959 = vunpack.c.l.b16 %v3083
    %v3960 = vunpack.c.h.b16 %v3083
    %v3961 = vunpack.c.l.b16 %v3084
    %v3962 = vunpack.c.h.b16 %v3084
    %v3963 = vunpack.c.l.b16 %v3085
    %v3964 = vunpack.c.h.b16 %v3085
    %v3965 = vpack.c.b16 %v3395, %v3389
    %v3966 = vpack.c.b16 %v3396, %v3390
    %v3967 = vpack.c.b16 %v3397, %v3391
    %v3968 = vpack.c.b16 %v3398, %v3392
    %v3969 = vpack.c.b16 %v3399, %v3393
    %v3970 = vpack.c.b16 %v3400, %v3394
    %v3971 = vpack.c.b16 %v3407, %v3401
    %v3972 = vpack.c.b16 %v3408, %v3402
    %v3973 = vpack.c.b16 %v3409, %v3403
    %v3974 = vpack.c.b16 %v3410, %v3404
    %v3975 = vpack.c.b16 %v3411, %v3405
    %v3976 = vpack.c.b16 %v3412, %v3406
    %v3977 = vpack.c.b16 %v3419, %v3413
    %v3978 = vpack.c.b16 %v3420, %v3414
    %v3979 = vpack.c.b16 %v3421, %v3415
    %v3980 = vpack.c.b16 %v3422, %v3416
    %v3981 = vpack.c.b16 %v3423, %v3417
    %v3982 = vpack.c.b16 %v3424, %v3418
    %v3983 = vpack.c.b16 %v3431, %v3425
    %v3984 = vpack.c.b16 %v3432, %v3426
    %v3985 = vpack.c.b16 %v3433, %v3427
    %v3986 = vpack.c.b16 %v3434, %v3428
    %v3987 = vpack.c.b16 %v3435, %v3429
    %v3988 = vpack.c.b16 %v3436, %v3430
    %v3989 = vpack.c.b16 %v3443, %v3437
    %v3990 = vpack.c.b16 %v3444, %v3438
    %v3991 = vpack.c.b16 %v3445, %v3439
    %v3992 = vpack.c.b16 %v3446, %v3440
    %v3993 = vpack.c.b16 %v3447, %v3441
    %v3994 = vpack.c.b16 %v3448, %v3442
    %v3995 = vpack.c.b16 %v3455, %v3449
    %v3996 = vpack.c.b16 %v3456, %v3450
    %v3997 = vpack.c.b16 %v3457, %v3451
    %v3998 = vpack.c.b16 %v3458, %v3452
    %v3999 = vpack.c.b16 %v3459, %v3453
    %v4000 = vpack.c.b16 %v3460, %v3454
    %v4001 = vpack.c.b16 %v3467, %v3461
    %v4002 = vpack.c.b16 %v3468, %v3462
    %v4003 = vpack.c.b16 %v3469, %v3463
    %v4004 = vpack.c.b16 %v3470, %v3464
    %v4005 = vpack.c.b16 %v3471, %v3465
    %v4006 = vpack.c.b16 %v3472, %v3466
    %v4007 = vpack.c.b16 %v3479, %v3473
    %v4008 = vpack.c.b16 %v3480, %v3474
    %v4009 = vpack.c.b16 %v3481, %v3475
    %v4010 = vpack.c.b16 %v3482, %v3476
    %v4011 = vpack.c.b16 %v3483, %v3477
    %v4012 = vpack.c.b16 %v3484, %v3478
    %v4013 = vpack.c.b16 %v3491, %v3485
    %v4014 = vpack.c.b16 %v3492, %v3486
    %v4015 = vpack.c.b16 %v3493, %v3487
    %v4016 = vpack.c.b16 %v3494, %v3488
    %v4017 = vpack.c.b16 %v3495, %v3489
    %v4018 = vpack.c.b16 %v3496, %v3490
    %v4019 = vpack.c.b16 %v3503, %v3497
    %v4020 = vpack.c.b16 %v3504, %v3498
    %v4021 = vpack.c.b16 %v3505, %v3499
    %v4022 = vpack.c.b16 %v3506, %v3500
    %v4023 = vpack.c.b16 %v3507, %v3501
    %v4024 = vpack.c.b16 %v3508, %v3502
    %v4025 = vpack.c.b16 %v3515, %v3509
    %v4026 = vpack.c.b16 %v3516, %v3510
    %v4027 = vpack.c.b16 %v3517, %v3511
    %v4028 = vpack.c.b16 %v3518, %v3512
    %v4029 = vpack.c.b16 %v3519, %v3513
    %v4030 = vpack.c.b16 %v3520, %v3514
    %v4031 = vpack.c.b16 %v3527, %v3521
    %v4032 = vpack.c.b16 %v3528, %v3522
    %v4033 = vpack.c.b16 %v3529, %v3523
    %v4034 = vpack.c.b16 %v3530, %v3524
    %v4035 = vpack.c.b16 %v3531, %v3525
    %v4036 = vpack.c.b16 %v3532, %v3526
    %v4037 = vpack.c.b16 %v3539, %v3533
    %v4038 = vpack.c.b16 %v3540, %v3534
    %v4039 = vpack.c.b16 %v3541, %v3535
    %v4040 = vpack.c.b16 %v3542, %v3536
    %v4041 = vpack.c.b16 %v3543, %v3537
    %v4042 = vpack.c.b16 %v3544, %v3538
    %v4043 = vpack.c.b16 %v3551, %v3545
    %v4044 = vpack.c.b16 %v3552, %v3546
    %v4045 = vpack.c.b16 %v3553, %v3547
    %v4046 = vpack.c.b16 %v3554, %v3548
    %v4047 = vpack.c.b16 %v3555, %v3549
    %v4048 = vpack.c.b16 %v3556, %v3550
    %v4049 = vpack.c.b16 %v3563, %v3557
    %v4050 = vpack.c.b16 %v3564, %v3558
    %v4051 = vpack.c.b16 %v3565, %v3559
    %v4052 = vpack.c.b16 %v3566, %v3560
    %v4053 = vpack.c.b16 %v3567, %v3561
    %v4054 = vpack.c.b16 %v3568, %v3562
    %v4055 = vpack.c.b16 %v3575, %v3569
    %v4056 = vpack.c.b16 %v3576, %v3570
    %v4057 = vpack.c.b16 %v3577, %v3571
    %v4058 = vpack.c.b16 %v3578, %v3572
    %v4059 = vpack.c.b16 %v3579, %v3573
    %v4060 = vpack.c.b16 %v3580, %v3574
    %v4061 = vpack.c.b16 %v3587, %v3581
    %v4062 = vpack.c.b16 %v3588, %v3582
    %v4063 = vpack.c.b16 %v3589, %v3583
    %v4064 = vpack.c.b16 %v3590, %v3584
    %v4065 = vpack.c.b16 %v3591, %v3585
    %v4066 = vpack.c.b16 %v3592, %v3586
    %v4067 = vpack.c.b16 %v3599, %v3593
    %v4068 = vpack.c.b16 %v3600, %v3594
    %v4069 = vpack.c.b16 %v3601, %v3595
    %v4070 = vpack.c.b16 %v3602, %v3596
    %v4071 = vpack.c.b16 %v3603, %v3597
    %v4072 = vpack.c.b16 %v3604, %v3598
    %v4073 = vpack.c.b16 %v3611, %v3605
    %v4074 = vpack.c.b16 %v3612, %v3606
    %v4075 = vpack.c.b16 %v3613, %v3607
    %v4076 = vpack.c.b16 %v3614, %v3608
    %v4077 = vpack.c.b16 %v3615, %v3609
    %v4078 = vpack.c.b16 %v3616, %v3610
    %v4079 = vpack.c.b16 %v3623, %v3617
    %v4080 = vpack.c.b16 %v3624, %v3618
    %v4081 = vpack.c.b16 %v3625, %v3619
    %v4082 = vpack.c.b16 %v3626, %v3620
    %v4083 = vpack.c.b16 %v3627, %v3621
    %v4084 = vpack.c.b16 %v3628, %v3622
    %v4085 = vpack.c.b16 %v3635, %v3629
    %v4086 = vpack.c.b16 %v3636, %v3630
    %v4087 = vpack.c.b16 %v3637, %v3631
    %v4088 = vpack.c.b16 %v3638, %v3632
    %v4089 = vpack.c.b16 %v3639, %v3633
    %v4090 = vpack.c.b16 %v3640, %v3634
    %v4091 = vpack.c.b16 %v3647, %v3641
    %v4092 = vpack.c.b16 %v3648, %v3642
    %v4093 = vpack.c.b16 %v3649, %v3643
    %v4094 = vpack.c.b16 %v3650, %v3644
    %v4095 = vpack.c.b16 %v3651, %v3645
    %v4096 = vpack.c.b16 %v3652, %v3646
    %v4097 = vpack.c.b16 %v3659, %v3653
    %v4098 = vpack.c.b16 %v3660, %v3654
    %v4099 = vpack.c.b16 %v3661, %v3655
    %v4100 = vpack.c.b16 %v3662, %v3656
    %v4101 = vpack.c.b16 %v3663, %v3657
    %v4102 = vpack.c.b16 %v3664, %v3658
    %v4103 = vpack.c.b16 %v3671, %v3665
    %v4104 = vpack.c.b16 %v3672, %v3666
    %v4105 = vpack.c.b16 %v3673, %v3667
    %v4106 = vpack.c.b16 %v3674, %v3668
    %v4107 = vpack.c.b16 %v3675, %v3669
    %v4108 = vpack.c.b16 %v3676, %v3670
    %v4109 = vpack.c.b16 %v3683, %v3677
    %v4110 = vpack.c.b16 %v3684, %v3678
    %v4111 = vpack.c.b16 %v3685, %v3679
    %v4112 = vpack.c.b16 %v3686, %v3680
    %v4113 = vpack.c.b16 %v3687, %v3681
    %v4114 = vpack.c.b16 %v3688, %v3682
    %v4115 = vpack.c.b16 %v3695, %v3689
    %v4116 = vpack.c.b16 %v3696, %v3690
    %v4117 = vpack.c.b16 %v3697, %v3691
    %v4118 = vpack.c.b16 %v3698, %v3692
    %v4119 = vpack.c.b16 %v3699, %v3693
    %v4120 = vpack.c.b16 %v3700, %v3694
    %v4121 = vpack.c.b16 %v3707, %v3701
    %v4122 = vpack.c.b16 %v3708, %v3702
    %v4123 = vpack.c.b16 %v3709, %v3703
    %v4124 = vpack.c.b16 %v3710, %v3704
    %v4125 = vpack.c.b16 %v3711, %v3705
    %v4126 = vpack.c.b16 %v3712, %v3706
    %v4127 = vpack.c.b16 %v3719, %v3713
    %v4128 = vpack.c.b16 %v3720, %v3714
    %v4129 = vpack.c.b16 %v3721, %v3715
    %v4130 = vpack.c.b16 %v3722, %v3716
    %v4131 = vpack.c.b16 %v3723, %v3717
    %v4132 = vpack.c.b16 %v3724, %v3718
    %v4133 = vpack.c.b16 %v3731, %v3725
    %v4134 = vpack.c.b16 %v3732, %v3726
    %v4135 = vpack.c.b16 %v3733, %v3727
    %v4136 = vpack.c.b16 %v3734, %v3728
    %v4137 = vpack.c.b16 %v3735, %v3729
    %v4138 = vpack.c.b16 %v3736, %v3730
    %v4139 = vpack.c.b16 %v3743, %v3737
    %v4140 = vpack.c.b16 %v3744, %v3738
    %v4141 = vpack.c.b16 %v3745, %v3739
    %v4142 = vpack.c.b16 %v3746, %v3740
    %v4143 = vpack.c.b16 %v3747, %v3741
    %v4144 = vpack.c.b16 %v3748, %v3742
    %v4145 = vpack.c.b16 %v3755, %v3749
    %v4146 = vpack.c.b16 %v3756, %v3750
    %v4147 = vpack.c.b16 %v3757, %v3751
    %v4148 = vpack.c.b16 %v3758, %v3752
    %v4149 = vpack.c.b16 %v3759, %v3753
    %v4150 = vpack.c.b16 %v3760, %v3754
    %v4151 = vpack.c.b16 %v3767, %v3761
    %v4152 = vpack.c.b16 %v3768, %v3762
    %v4153 = vpack.c.b16 %v3769, %v3763
    %v4154 = vpack.c.b16 %v3770, %v3764
    %v4155 = vpack.c.b16 %v3771, %v3765
    %v4156 = vpack.c.b16 %v3772, %v3766
    %v4157 = vpack.c.b16 %v3779, %v3773
    %v4158 = vpack.c.b16 %v3780, %v3774
    %v4159 = vpack.c.b16 %v3781, %v3775
    %v4160 = vpack.c.b16 %v3782, %v3776
    %v4161 = vpack.c.b16 %v3783, %v3777
    %v4162 = vpack.c.b16 %v3784, %v3778
    %v4163 = vpack.c.b16 %v3791, %v3785
    %v4164 = vpack.c.b16 %v3792, %v3786
    %v4165 = vpack.c.b16 %v3793, %v3787
    %v4166 = vpack.c.b16 %v3794, %v3788
    %v4167 = vpack.c.b16 %v3795, %v3789
    %v4168 = vpack.c.b16 %v3796, %v3790
    %v4169 = vpack.c.b16 %v3803, %v3797
    %v4170 = vpack.c.b16 %v3804, %v3798
    %v4171 = vpack.c.b16 %v3805, %v3799
    %v4172 = vpack.c.b16 %v3806, %v3800
    %v4173 = vpack.c.b16 %v3807, %v3801
    %v4174 = vpack.c.b16 %v3808, %v3802
    %v4175 = vpack.c.b16 %v3815, %v3809
    %v4176 = vpack.c.b16 %v3816, %v3810
    %v4177 = vpack.c.b16 %v3817, %v3811
    %v4178 = vpack.c.b16 %v3818, %v3812
    %v4179 = vpack.c.b16 %v3819, %v3813
    %v4180 = vpack.c.b16 %v3820, %v3814
    %v4181 = vpack.c.b16 %v3827, %v3821
    %v4182 = vpack.c.b16 %v3828, %v3822
    %v4183 = vpack.c.b16 %v3829, %v3823
    %v4184 = vpack.c.b16 %v3830, %v3824
    %v4185 = vpack.c.b16 %v3831, %v3825
    %v4186 = vpack.c.b16 %v3832, %v3826
    %v4187 = vpack.c.b16 %v3839, %v3833
    %v4188 = vpack.c.b16 %v3840, %v3834
    %v4189 = vpack.c.b16 %v3841, %v3835
    %v4190 = vpack.c.b16 %v3842, %v3836
    %v4191 = vpack.c.b16 %v3843, %v3837
    %v4192 = vpack.c.b16 %v3844, %v3838
    %v4193 = vpack.c.b16 %v3851, %v3845
    %v4194 = vpack.c.b16 %v3852, %v3846
    %v4195 = vpack.c.b16 %v3853, %v3847
    %v4196 = vpack.c.b16 %v3854, %v3848
    %v4197 = vpack.c.b16 %v3855, %v3849
    %v4198 = vpack.c.b16 %v3856, %v3850
    %v4199 = vpack.c.b16 %v3863, %v3857
    %v4200 = vpack.c.b16 %v3864, %v3858
    %v4201 = vpack.c.b16 %v3865, %v3859
    %v4202 = vpack.c.b16 %v3866, %v3860
    %v4203 = vpack.c.b16 %v3867, %v3861
    %v4204 = vpack.c.b16 %v3868, %v3862
    %v4205 = vpack.c.b16 %v3875, %v3869
    %v4206 = vpack.c.b16 %v3876, %v3870
    %v4207 = vpack.c.b16 %v3877, %v3871
    %v4208 = vpack.c.b16 %v3878, %v3872
    %v4209 = vpack.c.b16 %v3879, %v3873
    %v4210 = vpack.c.b16 %v3880, %v3874
    %v4211 = vpack.c.b16 %v3887, %v3881
    %v4212 = vpack.c.b16 %v3888, %v3882
    %v4213 = vpack.c.b16 %v3889, %v3883
    %v4214 = vpack.c.b16 %v3890, %v3884
    %v4215 = vpack.c.b16 %v3891, %v3885
    %v4216 = vpack.c.b16 %v3892, %v3886
    %v4217 = vpack.c.b16 %v3899, %v3893
    %v4218 = vpack.c.b16 %v3900, %v3894
    %v4219 = vpack.c.b16 %v3901, %v3895
    %v4220 = vpack.c.b16 %v3902, %v3896
    %v4221 = vpack.c.b16 %v3903, %v3897
    %v4222 = vpack.c.b16 %v3904, %v3898
    %v4223 = vpack.c.b16 %v3911, %v3905
    %v4224 = vpack.c.b16 %v3912, %v3906
    %v4225 = vpack.c.b16 %v3913, %v3907
    %v4226 = vpack.c.b16 %v3914, %v3908
    %v4227 = vpack.c.b16 %v3915, %v3909
    %v4228 = vpack.c.b16 %v3916, %v3910
    %v4229 = vpack.c.b16 %v3923, %v3917
    %v4230 = vpack.c.b16 %v3924, %v3918
    %v4231 = vpack.c.b16 %v3925, %v3919
    %v4232 = vpack.c.b16 %v3926, %v3920
    %v4233 = vpack.c.b16 %v3927, %v3921
    %v4234 = vpack.c.b16 %v3928, %v3922
    %v4235 = vpack.c.b16 %v3935, %v3929
    %v4236 = vpack.c.b16 %v3936, %v3930
    %v4237 = vpack.c.b16 %v3937, %v3931
    %v4238 = vpack.c.b16 %v3938, %v3932
    %v4239 = vpack.c.b16 %v3939, %v3933
    %v4240 = vpack.c.b16 %v3940, %v3934
    %v4241 = vpack.c.b16 %v3947, %v3941
    %v4242 = vpack.c.b16 %v3948, %v3942
    %v4243 = vpack.c.b16 %v3949, %v3943
    %v4244 = vpack.c.b16 %v3950, %v3944
    %v4245 = vpack.c.b16 %v3951, %v3945
    %v4246 = vpack.c.b16 %v3952, %v3946
    %v4247 = vpack.c.b16 %v3959, %v3953
    %v4248 = vpack.c.b16 %v3960, %v3954
    %v4249 = vpack.c.b16 %v3961, %v3955
    %v4250 = vpack.c.b16 %v3962, %v3956
    %v4251 = vpack.c.b16 %v3963, %v3957
    %v4252 = vpack.c.b16 %v3964, %v3958
    %4541 = vmatpush.bf16.msra.mxu0 %v4007
    %4542 = vmatpush.bf16.msra.mxu0 %v4001
    %4543 = vmatpush.bf16.msra.mxu0 %v3995
    %4544 = vmatpush.bf16.msra.mxu0 %v3989
    %4545 = vmatpush.bf16.msra.mxu0 %v3983
    %4546 = vmatpush.bf16.msra.mxu0 %v3977
    %4547 = vmatpush.bf16.msra.mxu0 %v3971
    %4548 = vmatpush.bf16.msra.mxu0 %v3965
    %4549 = vmatmul.bf16.gmra.mxu0 %v3089
    %v4550 = vpop.f32.mrf.mxu0
    %v4551 = vadd.f32 %v2788, %v4550
    %v4552 = vpop.f32.mrf.mxu0
    %4553 = vdwg.mxu0
    %4554 = vmatpush.bf16.msra.mxu0 %v4055
    %4555 = vmatpush.bf16.msra.mxu0 %v4049
    %4556 = vmatpush.bf16.msra.mxu0 %v4043
    %4557 = vmatpush.bf16.msra.mxu0 %v4037
    %4558 = vmatpush.bf16.msra.mxu0 %v4031
    %4559 = vmatpush.bf16.msra.mxu0 %v4025
    %4560 = vmatpush.bf16.msra.mxu0 %v4019
    %4561 = vmatpush.bf16.msra.mxu0 %v4013
    %4562 = vmatmul.bf16.gmra.mxu0 %v3090
    %v4563 = vpop.f32.mrf.mxu0
    %v4564 = vadd.f32 %v4551, %v4563
    %v4565 = vpop.f32.mrf.mxu0
    %4566 = vdwg.mxu0
    %4567 = vmatpush.bf16.msra.mxu0 %v4103
    %4568 = vmatpush.bf16.msra.mxu0 %v4097
    %4569 = vmatpush.bf16.msra.mxu0 %v4091
    %4570 = vmatpush.bf16.msra.mxu0 %v4085
    %4571 = vmatpush.bf16.msra.mxu0 %v4079
    %4572 = vmatpush.bf16.msra.mxu0 %v4073
    %4573 = vmatpush.bf16.msra.mxu0 %v4067
    %4574 = vmatpush.bf16.msra.mxu0 %v4061
    %4575 = vmatmul.bf16.gmra.mxu0 %v3091
    %v4576 = vpop.f32.mrf.mxu0
    %v4577 = vadd.f32 %v4564, %v4576
    %v4578 = vpop.f32.mrf.mxu0
    %4579 = vdwg.mxu0
    %4580 = vmatpush.bf16.msra.mxu0 %v4151
    %4581 = vmatpush.bf16.msra.mxu0 %v4145
    %4582 = vmatpush.bf16.msra.mxu0 %v4139
    %4583 = vmatpush.bf16.msra.mxu0 %v4133
    %4584 = vmatpush.bf16.msra.mxu0 %v4127
    %4585 = vmatpush.bf16.msra.mxu0 %v4121
    %4586 = vmatpush.bf16.msra.mxu0 %v4115
    %4587 = vmatpush.bf16.msra.mxu0 %v4109
    %4588 = vmatmul.bf16.gmra.mxu0 %v3092
    %v4589 = vpop.f32.mrf.mxu0
    %v4590 = vadd.f32 %v4577, %v4589
    %v4591 = vpop.f32.mrf.mxu0
    %4592 = vdwg.mxu0
    %4593 = vmatpush.bf16.msra.mxu0 %v4199
    %4594 = vmatpush.bf16.msra.mxu0 %v4193
    %4595 = vmatpush.bf16.msra.mxu0 %v4187
    %4596 = vmatpush.bf16.msra.mxu0 %v4181
    %4597 = vmatpush.bf16.msra.mxu0 %v4175
    %4598 = vmatpush.bf16.msra.mxu0 %v4169
    %4599 = vmatpush.bf16.msra.mxu0 %v4163
    %4600 = vmatpush.bf16.msra.mxu0 %v4157
    %4601 = vmatmul.bf16.gmra.mxu0 %v3093
    %v4602 = vpop.f32.mrf.mxu0
    %v4603 = vadd.f32 %v4590, %v4602
    %v4604 = vpop.f32.mrf.mxu0
    %4605 = vdwg.mxu0
    %4606 = vmatpush.bf16.msra.mxu0 %v4247
    %4607 = vmatpush.bf16.msra.mxu0 %v4241
    %4608 = vmatpush.bf16.msra.mxu0 %v4235
    %4609 = vmatpush.bf16.msra.mxu0 %v4229
    %4610 = vmatpush.bf16.msra.mxu0 %v4223
    %4611 = vmatpush.bf16.msra.mxu0 %v4217
    %4612 = vmatpush.bf16.msra.mxu0 %v4211
    %4613 = vmatpush.bf16.msra.mxu0 %v4205
    %4614 = vmatmul.bf16.gmra.mxu0 %v3094
    %v4615 = vpop.f32.mrf.mxu0
    %v4616 = vadd.f32 %v4603, %v4615
    %v4617 = vpop.f32.mrf.mxu0
    %4618 = vdwg.mxu0
    %4619 = vmatpush.bf16.msra.mxu0 %v4008
    %4620 = vmatpush.bf16.msra.mxu0 %v4002
    %4621 = vmatpush.bf16.msra.mxu0 %v3996
    %4622 = vmatpush.bf16.msra.mxu0 %v3990
    %4623 = vmatpush.bf16.msra.mxu0 %v3984
    %4624 = vmatpush.bf16.msra.mxu0 %v3978
    %4625 = vmatpush.bf16.msra.mxu0 %v3972
    %4626 = vmatpush.bf16.msra.mxu0 %v3966
    %4627 = vmatmul.bf16.gmra.mxu0 %v3089
    %v4628 = vpop.f32.mrf.mxu0
    %v4629 = vadd.f32 %v2789, %v4628
    %v4630 = vpop.f32.mrf.mxu0
    %4631 = vdwg.mxu0
    %4632 = vmatpush.bf16.msra.mxu0 %v4056
    %4633 = vmatpush.bf16.msra.mxu0 %v4050
    %4634 = vmatpush.bf16.msra.mxu0 %v4044
    %4635 = vmatpush.bf16.msra.mxu0 %v4038
    %4636 = vmatpush.bf16.msra.mxu0 %v4032
    %4637 = vmatpush.bf16.msra.mxu0 %v4026
    %4638 = vmatpush.bf16.msra.mxu0 %v4020
    %4639 = vmatpush.bf16.msra.mxu0 %v4014
    %4640 = vmatmul.bf16.gmra.mxu0 %v3090
    %v4641 = vpop.f32.mrf.mxu0
    %v4642 = vadd.f32 %v4629, %v4641
    %v4643 = vpop.f32.mrf.mxu0
    %4644 = vdwg.mxu0
    %4645 = vmatpush.bf16.msra.mxu0 %v4104
    %4646 = vmatpush.bf16.msra.mxu0 %v4098
    %4647 = vmatpush.bf16.msra.mxu0 %v4092
    %4648 = vmatpush.bf16.msra.mxu0 %v4086
    %4649 = vmatpush.bf16.msra.mxu0 %v4080
    %4650 = vmatpush.bf16.msra.mxu0 %v4074
    %4651 = vmatpush.bf16.msra.mxu0 %v4068
    %4652 = vmatpush.bf16.msra.mxu0 %v4062
    %4653 = vmatmul.bf16.gmra.mxu0 %v3091
    %v4654 = vpop.f32.mrf.mxu0
    %v4655 = vadd.f32 %v4642, %v4654
    %v4656 = vpop.f32.mrf.mxu0
    %4657 = vdwg.mxu0
    %4658 = vmatpush.bf16.msra.mxu0 %v4152
    %4659 = vmatpush.bf16.msra.mxu0 %v4146
    %4660 = vmatpush.bf16.msra.mxu0 %v4140
    %4661 = vmatpush.bf16.msra.mxu0 %v4134
    %4662 = vmatpush.bf16.msra.mxu0 %v4128
    %4663 = vmatpush.bf16.msra.mxu0 %v4122
    %4664 = vmatpush.bf16.msra.mxu0 %v4116
    %4665 = vmatpush.bf16.msra.mxu0 %v4110
    %4666 = vmatmul.bf16.gmra.mxu0 %v3092
    %v4667 = vpop.f32.mrf.mxu0
    %v4668 = vadd.f32 %v4655, %v4667
    %v4669 = vpop.f32.mrf.mxu0
    %4670 = vdwg.mxu0
    %4671 = vmatpush.bf16.msra.mxu0 %v4200
    %4672 = vmatpush.bf16.msra.mxu0 %v4194
    %4673 = vmatpush.bf16.msra.mxu0 %v4188
    %4674 = vmatpush.bf16.msra.mxu0 %v4182
    %4675 = vmatpush.bf16.msra.mxu0 %v4176
    %4676 = vmatpush.bf16.msra.mxu0 %v4170
    %4677 = vmatpush.bf16.msra.mxu0 %v4164
    %4678 = vmatpush.bf16.msra.mxu0 %v4158
    %4679 = vmatmul.bf16.gmra.mxu0 %v3093
    %v4680 = vpop.f32.mrf.mxu0
    %v4681 = vadd.f32 %v4668, %v4680
    %v4682 = vpop.f32.mrf.mxu0
    %4683 = vdwg.mxu0
    %4684 = vmatpush.bf16.msra.mxu0 %v4248
    %4685 = vmatpush.bf16.msra.mxu0 %v4242
    %4686 = vmatpush.bf16.msra.mxu0 %v4236
    %4687 = vmatpush.bf16.msra.mxu0 %v4230
    %4688 = vmatpush.bf16.msra.mxu0 %v4224
    %4689 = vmatpush.bf16.msra.mxu0 %v4218
    %4690 = vmatpush.bf16.msra.mxu0 %v4212
    %4691 = vmatpush.bf16.msra.mxu0 %v4206
    %4692 = vmatmul.bf16.gmra.mxu0 %v3094
    %v4693 = vpop.f32.mrf.mxu0
    %v4694 = vadd.f32 %v4681, %v4693
    %v4695 = vpop.f32.mrf.mxu0
    %4696 = vdwg.mxu0
    %4697 = vmatpush.bf16.msra.mxu0 %v4009
    %4698 = vmatpush.bf16.msra.mxu0 %v4003
    %4699 = vmatpush.bf16.msra.mxu0 %v3997
    %4700 = vmatpush.bf16.msra.mxu0 %v3991
    %4701 = vmatpush.bf16.msra.mxu0 %v3985
    %4702 = vmatpush.bf16.msra.mxu0 %v3979
    %4703 = vmatpush.bf16.msra.mxu0 %v3973
    %4704 = vmatpush.bf16.msra.mxu0 %v3967
    %4705 = vmatmul.bf16.gmra.mxu0 %v3089
    %v4706 = vpop.f32.mrf.mxu0
    %v4707 = vadd.f32 %v2790, %v4706
    %v4708 = vpop.f32.mrf.mxu0
    %4709 = vdwg.mxu0
    %4710 = vmatpush.bf16.msra.mxu0 %v4057
    %4711 = vmatpush.bf16.msra.mxu0 %v4051
    %4712 = vmatpush.bf16.msra.mxu0 %v4045
    %4713 = vmatpush.bf16.msra.mxu0 %v4039
    %4714 = vmatpush.bf16.msra.mxu0 %v4033
    %4715 = vmatpush.bf16.msra.mxu0 %v4027
    %4716 = vmatpush.bf16.msra.mxu0 %v4021
    %4717 = vmatpush.bf16.msra.mxu0 %v4015
    %4718 = vmatmul.bf16.gmra.mxu0 %v3090
    %v4719 = vpop.f32.mrf.mxu0
    %v4720 = vadd.f32 %v4707, %v4719
    %v4721 = vpop.f32.mrf.mxu0
    %4722 = vdwg.mxu0
    %4723 = vmatpush.bf16.msra.mxu0 %v4105
    %4724 = vmatpush.bf16.msra.mxu0 %v4099
    %4725 = vmatpush.bf16.msra.mxu0 %v4093
    %4726 = vmatpush.bf16.msra.mxu0 %v4087
    %4727 = vmatpush.bf16.msra.mxu0 %v4081
    %4728 = vmatpush.bf16.msra.mxu0 %v4075
    %4729 = vmatpush.bf16.msra.mxu0 %v4069
    %4730 = vmatpush.bf16.msra.mxu0 %v4063
    %4731 = vmatmul.bf16.gmra.mxu0 %v3091
    %v4732 = vpop.f32.mrf.mxu0
    %v4733 = vadd.f32 %v4720, %v4732
    %v4734 = vpop.f32.mrf.mxu0
    %4735 = vdwg.mxu0
    %4736 = vmatpush.bf16.msra.mxu0 %v4153
    %4737 = vmatpush.bf16.msra.mxu0 %v4147
    %4738 = vmatpush.bf16.msra.mxu0 %v4141
    %4739 = vmatpush.bf16.msra.mxu0 %v4135
    %4740 = vmatpush.bf16.msra.mxu0 %v4129
    %4741 = vmatpush.bf16.msra.mxu0 %v4123
    %4742 = vmatpush.bf16.msra.mxu0 %v4117
    %4743 = vmatpush.bf16.msra.mxu0 %v4111
    %4744 = vmatmul.bf16.gmra.mxu0 %v3092
    %v4745 = vpop.f32.mrf.mxu0
    %v4746 = vadd.f32 %v4733, %v4745
    %v4747 = vpop.f32.mrf.mxu0
    %4748 = vdwg.mxu0
    %4749 = vmatpush.bf16.msra.mxu0 %v4201
    %4750 = vmatpush.bf16.msra.mxu0 %v4195
    %4751 = vmatpush.bf16.msra.mxu0 %v4189
    %4752 = vmatpush.bf16.msra.mxu0 %v4183
    %4753 = vmatpush.bf16.msra.mxu0 %v4177
    %4754 = vmatpush.bf16.msra.mxu0 %v4171
    %4755 = vmatpush.bf16.msra.mxu0 %v4165
    %4756 = vmatpush.bf16.msra.mxu0 %v4159
    %4757 = vmatmul.bf16.gmra.mxu0 %v3093
    %v4758 = vpop.f32.mrf.mxu0
    %v4759 = vadd.f32 %v4746, %v4758
    %v4760 = vpop.f32.mrf.mxu0
    %4761 = vdwg.mxu0
    %4762 = vmatpush.bf16.msra.mxu0 %v4249
    %4763 = vmatpush.bf16.msra.mxu0 %v4243
    %4764 = vmatpush.bf16.msra.mxu0 %v4237
    %4765 = vmatpush.bf16.msra.mxu0 %v4231
    %4766 = vmatpush.bf16.msra.mxu0 %v4225
    %4767 = vmatpush.bf16.msra.mxu0 %v4219
    %4768 = vmatpush.bf16.msra.mxu0 %v4213
    %4769 = vmatpush.bf16.msra.mxu0 %v4207
    %4770 = vmatmul.bf16.gmra.mxu0 %v3094
    %v4771 = vpop.f32.mrf.mxu0
    %v4772 = vadd.f32 %v4759, %v4771
    %v4773 = vpop.f32.mrf.mxu0
    %4774 = vdwg.mxu0
    %4775 = vmatpush.bf16.msra.mxu0 %v4010
    %4776 = vmatpush.bf16.msra.mxu0 %v4004
    %4777 = vmatpush.bf16.msra.mxu0 %v3998
    %4778 = vmatpush.bf16.msra.mxu0 %v3992
    %4779 = vmatpush.bf16.msra.mxu0 %v3986
    %4780 = vmatpush.bf16.msra.mxu0 %v3980
    %4781 = vmatpush.bf16.msra.mxu0 %v3974
    %4782 = vmatpush.bf16.msra.mxu0 %v3968
    %4783 = vmatmul.bf16.gmra.mxu0 %v3089
    %v4784 = vpop.f32.mrf.mxu0
    %v4785 = vadd.f32 %v2791, %v4784
    %v4786 = vpop.f32.mrf.mxu0
    %4787 = vdwg.mxu0
    %4788 = vmatpush.bf16.msra.mxu0 %v4058
    %4789 = vmatpush.bf16.msra.mxu0 %v4052
    %4790 = vmatpush.bf16.msra.mxu0 %v4046
    %4791 = vmatpush.bf16.msra.mxu0 %v4040
    %4792 = vmatpush.bf16.msra.mxu0 %v4034
    %4793 = vmatpush.bf16.msra.mxu0 %v4028
    %4794 = vmatpush.bf16.msra.mxu0 %v4022
    %4795 = vmatpush.bf16.msra.mxu0 %v4016
    %4796 = vmatmul.bf16.gmra.mxu0 %v3090
    %v4797 = vpop.f32.mrf.mxu0
    %v4798 = vadd.f32 %v4785, %v4797
    %v4799 = vpop.f32.mrf.mxu0
    %4800 = vdwg.mxu0
    %4801 = vmatpush.bf16.msra.mxu0 %v4106
    %4802 = vmatpush.bf16.msra.mxu0 %v4100
    %4803 = vmatpush.bf16.msra.mxu0 %v4094
    %4804 = vmatpush.bf16.msra.mxu0 %v4088
    %4805 = vmatpush.bf16.msra.mxu0 %v4082
    %4806 = vmatpush.bf16.msra.mxu0 %v4076
    %4807 = vmatpush.bf16.msra.mxu0 %v4070
    %4808 = vmatpush.bf16.msra.mxu0 %v4064
    %4809 = vmatmul.bf16.gmra.mxu0 %v3091
    %v4810 = vpop.f32.mrf.mxu0
    %v4811 = vadd.f32 %v4798, %v4810
    %v4812 = vpop.f32.mrf.mxu0
    %4813 = vdwg.mxu0
    %4814 = vmatpush.bf16.msra.mxu0 %v4154
    %4815 = vmatpush.bf16.msra.mxu0 %v4148
    %4816 = vmatpush.bf16.msra.mxu0 %v4142
    %4817 = vmatpush.bf16.msra.mxu0 %v4136
    %4818 = vmatpush.bf16.msra.mxu0 %v4130
    %4819 = vmatpush.bf16.msra.mxu0 %v4124
    %4820 = vmatpush.bf16.msra.mxu0 %v4118
    %4821 = vmatpush.bf16.msra.mxu0 %v4112
    %4822 = vmatmul.bf16.gmra.mxu0 %v3092
    %v4823 = vpop.f32.mrf.mxu0
    %v4824 = vadd.f32 %v4811, %v4823
    %v4825 = vpop.f32.mrf.mxu0
    %4826 = vdwg.mxu0
    %4827 = vmatpush.bf16.msra.mxu0 %v4202
    %4828 = vmatpush.bf16.msra.mxu0 %v4196
    %4829 = vmatpush.bf16.msra.mxu0 %v4190
    %4830 = vmatpush.bf16.msra.mxu0 %v4184
    %4831 = vmatpush.bf16.msra.mxu0 %v4178
    %4832 = vmatpush.bf16.msra.mxu0 %v4172
    %4833 = vmatpush.bf16.msra.mxu0 %v4166
    %4834 = vmatpush.bf16.msra.mxu0 %v4160
    %4835 = vmatmul.bf16.gmra.mxu0 %v3093
    %v4836 = vpop.f32.mrf.mxu0
    %v4837 = vadd.f32 %v4824, %v4836
    %v4838 = vpop.f32.mrf.mxu0
    %4839 = vdwg.mxu0
    %4840 = vmatpush.bf16.msra.mxu0 %v4250
    %4841 = vmatpush.bf16.msra.mxu0 %v4244
    %4842 = vmatpush.bf16.msra.mxu0 %v4238
    %4843 = vmatpush.bf16.msra.mxu0 %v4232
    %4844 = vmatpush.bf16.msra.mxu0 %v4226
    %4845 = vmatpush.bf16.msra.mxu0 %v4220
    %4846 = vmatpush.bf16.msra.mxu0 %v4214
    %4847 = vmatpush.bf16.msra.mxu0 %v4208
    %4848 = vmatmul.bf16.gmra.mxu0 %v3094
    %v4849 = vpop.f32.mrf.mxu0
    %v4850 = vadd.f32 %v4837, %v4849
    %v4851 = vpop.f32.mrf.mxu0
    %4852 = vdwg.mxu0
    %4853 = vmatpush.bf16.msra.mxu0 %v4011
    %4854 = vmatpush.bf16.msra.mxu0 %v4005
    %4855 = vmatpush.bf16.msra.mxu0 %v3999
    %4856 = vmatpush.bf16.msra.mxu0 %v3993
    %4857 = vmatpush.bf16.msra.mxu0 %v3987
    %4858 = vmatpush.bf16.msra.mxu0 %v3981
    %4859 = vmatpush.bf16.msra.mxu0 %v3975
    %4860 = vmatpush.bf16.msra.mxu0 %v3969
    %4861 = vmatmul.bf16.gmra.mxu0 %v3089
    %v4862 = vpop.f32.mrf.mxu0
    %v4863 = vadd.f32 %v2792, %v4862
    %v4864 = vpop.f32.mrf.mxu0
    %4865 = vdwg.mxu0
    %4866 = vmatpush.bf16.msra.mxu0 %v4059
    %4867 = vmatpush.bf16.msra.mxu0 %v4053
    %4868 = vmatpush.bf16.msra.mxu0 %v4047
    %4869 = vmatpush.bf16.msra.mxu0 %v4041
    %4870 = vmatpush.bf16.msra.mxu0 %v4035
    %4871 = vmatpush.bf16.msra.mxu0 %v4029
    %4872 = vmatpush.bf16.msra.mxu0 %v4023
    %4873 = vmatpush.bf16.msra.mxu0 %v4017
    %4874 = vmatmul.bf16.gmra.mxu0 %v3090
    %v4875 = vpop.f32.mrf.mxu0
    %v4876 = vadd.f32 %v4863, %v4875
    %v4877 = vpop.f32.mrf.mxu0
    %4878 = vdwg.mxu0
    %4879 = vmatpush.bf16.msra.mxu0 %v4107
    %4880 = vmatpush.bf16.msra.mxu0 %v4101
    %4881 = vmatpush.bf16.msra.mxu0 %v4095
    %4882 = vmatpush.bf16.msra.mxu0 %v4089
    %4883 = vmatpush.bf16.msra.mxu0 %v4083
    %4884 = vmatpush.bf16.msra.mxu0 %v4077
    %4885 = vmatpush.bf16.msra.mxu0 %v4071
    %4886 = vmatpush.bf16.msra.mxu0 %v4065
    %4887 = vmatmul.bf16.gmra.mxu0 %v3091
    %v4888 = vpop.f32.mrf.mxu0
    %v4889 = vadd.f32 %v4876, %v4888
    %v4890 = vpop.f32.mrf.mxu0
    %4891 = vdwg.mxu0
    %4892 = vmatpush.bf16.msra.mxu0 %v4155
    %4893 = vmatpush.bf16.msra.mxu0 %v4149
    %4894 = vmatpush.bf16.msra.mxu0 %v4143
    %4895 = vmatpush.bf16.msra.mxu0 %v4137
    %4896 = vmatpush.bf16.msra.mxu0 %v4131
    %4897 = vmatpush.bf16.msra.mxu0 %v4125
    %4898 = vmatpush.bf16.msra.mxu0 %v4119
    %4899 = vmatpush.bf16.msra.mxu0 %v4113
    %4900 = vmatmul.bf16.gmra.mxu0 %v3092
    %v4901 = vpop.f32.mrf.mxu0
    %v4902 = vadd.f32 %v4889, %v4901
    %v4903 = vpop.f32.mrf.mxu0
    %4904 = vdwg.mxu0
    %4905 = vmatpush.bf16.msra.mxu0 %v4203
    %4906 = vmatpush.bf16.msra.mxu0 %v4197
    %4907 = vmatpush.bf16.msra.mxu0 %v4191
    %4908 = vmatpush.bf16.msra.mxu0 %v4185
    %4909 = vmatpush.bf16.msra.mxu0 %v4179
    %4910 = vmatpush.bf16.msra.mxu0 %v4173
    %4911 = vmatpush.bf16.msra.mxu0 %v4167
    %4912 = vmatpush.bf16.msra.mxu0 %v4161
    %4913 = vmatmul.bf16.gmra.mxu0 %v3093
    %v4914 = vpop.f32.mrf.mxu0
    %v4915 = vadd.f32 %v4902, %v4914
    %v4916 = vpop.f32.mrf.mxu0
    %4917 = vdwg.mxu0
    %4918 = vmatpush.bf16.msra.mxu0 %v4251
    %4919 = vmatpush.bf16.msra.mxu0 %v4245
    %4920 = vmatpush.bf16.msra.mxu0 %v4239
    %4921 = vmatpush.bf16.msra.mxu0 %v4233
    %4922 = vmatpush.bf16.msra.mxu0 %v4227
    %4923 = vmatpush.bf16.msra.mxu0 %v4221
    %4924 = vmatpush.bf16.msra.mxu0 %v4215
    %4925 = vmatpush.bf16.msra.mxu0 %v4209
    %4926 = vmatmul.bf16.gmra.mxu0 %v3094
    %v4927 = vpop.f32.mrf.mxu0
    %v4928 = vadd.f32 %v4915, %v4927
    %v4929 = vpop.f32.mrf.mxu0
    %4930 = vdwg.mxu0
    %4931 = vmatpush.bf16.msra.mxu0 %v4012
    %4932 = vmatpush.bf16.msra.mxu0 %v4006
    %4933 = vmatpush.bf16.msra.mxu0 %v4000
    %4934 = vmatpush.bf16.msra.mxu0 %v3994
    %4935 = vmatpush.bf16.msra.mxu0 %v3988
    %4936 = vmatpush.bf16.msra.mxu0 %v3982
    %4937 = vmatpush.bf16.msra.mxu0 %v3976
    %4938 = vmatpush.bf16.msra.mxu0 %v3970
    %4939 = vmatmul.bf16.gmra.mxu0 %v3089
    %v4940 = vpop.f32.mrf.mxu0
    %v4941 = vadd.f32 %v2793, %v4940
    %v4942 = vpop.f32.mrf.mxu0
    %4943 = vdwg.mxu0
    %4944 = vmatpush.bf16.msra.mxu0 %v4060
    %4945 = vmatpush.bf16.msra.mxu0 %v4054
    %4946 = vmatpush.bf16.msra.mxu0 %v4048
    %4947 = vmatpush.bf16.msra.mxu0 %v4042
    %4948 = vmatpush.bf16.msra.mxu0 %v4036
    %4949 = vmatpush.bf16.msra.mxu0 %v4030
    %4950 = vmatpush.bf16.msra.mxu0 %v4024
    %4951 = vmatpush.bf16.msra.mxu0 %v4018
    %4952 = vmatmul.bf16.gmra.mxu0 %v3090
    %v4953 = vpop.f32.mrf.mxu0
    %v4954 = vadd.f32 %v4941, %v4953
    %v4955 = vpop.f32.mrf.mxu0
    %4956 = vdwg.mxu0
    %4957 = vmatpush.bf16.msra.mxu0 %v4108
    %4958 = vmatpush.bf16.msra.mxu0 %v4102
    %4959 = vmatpush.bf16.msra.mxu0 %v4096
    %4960 = vmatpush.bf16.msra.mxu0 %v4090
    %4961 = vmatpush.bf16.msra.mxu0 %v4084
    %4962 = vmatpush.bf16.msra.mxu0 %v4078
    %4963 = vmatpush.bf16.msra.mxu0 %v4072
    %4964 = vmatpush.bf16.msra.mxu0 %v4066
    %4965 = vmatmul.bf16.gmra.mxu0 %v3091
    %v4966 = vpop.f32.mrf.mxu0
    %v4967 = vadd.f32 %v4954, %v4966
    %v4968 = vpop.f32.mrf.mxu0
    %4969 = vdwg.mxu0
    %4970 = vmatpush.bf16.msra.mxu0 %v4156
    %4971 = vmatpush.bf16.msra.mxu0 %v4150
    %4972 = vmatpush.bf16.msra.mxu0 %v4144
    %4973 = vmatpush.bf16.msra.mxu0 %v4138
    %4974 = vmatpush.bf16.msra.mxu0 %v4132
    %4975 = vmatpush.bf16.msra.mxu0 %v4126
    %4976 = vmatpush.bf16.msra.mxu0 %v4120
    %4977 = vmatpush.bf16.msra.mxu0 %v4114
    %4978 = vmatmul.bf16.gmra.mxu0 %v3092
    %v4979 = vpop.f32.mrf.mxu0
    %v4980 = vadd.f32 %v4967, %v4979
    %v4981 = vpop.f32.mrf.mxu0
    %4982 = vdwg.mxu0
    %4983 = vmatpush.bf16.msra.mxu0 %v4204
    %4984 = vmatpush.bf16.msra.mxu0 %v4198
    %4985 = vmatpush.bf16.msra.mxu0 %v4192
    %4986 = vmatpush.bf16.msra.mxu0 %v4186
    %4987 = vmatpush.bf16.msra.mxu0 %v4180
    %4988 = vmatpush.bf16.msra.mxu0 %v4174
    %4989 = vmatpush.bf16.msra.mxu0 %v4168
    %4990 = vmatpush.bf16.msra.mxu0 %v4162
    %4991 = vmatmul.bf16.gmra.mxu0 %v3093
    %v4992 = vpop.f32.mrf.mxu0
    %v4993 = vadd.f32 %v4980, %v4992
    %v4994 = vpop.f32.mrf.mxu0
    %4995 = vdwg.mxu0
    %4996 = vmatpush.bf16.msra.mxu0 %v4252
    %4997 = vmatpush.bf16.msra.mxu0 %v4246
    %4998 = vmatpush.bf16.msra.mxu0 %v4240
    %4999 = vmatpush.bf16.msra.mxu0 %v4234
    %5000 = vmatpush.bf16.msra.mxu0 %v4228
    %5001 = vmatpush.bf16.msra.mxu0 %v4222
    %5002 = vmatpush.bf16.msra.mxu0 %v4216
    %5003 = vmatpush.bf16.msra.mxu0 %v4210
    %5004 = vmatmul.bf16.gmra.mxu0 %v3094
    %v5005 = vpop.f32.mrf.mxu0
    %v5006 = vadd.f32 %v4993, %v5005
    %v5007 = vpop.f32.mrf.mxu0
    %5008 = vdwg.mxu0
    %v5009 = vpack.c.bf16 %v4616, %v4616
    %v5010 = vpack.c.bf16 %v4694, %v4694
    %v5011 = vpack.c.bf16 %v4772, %v4772
    %v5012 = vpack.c.bf16 %v4850, %v4850
    %v5013 = vpack.c.bf16 %v4928, %v4928
    %v5014 = vpack.c.bf16 %v5006, %v5006
    %v5021 = vrot.slane %v2788, 1
    %v5022 = vrot.slane %v2789, 1
    %v5023 = vrot.slane %v2790, 1
    %v5024 = vrot.slane %v2791, 1
    %v5025 = vrot.slane %v2792, 1
    %v5026 = vrot.slane %v2793, 1
    %5033 = vmatpush.bf16.msra.mxu0 %v4007
    %5034 = vmatpush.bf16.msra.mxu0 %v4001
    %5035 = vmatpush.bf16.msra.mxu0 %v3995
    %5036 = vmatpush.bf16.msra.mxu0 %v3989
    %5037 = vmatpush.bf16.msra.mxu0 %v3983
    %5038 = vmatpush.bf16.msra.mxu0 %v3977
    %5039 = vmatpush.bf16.msra.mxu0 %v3971
    %5040 = vmatpush.bf16.msra.mxu0 %v3965
    %5041 = vmatmul.bf16.gmra.mxu0 %v5009
    %v5042 = vpop.f32.mrf.mxu0
    %v5043 = vadd.f32 %v5021, %v5042
    %v5044 = vpop.f32.mrf.mxu0
    %5045 = vdwg.mxu0
    %5046 = vmatpush.bf16.msra.mxu0 %v4055
    %5047 = vmatpush.bf16.msra.mxu0 %v4049
    %5048 = vmatpush.bf16.msra.mxu0 %v4043
    %5049 = vmatpush.bf16.msra.mxu0 %v4037
    %5050 = vmatpush.bf16.msra.mxu0 %v4031
    %5051 = vmatpush.bf16.msra.mxu0 %v4025
    %5052 = vmatpush.bf16.msra.mxu0 %v4019
    %5053 = vmatpush.bf16.msra.mxu0 %v4013
    %5054 = vmatmul.bf16.gmra.mxu0 %v5010
    %v5055 = vpop.f32.mrf.mxu0
    %v5056 = vadd.f32 %v5043, %v5055
    %v5057 = vpop.f32.mrf.mxu0
    %5058 = vdwg.mxu0
    %5059 = vmatpush.bf16.msra.mxu0 %v4103
    %5060 = vmatpush.bf16.msra.mxu0 %v4097
    %5061 = vmatpush.bf16.msra.mxu0 %v4091
    %5062 = vmatpush.bf16.msra.mxu0 %v4085
    %5063 = vmatpush.bf16.msra.mxu0 %v4079
    %5064 = vmatpush.bf16.msra.mxu0 %v4073
    %5065 = vmatpush.bf16.msra.mxu0 %v4067
    %5066 = vmatpush.bf16.msra.mxu0 %v4061
    %5067 = vmatmul.bf16.gmra.mxu0 %v5011
    %v5068 = vpop.f32.mrf.mxu0
    %v5069 = vadd.f32 %v5056, %v5068
    %v5070 = vpop.f32.mrf.mxu0
    %5071 = vdwg.mxu0
    %5072 = vmatpush.bf16.msra.mxu0 %v4151
    %5073 = vmatpush.bf16.msra.mxu0 %v4145
    %5074 = vmatpush.bf16.msra.mxu0 %v4139
    %5075 = vmatpush.bf16.msra.mxu0 %v4133
    %5076 = vmatpush.bf16.msra.mxu0 %v4127
    %5077 = vmatpush.bf16.msra.mxu0 %v4121
    %5078 = vmatpush.bf16.msra.mxu0 %v4115
    %5079 = vmatpush.bf16.msra.mxu0 %v4109
    %5080 = vmatmul.bf16.gmra.mxu0 %v5012
    %v5081 = vpop.f32.mrf.mxu0
    %v5082 = vadd.f32 %v5069, %v5081
    %v5083 = vpop.f32.mrf.mxu0
    %5084 = vdwg.mxu0
    %5085 = vmatpush.bf16.msra.mxu0 %v4199
    %5086 = vmatpush.bf16.msra.mxu0 %v4193
    %5087 = vmatpush.bf16.msra.mxu0 %v4187
    %5088 = vmatpush.bf16.msra.mxu0 %v4181
    %5089 = vmatpush.bf16.msra.mxu0 %v4175
    %5090 = vmatpush.bf16.msra.mxu0 %v4169
    %5091 = vmatpush.bf16.msra.mxu0 %v4163
    %5092 = vmatpush.bf16.msra.mxu0 %v4157
    %5093 = vmatmul.bf16.gmra.mxu0 %v5013
    %v5094 = vpop.f32.mrf.mxu0
    %v5095 = vadd.f32 %v5082, %v5094
    %v5096 = vpop.f32.mrf.mxu0
    %5097 = vdwg.mxu0
    %5098 = vmatpush.bf16.msra.mxu0 %v4247
    %5099 = vmatpush.bf16.msra.mxu0 %v4241
    %5100 = vmatpush.bf16.msra.mxu0 %v4235
    %5101 = vmatpush.bf16.msra.mxu0 %v4229
    %5102 = vmatpush.bf16.msra.mxu0 %v4223
    %5103 = vmatpush.bf16.msra.mxu0 %v4217
    %5104 = vmatpush.bf16.msra.mxu0 %v4211
    %5105 = vmatpush.bf16.msra.mxu0 %v4205
    %5106 = vmatmul.bf16.gmra.mxu0 %v5014
    %v5107 = vpop.f32.mrf.mxu0
    %v5108 = vadd.f32 %v5095, %v5107
    %v5109 = vpop.f32.mrf.mxu0
    %5110 = vdwg.mxu0
    %5111 = vmatpush.bf16.msra.mxu0 %v4008
    %5112 = vmatpush.bf16.msra.mxu0 %v4002
    %5113 = vmatpush.bf16.msra.mxu0 %v3996
    %5114 = vmatpush.bf16.msra.mxu0 %v3990
    %5115 = vmatpush.bf16.msra.mxu0 %v3984
    %5116 = vmatpush.bf16.msra.mxu0 %v3978
    %5117 = vmatpush.bf16.msra.mxu0 %v3972
    %5118 = vmatpush.bf16.msra.mxu0 %v3966
    %5119 = vmatmul.bf16.gmra.mxu0 %v5009
    %v5120 = vpop.f32.mrf.mxu0
    %v5121 = vadd.f32 %v5022, %v5120
    %v5122 = vpop.f32.mrf.mxu0
    %5123 = vdwg.mxu0
    %5124 = vmatpush.bf16.msra.mxu0 %v4056
    %5125 = vmatpush.bf16.msra.mxu0 %v4050
    %5126 = vmatpush.bf16.msra.mxu0 %v4044
    %5127 = vmatpush.bf16.msra.mxu0 %v4038
    %5128 = vmatpush.bf16.msra.mxu0 %v4032
    %5129 = vmatpush.bf16.msra.mxu0 %v4026
    %5130 = vmatpush.bf16.msra.mxu0 %v4020
    %5131 = vmatpush.bf16.msra.mxu0 %v4014
    %5132 = vmatmul.bf16.gmra.mxu0 %v5010
    %v5133 = vpop.f32.mrf.mxu0
    %v5134 = vadd.f32 %v5121, %v5133
    %v5135 = vpop.f32.mrf.mxu0
    %5136 = vdwg.mxu0
    %5137 = vmatpush.bf16.msra.mxu0 %v4104
    %5138 = vmatpush.bf16.msra.mxu0 %v4098
    %5139 = vmatpush.bf16.msra.mxu0 %v4092
    %5140 = vmatpush.bf16.msra.mxu0 %v4086
    %5141 = vmatpush.bf16.msra.mxu0 %v4080
    %5142 = vmatpush.bf16.msra.mxu0 %v4074
    %5143 = vmatpush.bf16.msra.mxu0 %v4068
    %5144 = vmatpush.bf16.msra.mxu0 %v4062
    %5145 = vmatmul.bf16.gmra.mxu0 %v5011
    %v5146 = vpop.f32.mrf.mxu0
    %v5147 = vadd.f32 %v5134, %v5146
    %v5148 = vpop.f32.mrf.mxu0
    %5149 = vdwg.mxu0
    %5150 = vmatpush.bf16.msra.mxu0 %v4152
    %5151 = vmatpush.bf16.msra.mxu0 %v4146
    %5152 = vmatpush.bf16.msra.mxu0 %v4140
    %5153 = vmatpush.bf16.msra.mxu0 %v4134
    %5154 = vmatpush.bf16.msra.mxu0 %v4128
    %5155 = vmatpush.bf16.msra.mxu0 %v4122
    %5156 = vmatpush.bf16.msra.mxu0 %v4116
    %5157 = vmatpush.bf16.msra.mxu0 %v4110
    %5158 = vmatmul.bf16.gmra.mxu0 %v5012
    %v5159 = vpop.f32.mrf.mxu0
    %v5160 = vadd.f32 %v5147, %v5159
    %v5161 = vpop.f32.mrf.mxu0
    %5162 = vdwg.mxu0
    %5163 = vmatpush.bf16.msra.mxu0 %v4200
    %5164 = vmatpush.bf16.msra.mxu0 %v4194
    %5165 = vmatpush.bf16.msra.mxu0 %v4188
    %5166 = vmatpush.bf16.msra.mxu0 %v4182
    %5167 = vmatpush.bf16.msra.mxu0 %v4176
    %5168 = vmatpush.bf16.msra.mxu0 %v4170
    %5169 = vmatpush.bf16.msra.mxu0 %v4164
    %5170 = vmatpush.bf16.msra.mxu0 %v4158
    %5171 = vmatmul.bf16.gmra.mxu0 %v5013
    %v5172 = vpop.f32.mrf.mxu0
    %v5173 = vadd.f32 %v5160, %v5172
    %v5174 = vpop.f32.mrf.mxu0
    %5175 = vdwg.mxu0
    %5176 = vmatpush.bf16.msra.mxu0 %v4248
    %5177 = vmatpush.bf16.msra.mxu0 %v4242
    %5178 = vmatpush.bf16.msra.mxu0 %v4236
    %5179 = vmatpush.bf16.msra.mxu0 %v4230
    %5180 = vmatpush.bf16.msra.mxu0 %v4224
    %5181 = vmatpush.bf16.msra.mxu0 %v4218
    %5182 = vmatpush.bf16.msra.mxu0 %v4212
    %5183 = vmatpush.bf16.msra.mxu0 %v4206
    %5184 = vmatmul.bf16.gmra.mxu0 %v5014
    %v5185 = vpop.f32.mrf.mxu0
    %v5186 = vadd.f32 %v5173, %v5185
    %v5187 = vpop.f32.mrf.mxu0
    %5188 = vdwg.mxu0
    %5189 = vmatpush.bf16.msra.mxu0 %v4009
    %5190 = vmatpush.bf16.msra.mxu0 %v4003
    %5191 = vmatpush.bf16.msra.mxu0 %v3997
    %5192 = vmatpush.bf16.msra.mxu0 %v3991
    %5193 = vmatpush.bf16.msra.mxu0 %v3985
    %5194 = vmatpush.bf16.msra.mxu0 %v3979
    %5195 = vmatpush.bf16.msra.mxu0 %v3973
    %5196 = vmatpush.bf16.msra.mxu0 %v3967
    %5197 = vmatmul.bf16.gmra.mxu0 %v5009
    %v5198 = vpop.f32.mrf.mxu0
    %v5199 = vadd.f32 %v5023, %v5198
    %v5200 = vpop.f32.mrf.mxu0
    %5201 = vdwg.mxu0
    %5202 = vmatpush.bf16.msra.mxu0 %v4057
    %5203 = vmatpush.bf16.msra.mxu0 %v4051
    %5204 = vmatpush.bf16.msra.mxu0 %v4045
    %5205 = vmatpush.bf16.msra.mxu0 %v4039
    %5206 = vmatpush.bf16.msra.mxu0 %v4033
    %5207 = vmatpush.bf16.msra.mxu0 %v4027
    %5208 = vmatpush.bf16.msra.mxu0 %v4021
    %5209 = vmatpush.bf16.msra.mxu0 %v4015
    %5210 = vmatmul.bf16.gmra.mxu0 %v5010
    %v5211 = vpop.f32.mrf.mxu0
    %v5212 = vadd.f32 %v5199, %v5211
    %v5213 = vpop.f32.mrf.mxu0
    %5214 = vdwg.mxu0
    %5215 = vmatpush.bf16.msra.mxu0 %v4105
    %5216 = vmatpush.bf16.msra.mxu0 %v4099
    %5217 = vmatpush.bf16.msra.mxu0 %v4093
    %5218 = vmatpush.bf16.msra.mxu0 %v4087
    %5219 = vmatpush.bf16.msra.mxu0 %v4081
    %5220 = vmatpush.bf16.msra.mxu0 %v4075
    %5221 = vmatpush.bf16.msra.mxu0 %v4069
    %5222 = vmatpush.bf16.msra.mxu0 %v4063
    %5223 = vmatmul.bf16.gmra.mxu0 %v5011
    %v5224 = vpop.f32.mrf.mxu0
    %v5225 = vadd.f32 %v5212, %v5224
    %v5226 = vpop.f32.mrf.mxu0
    %5227 = vdwg.mxu0
    %5228 = vmatpush.bf16.msra.mxu0 %v4153
    %5229 = vmatpush.bf16.msra.mxu0 %v4147
    %5230 = vmatpush.bf16.msra.mxu0 %v4141
    %5231 = vmatpush.bf16.msra.mxu0 %v4135
    %5232 = vmatpush.bf16.msra.mxu0 %v4129
    %5233 = vmatpush.bf16.msra.mxu0 %v4123
    %5234 = vmatpush.bf16.msra.mxu0 %v4117
    %5235 = vmatpush.bf16.msra.mxu0 %v4111
    %5236 = vmatmul.bf16.gmra.mxu0 %v5012
    %v5237 = vpop.f32.mrf.mxu0
    %v5238 = vadd.f32 %v5225, %v5237
    %v5239 = vpop.f32.mrf.mxu0
    %5240 = vdwg.mxu0
    %5241 = vmatpush.bf16.msra.mxu0 %v4201
    %5242 = vmatpush.bf16.msra.mxu0 %v4195
    %5243 = vmatpush.bf16.msra.mxu0 %v4189
    %5244 = vmatpush.bf16.msra.mxu0 %v4183
    %5245 = vmatpush.bf16.msra.mxu0 %v4177
    %5246 = vmatpush.bf16.msra.mxu0 %v4171
    %5247 = vmatpush.bf16.msra.mxu0 %v4165
    %5248 = vmatpush.bf16.msra.mxu0 %v4159
    %5249 = vmatmul.bf16.gmra.mxu0 %v5013
    %v5250 = vpop.f32.mrf.mxu0
    %v5251 = vadd.f32 %v5238, %v5250
    %v5252 = vpop.f32.mrf.mxu0
    %5253 = vdwg.mxu0
    %5254 = vmatpush.bf16.msra.mxu0 %v4249
    %5255 = vmatpush.bf16.msra.mxu0 %v4243
    %5256 = vmatpush.bf16.msra.mxu0 %v4237
    %5257 = vmatpush.bf16.msra.mxu0 %v4231
    %5258 = vmatpush.bf16.msra.mxu0 %v4225
    %5259 = vmatpush.bf16.msra.mxu0 %v4219
    %5260 = vmatpush.bf16.msra.mxu0 %v4213
    %5261 = vmatpush.bf16.msra.mxu0 %v4207
    %5262 = vmatmul.bf16.gmra.mxu0 %v5014
    %v5263 = vpop.f32.mrf.mxu0
    %v5264 = vadd.f32 %v5251, %v5263
    %v5265 = vpop.f32.mrf.mxu0
    %5266 = vdwg.mxu0
    %5267 = vmatpush.bf16.msra.mxu0 %v4010
    %5268 = vmatpush.bf16.msra.mxu0 %v4004
    %5269 = vmatpush.bf16.msra.mxu0 %v3998
    %5270 = vmatpush.bf16.msra.mxu0 %v3992
    %5271 = vmatpush.bf16.msra.mxu0 %v3986
    %5272 = vmatpush.bf16.msra.mxu0 %v3980
    %5273 = vmatpush.bf16.msra.mxu0 %v3974
    %5274 = vmatpush.bf16.msra.mxu0 %v3968
    %5275 = vmatmul.bf16.gmra.mxu0 %v5009
    %v5276 = vpop.f32.mrf.mxu0
    %v5277 = vadd.f32 %v5024, %v5276
    %v5278 = vpop.f32.mrf.mxu0
    %5279 = vdwg.mxu0
    %5280 = vmatpush.bf16.msra.mxu0 %v4058
    %5281 = vmatpush.bf16.msra.mxu0 %v4052
    %5282 = vmatpush.bf16.msra.mxu0 %v4046
    %5283 = vmatpush.bf16.msra.mxu0 %v4040
    %5284 = vmatpush.bf16.msra.mxu0 %v4034
    %5285 = vmatpush.bf16.msra.mxu0 %v4028
    %5286 = vmatpush.bf16.msra.mxu0 %v4022
    %5287 = vmatpush.bf16.msra.mxu0 %v4016
    %5288 = vmatmul.bf16.gmra.mxu0 %v5010
    %v5289 = vpop.f32.mrf.mxu0
    %v5290 = vadd.f32 %v5277, %v5289
    %v5291 = vpop.f32.mrf.mxu0
    %5292 = vdwg.mxu0
    %5293 = vmatpush.bf16.msra.mxu0 %v4106
    %5294 = vmatpush.bf16.msra.mxu0 %v4100
    %5295 = vmatpush.bf16.msra.mxu0 %v4094
    %5296 = vmatpush.bf16.msra.mxu0 %v4088
    %5297 = vmatpush.bf16.msra.mxu0 %v4082
    %5298 = vmatpush.bf16.msra.mxu0 %v4076
    %5299 = vmatpush.bf16.msra.mxu0 %v4070
    %5300 = vmatpush.bf16.msra.mxu0 %v4064
    %5301 = vmatmul.bf16.gmra.mxu0 %v5011
    %v5302 = vpop.f32.mrf.mxu0
    %v5303 = vadd.f32 %v5290, %v5302
    %v5304 = vpop.f32.mrf.mxu0
    %5305 = vdwg.mxu0
    %5306 = vmatpush.bf16.msra.mxu0 %v4154
    %5307 = vmatpush.bf16.msra.mxu0 %v4148
    %5308 = vmatpush.bf16.msra.mxu0 %v4142
    %5309 = vmatpush.bf16.msra.mxu0 %v4136
    %5310 = vmatpush.bf16.msra.mxu0 %v4130
    %5311 = vmatpush.bf16.msra.mxu0 %v4124
    %5312 = vmatpush.bf16.msra.mxu0 %v4118
    %5313 = vmatpush.bf16.msra.mxu0 %v4112
    %5314 = vmatmul.bf16.gmra.mxu0 %v5012
    %v5315 = vpop.f32.mrf.mxu0
    %v5316 = vadd.f32 %v5303, %v5315
    %v5317 = vpop.f32.mrf.mxu0
    %5318 = vdwg.mxu0
    %5319 = vmatpush.bf16.msra.mxu0 %v4202
    %5320 = vmatpush.bf16.msra.mxu0 %v4196
    %5321 = vmatpush.bf16.msra.mxu0 %v4190
    %5322 = vmatpush.bf16.msra.mxu0 %v4184
    %5323 = vmatpush.bf16.msra.mxu0 %v4178
    %5324 = vmatpush.bf16.msra.mxu0 %v4172
    %5325 = vmatpush.bf16.msra.mxu0 %v4166
    %5326 = vmatpush.bf16.msra.mxu0 %v4160
    %5327 = vmatmul.bf16.gmra.mxu0 %v5013
    %v5328 = vpop.f32.mrf.mxu0
    %v5329 = vadd.f32 %v5316, %v5328
    %v5330 = vpop.f32.mrf.mxu0
    %5331 = vdwg.mxu0
    %5332 = vmatpush.bf16.msra.mxu0 %v4250
    %5333 = vmatpush.bf16.msra.mxu0 %v4244
    %5334 = vmatpush.bf16.msra.mxu0 %v4238
    %5335 = vmatpush.bf16.msra.mxu0 %v4232
    %5336 = vmatpush.bf16.msra.mxu0 %v4226
    %5337 = vmatpush.bf16.msra.mxu0 %v4220
    %5338 = vmatpush.bf16.msra.mxu0 %v4214
    %5339 = vmatpush.bf16.msra.mxu0 %v4208
    %5340 = vmatmul.bf16.gmra.mxu0 %v5014
    %v5341 = vpop.f32.mrf.mxu0
    %v5342 = vadd.f32 %v5329, %v5341
    %v5343 = vpop.f32.mrf.mxu0
    %5344 = vdwg.mxu0
    %5345 = vmatpush.bf16.msra.mxu0 %v4011
    %5346 = vmatpush.bf16.msra.mxu0 %v4005
    %5347 = vmatpush.bf16.msra.mxu0 %v3999
    %5348 = vmatpush.bf16.msra.mxu0 %v3993
    %5349 = vmatpush.bf16.msra.mxu0 %v3987
    %5350 = vmatpush.bf16.msra.mxu0 %v3981
    %5351 = vmatpush.bf16.msra.mxu0 %v3975
    %5352 = vmatpush.bf16.msra.mxu0 %v3969
    %5353 = vmatmul.bf16.gmra.mxu0 %v5009
    %v5354 = vpop.f32.mrf.mxu0
    %v5355 = vadd.f32 %v5025, %v5354
    %v5356 = vpop.f32.mrf.mxu0
    %5357 = vdwg.mxu0
    %5358 = vmatpush.bf16.msra.mxu0 %v4059
    %5359 = vmatpush.bf16.msra.mxu0 %v4053
    %5360 = vmatpush.bf16.msra.mxu0 %v4047
    %5361 = vmatpush.bf16.msra.mxu0 %v4041
    %5362 = vmatpush.bf16.msra.mxu0 %v4035
    %5363 = vmatpush.bf16.msra.mxu0 %v4029
    %5364 = vmatpush.bf16.msra.mxu0 %v4023
    %5365 = vmatpush.bf16.msra.mxu0 %v4017
    %5366 = vmatmul.bf16.gmra.mxu0 %v5010
    %v5367 = vpop.f32.mrf.mxu0
    %v5368 = vadd.f32 %v5355, %v5367
    %v5369 = vpop.f32.mrf.mxu0
    %5370 = vdwg.mxu0
    %5371 = vmatpush.bf16.msra.mxu0 %v4107
    %5372 = vmatpush.bf16.msra.mxu0 %v4101
    %5373 = vmatpush.bf16.msra.mxu0 %v4095
    %5374 = vmatpush.bf16.msra.mxu0 %v4089
    %5375 = vmatpush.bf16.msra.mxu0 %v4083
    %5376 = vmatpush.bf16.msra.mxu0 %v4077
    %5377 = vmatpush.bf16.msra.mxu0 %v4071
    %5378 = vmatpush.bf16.msra.mxu0 %v4065
    %5379 = vmatmul.bf16.gmra.mxu0 %v5011
    %v5380 = vpop.f32.mrf.mxu0
    %v5381 = vadd.f32 %v5368, %v5380
    %v5382 = vpop.f32.mrf.mxu0
    %5383 = vdwg.mxu0
    %5384 = vmatpush.bf16.msra.mxu0 %v4155
    %5385 = vmatpush.bf16.msra.mxu0 %v4149
    %5386 = vmatpush.bf16.msra.mxu0 %v4143
    %5387 = vmatpush.bf16.msra.mxu0 %v4137
    %5388 = vmatpush.bf16.msra.mxu0 %v4131
    %5389 = vmatpush.bf16.msra.mxu0 %v4125
    %5390 = vmatpush.bf16.msra.mxu0 %v4119
    %5391 = vmatpush.bf16.msra.mxu0 %v4113
    %5392 = vmatmul.bf16.gmra.mxu0 %v5012
    %v5393 = vpop.f32.mrf.mxu0
    %v5394 = vadd.f32 %v5381, %v5393
    %v5395 = vpop.f32.mrf.mxu0
    %5396 = vdwg.mxu0
    %5397 = vmatpush.bf16.msra.mxu0 %v4203
    %5398 = vmatpush.bf16.msra.mxu0 %v4197
    %5399 = vmatpush.bf16.msra.mxu0 %v4191
    %5400 = vmatpush.bf16.msra.mxu0 %v4185
    %5401 = vmatpush.bf16.msra.mxu0 %v4179
    %5402 = vmatpush.bf16.msra.mxu0 %v4173
    %5403 = vmatpush.bf16.msra.mxu0 %v4167
    %5404 = vmatpush.bf16.msra.mxu0 %v4161
    %5405 = vmatmul.bf16.gmra.mxu0 %v5013
    %v5406 = vpop.f32.mrf.mxu0
    %v5407 = vadd.f32 %v5394, %v5406
    %v5408 = vpop.f32.mrf.mxu0
    %5409 = vdwg.mxu0
    %5410 = vmatpush.bf16.msra.mxu0 %v4251
    %5411 = vmatpush.bf16.msra.mxu0 %v4245
    %5412 = vmatpush.bf16.msra.mxu0 %v4239
    %5413 = vmatpush.bf16.msra.mxu0 %v4233
    %5414 = vmatpush.bf16.msra.mxu0 %v4227
    %5415 = vmatpush.bf16.msra.mxu0 %v4221
    %5416 = vmatpush.bf16.msra.mxu0 %v4215
    %5417 = vmatpush.bf16.msra.mxu0 %v4209
    %5418 = vmatmul.bf16.gmra.mxu0 %v5014
    %v5419 = vpop.f32.mrf.mxu0
    %v5420 = vadd.f32 %v5407, %v5419
    %v5421 = vpop.f32.mrf.mxu0
    %5422 = vdwg.mxu0
    %5423 = vmatpush.bf16.msra.mxu0 %v4012
    %5424 = vmatpush.bf16.msra.mxu0 %v4006
    %5425 = vmatpush.bf16.msra.mxu0 %v4000
    %5426 = vmatpush.bf16.msra.mxu0 %v3994
    %5427 = vmatpush.bf16.msra.mxu0 %v3988
    %5428 = vmatpush.bf16.msra.mxu0 %v3982
    %5429 = vmatpush.bf16.msra.mxu0 %v3976
    %5430 = vmatpush.bf16.msra.mxu0 %v3970
    %5431 = vmatmul.bf16.gmra.mxu0 %v5009
    %v5432 = vpop.f32.mrf.mxu0
    %v5433 = vadd.f32 %v5026, %v5432
    %v5434 = vpop.f32.mrf.mxu0
    %5435 = vdwg.mxu0
    %5436 = vmatpush.bf16.msra.mxu0 %v4060
    %5437 = vmatpush.bf16.msra.mxu0 %v4054
    %5438 = vmatpush.bf16.msra.mxu0 %v4048
    %5439 = vmatpush.bf16.msra.mxu0 %v4042
    %5440 = vmatpush.bf16.msra.mxu0 %v4036
    %5441 = vmatpush.bf16.msra.mxu0 %v4030
    %5442 = vmatpush.bf16.msra.mxu0 %v4024
    %5443 = vmatpush.bf16.msra.mxu0 %v4018
    %5444 = vmatmul.bf16.gmra.mxu0 %v5010
    %v5445 = vpop.f32.mrf.mxu0
    %v5446 = vadd.f32 %v5433, %v5445
    %v5447 = vpop.f32.mrf.mxu0
    %5448 = vdwg.mxu0
    %5449 = vmatpush.bf16.msra.mxu0 %v4108
    %5450 = vmatpush.bf16.msra.mxu0 %v4102
    %5451 = vmatpush.bf16.msra.mxu0 %v4096
    %5452 = vmatpush.bf16.msra.mxu0 %v4090
    %5453 = vmatpush.bf16.msra.mxu0 %v4084
    %5454 = vmatpush.bf16.msra.mxu0 %v4078
    %5455 = vmatpush.bf16.msra.mxu0 %v4072
    %5456 = vmatpush.bf16.msra.mxu0 %v4066
    %5457 = vmatmul.bf16.gmra.mxu0 %v5011
    %v5458 = vpop.f32.mrf.mxu0
    %v5459 = vadd.f32 %v5446, %v5458
    %v5460 = vpop.f32.mrf.mxu0
    %5461 = vdwg.mxu0
    %5462 = vmatpush.bf16.msra.mxu0 %v4156
    %5463 = vmatpush.bf16.msra.mxu0 %v4150
    %5464 = vmatpush.bf16.msra.mxu0 %v4144
    %5465 = vmatpush.bf16.msra.mxu0 %v4138
    %5466 = vmatpush.bf16.msra.mxu0 %v4132
    %5467 = vmatpush.bf16.msra.mxu0 %v4126
    %5468 = vmatpush.bf16.msra.mxu0 %v4120
    %5469 = vmatpush.bf16.msra.mxu0 %v4114
    %5470 = vmatmul.bf16.gmra.mxu0 %v5012
    %v5471 = vpop.f32.mrf.mxu0
    %v5472 = vadd.f32 %v5459, %v5471
    %v5473 = vpop.f32.mrf.mxu0
    %5474 = vdwg.mxu0
    %5475 = vmatpush.bf16.msra.mxu0 %v4204
    %5476 = vmatpush.bf16.msra.mxu0 %v4198
    %5477 = vmatpush.bf16.msra.mxu0 %v4192
    %5478 = vmatpush.bf16.msra.mxu0 %v4186
    %5479 = vmatpush.bf16.msra.mxu0 %v4180
    %5480 = vmatpush.bf16.msra.mxu0 %v4174
    %5481 = vmatpush.bf16.msra.mxu0 %v4168
    %5482 = vmatpush.bf16.msra.mxu0 %v4162
    %5483 = vmatmul.bf16.gmra.mxu0 %v5013
    %v5484 = vpop.f32.mrf.mxu0
    %v5485 = vadd.f32 %v5472, %v5484
    %v5486 = vpop.f32.mrf.mxu0
    %5487 = vdwg.mxu0
    %5488 = vmatpush.bf16.msra.mxu0 %v4252
    %5489 = vmatpush.bf16.msra.mxu0 %v4246
    %5490 = vmatpush.bf16.msra.mxu0 %v4240
    %5491 = vmatpush.bf16.msra.mxu0 %v4234
    %5492 = vmatpush.bf16.msra.mxu0 %v4228
    %5493 = vmatpush.bf16.msra.mxu0 %v4222
    %5494 = vmatpush.bf16.msra.mxu0 %v4216
    %5495 = vmatpush.bf16.msra.mxu0 %v4210
    %5496 = vmatmul.bf16.gmra.mxu0 %v5014
    %v5497 = vpop.f32.mrf.mxu0
    %v5498 = vadd.f32 %v5485, %v5497
    %v5499 = vpop.f32.mrf.mxu0
    %5500 = vdwg.mxu0
    %v5501 = vpack.c.bf16 %v5108, %v5108
    %v5502 = vpack.c.bf16 %v5186, %v5186
    %v5503 = vpack.c.bf16 %v5264, %v5264
    %v5504 = vpack.c.bf16 %v5342, %v5342
    %v5505 = vpack.c.bf16 %v5420, %v5420
    %v5506 = vpack.c.bf16 %v5498, %v5498
    %v5507 = vrot.slane %v2788, 2
    %v5508 = vrot.slane %v2789, 2
    %v5509 = vrot.slane %v2790, 2
    %v5510 = vrot.slane %v2791, 2
    %v5511 = vrot.slane %v2792, 2
    %v5512 = vrot.slane %v2793, 2
    %5519 = vmatpush.bf16.msra.mxu0 %v4007
    %5520 = vmatpush.bf16.msra.mxu0 %v4001
    %5521 = vmatpush.bf16.msra.mxu0 %v3995
    %5522 = vmatpush.bf16.msra.mxu0 %v3989
    %5523 = vmatpush.bf16.msra.mxu0 %v3983
    %5524 = vmatpush.bf16.msra.mxu0 %v3977
    %5525 = vmatpush.bf16.msra.mxu0 %v3971
    %5526 = vmatpush.bf16.msra.mxu0 %v3965
    %5527 = vmatmul.bf16.gmra.mxu0 %v5501
    %v5528 = vpop.f32.mrf.mxu0
    %v5529 = vadd.f32 %v5507, %v5528
    %v5530 = vpop.f32.mrf.mxu0
    %5531 = vdwg.mxu0
    %5532 = vmatpush.bf16.msra.mxu0 %v4055
    %5533 = vmatpush.bf16.msra.mxu0 %v4049
    %5534 = vmatpush.bf16.msra.mxu0 %v4043
    %5535 = vmatpush.bf16.msra.mxu0 %v4037
    %5536 = vmatpush.bf16.msra.mxu0 %v4031
    %5537 = vmatpush.bf16.msra.mxu0 %v4025
    %5538 = vmatpush.bf16.msra.mxu0 %v4019
    %5539 = vmatpush.bf16.msra.mxu0 %v4013
    %5540 = vmatmul.bf16.gmra.mxu0 %v5502
    %v5541 = vpop.f32.mrf.mxu0
    %v5542 = vadd.f32 %v5529, %v5541
    %v5543 = vpop.f32.mrf.mxu0
    %5544 = vdwg.mxu0
    %5545 = vmatpush.bf16.msra.mxu0 %v4103
    %5546 = vmatpush.bf16.msra.mxu0 %v4097
    %5547 = vmatpush.bf16.msra.mxu0 %v4091
    %5548 = vmatpush.bf16.msra.mxu0 %v4085
    %5549 = vmatpush.bf16.msra.mxu0 %v4079
    %5550 = vmatpush.bf16.msra.mxu0 %v4073
    %5551 = vmatpush.bf16.msra.mxu0 %v4067
    %5552 = vmatpush.bf16.msra.mxu0 %v4061
    %5553 = vmatmul.bf16.gmra.mxu0 %v5503
    %v5554 = vpop.f32.mrf.mxu0
    %v5555 = vadd.f32 %v5542, %v5554
    %v5556 = vpop.f32.mrf.mxu0
    %5557 = vdwg.mxu0
    %5558 = vmatpush.bf16.msra.mxu0 %v4151
    %5559 = vmatpush.bf16.msra.mxu0 %v4145
    %5560 = vmatpush.bf16.msra.mxu0 %v4139
    %5561 = vmatpush.bf16.msra.mxu0 %v4133
    %5562 = vmatpush.bf16.msra.mxu0 %v4127
    %5563 = vmatpush.bf16.msra.mxu0 %v4121
    %5564 = vmatpush.bf16.msra.mxu0 %v4115
    %5565 = vmatpush.bf16.msra.mxu0 %v4109
    %5566 = vmatmul.bf16.gmra.mxu0 %v5504
    %v5567 = vpop.f32.mrf.mxu0
    %v5568 = vadd.f32 %v5555, %v5567
    %v5569 = vpop.f32.mrf.mxu0
    %5570 = vdwg.mxu0
    %5571 = vmatpush.bf16.msra.mxu0 %v4199
    %5572 = vmatpush.bf16.msra.mxu0 %v4193
    %5573 = vmatpush.bf16.msra.mxu0 %v4187
    %5574 = vmatpush.bf16.msra.mxu0 %v4181
    %5575 = vmatpush.bf16.msra.mxu0 %v4175
    %5576 = vmatpush.bf16.msra.mxu0 %v4169
    %5577 = vmatpush.bf16.msra.mxu0 %v4163
    %5578 = vmatpush.bf16.msra.mxu0 %v4157
    %5579 = vmatmul.bf16.gmra.mxu0 %v5505
    %v5580 = vpop.f32.mrf.mxu0
    %v5581 = vadd.f32 %v5568, %v5580
    %v5582 = vpop.f32.mrf.mxu0
    %5583 = vdwg.mxu0
    %5584 = vmatpush.bf16.msra.mxu0 %v4247
    %5585 = vmatpush.bf16.msra.mxu0 %v4241
    %5586 = vmatpush.bf16.msra.mxu0 %v4235
    %5587 = vmatpush.bf16.msra.mxu0 %v4229
    %5588 = vmatpush.bf16.msra.mxu0 %v4223
    %5589 = vmatpush.bf16.msra.mxu0 %v4217
    %5590 = vmatpush.bf16.msra.mxu0 %v4211
    %5591 = vmatpush.bf16.msra.mxu0 %v4205
    %5592 = vmatmul.bf16.gmra.mxu0 %v5506
    %v5593 = vpop.f32.mrf.mxu0
    %v5594 = vadd.f32 %v5581, %v5593
    %v5595 = vpop.f32.mrf.mxu0
    %5596 = vdwg.mxu0
    %5597 = vmatpush.bf16.msra.mxu0 %v4008
    %5598 = vmatpush.bf16.msra.mxu0 %v4002
    %5599 = vmatpush.bf16.msra.mxu0 %v3996
    %5600 = vmatpush.bf16.msra.mxu0 %v3990
    %5601 = vmatpush.bf16.msra.mxu0 %v3984
    %5602 = vmatpush.bf16.msra.mxu0 %v3978
    %5603 = vmatpush.bf16.msra.mxu0 %v3972
    %5604 = vmatpush.bf16.msra.mxu0 %v3966
    %5605 = vmatmul.bf16.gmra.mxu0 %v5501
    %v5606 = vpop.f32.mrf.mxu0
    %v5607 = vadd.f32 %v5508, %v5606
    %v5608 = vpop.f32.mrf.mxu0
    %5609 = vdwg.mxu0
    %5610 = vmatpush.bf16.msra.mxu0 %v4056
    %5611 = vmatpush.bf16.msra.mxu0 %v4050
    %5612 = vmatpush.bf16.msra.mxu0 %v4044
    %5613 = vmatpush.bf16.msra.mxu0 %v4038
    %5614 = vmatpush.bf16.msra.mxu0 %v4032
    %5615 = vmatpush.bf16.msra.mxu0 %v4026
    %5616 = vmatpush.bf16.msra.mxu0 %v4020
    %5617 = vmatpush.bf16.msra.mxu0 %v4014
    %5618 = vmatmul.bf16.gmra.mxu0 %v5502
    %v5619 = vpop.f32.mrf.mxu0
    %v5620 = vadd.f32 %v5607, %v5619
    %v5621 = vpop.f32.mrf.mxu0
    %5622 = vdwg.mxu0
    %5623 = vmatpush.bf16.msra.mxu0 %v4104
    %5624 = vmatpush.bf16.msra.mxu0 %v4098
    %5625 = vmatpush.bf16.msra.mxu0 %v4092
    %5626 = vmatpush.bf16.msra.mxu0 %v4086
    %5627 = vmatpush.bf16.msra.mxu0 %v4080
    %5628 = vmatpush.bf16.msra.mxu0 %v4074
    %5629 = vmatpush.bf16.msra.mxu0 %v4068
    %5630 = vmatpush.bf16.msra.mxu0 %v4062
    %5631 = vmatmul.bf16.gmra.mxu0 %v5503
    %v5632 = vpop.f32.mrf.mxu0
    %v5633 = vadd.f32 %v5620, %v5632
    %v5634 = vpop.f32.mrf.mxu0
    %5635 = vdwg.mxu0
    %5636 = vmatpush.bf16.msra.mxu0 %v4152
    %5637 = vmatpush.bf16.msra.mxu0 %v4146
    %5638 = vmatpush.bf16.msra.mxu0 %v4140
    %5639 = vmatpush.bf16.msra.mxu0 %v4134
    %5640 = vmatpush.bf16.msra.mxu0 %v4128
    %5641 = vmatpush.bf16.msra.mxu0 %v4122
    %5642 = vmatpush.bf16.msra.mxu0 %v4116
    %5643 = vmatpush.bf16.msra.mxu0 %v4110
    %5644 = vmatmul.bf16.gmra.mxu0 %v5504
    %v5645 = vpop.f32.mrf.mxu0
    %v5646 = vadd.f32 %v5633, %v5645
    %v5647 = vpop.f32.mrf.mxu0
    %5648 = vdwg.mxu0
    %5649 = vmatpush.bf16.msra.mxu0 %v4200
    %5650 = vmatpush.bf16.msra.mxu0 %v4194
    %5651 = vmatpush.bf16.msra.mxu0 %v4188
    %5652 = vmatpush.bf16.msra.mxu0 %v4182
    %5653 = vmatpush.bf16.msra.mxu0 %v4176
    %5654 = vmatpush.bf16.msra.mxu0 %v4170
    %5655 = vmatpush.bf16.msra.mxu0 %v4164
    %5656 = vmatpush.bf16.msra.mxu0 %v4158
    %5657 = vmatmul.bf16.gmra.mxu0 %v5505
    %v5658 = vpop.f32.mrf.mxu0
    %v5659 = vadd.f32 %v5646, %v5658
    %v5660 = vpop.f32.mrf.mxu0
    %5661 = vdwg.mxu0
    %5662 = vmatpush.bf16.msra.mxu0 %v4248
    %5663 = vmatpush.bf16.msra.mxu0 %v4242
    %5664 = vmatpush.bf16.msra.mxu0 %v4236
    %5665 = vmatpush.bf16.msra.mxu0 %v4230
    %5666 = vmatpush.bf16.msra.mxu0 %v4224
    %5667 = vmatpush.bf16.msra.mxu0 %v4218
    %5668 = vmatpush.bf16.msra.mxu0 %v4212
    %5669 = vmatpush.bf16.msra.mxu0 %v4206
    %5670 = vmatmul.bf16.gmra.mxu0 %v5506
    %v5671 = vpop.f32.mrf.mxu0
    %v5672 = vadd.f32 %v5659, %v5671
    %v5673 = vpop.f32.mrf.mxu0
    %5674 = vdwg.mxu0
    %5675 = vmatpush.bf16.msra.mxu0 %v4009
    %5676 = vmatpush.bf16.msra.mxu0 %v4003
    %5677 = vmatpush.bf16.msra.mxu0 %v3997
    %5678 = vmatpush.bf16.msra.mxu0 %v3991
    %5679 = vmatpush.bf16.msra.mxu0 %v3985
    %5680 = vmatpush.bf16.msra.mxu0 %v3979
    %5681 = vmatpush.bf16.msra.mxu0 %v3973
    %5682 = vmatpush.bf16.msra.mxu0 %v3967
    %5683 = vmatmul.bf16.gmra.mxu0 %v5501
    %v5684 = vpop.f32.mrf.mxu0
    %v5685 = vadd.f32 %v5509, %v5684
    %v5686 = vpop.f32.mrf.mxu0
    %5687 = vdwg.mxu0
    %5688 = vmatpush.bf16.msra.mxu0 %v4057
    %5689 = vmatpush.bf16.msra.mxu0 %v4051
    %5690 = vmatpush.bf16.msra.mxu0 %v4045
    %5691 = vmatpush.bf16.msra.mxu0 %v4039
    %5692 = vmatpush.bf16.msra.mxu0 %v4033
    %5693 = vmatpush.bf16.msra.mxu0 %v4027
    %5694 = vmatpush.bf16.msra.mxu0 %v4021
    %5695 = vmatpush.bf16.msra.mxu0 %v4015
    %5696 = vmatmul.bf16.gmra.mxu0 %v5502
    %v5697 = vpop.f32.mrf.mxu0
    %v5698 = vadd.f32 %v5685, %v5697
    %v5699 = vpop.f32.mrf.mxu0
    %5700 = vdwg.mxu0
    %5701 = vmatpush.bf16.msra.mxu0 %v4105
    %5702 = vmatpush.bf16.msra.mxu0 %v4099
    %5703 = vmatpush.bf16.msra.mxu0 %v4093
    %5704 = vmatpush.bf16.msra.mxu0 %v4087
    %5705 = vmatpush.bf16.msra.mxu0 %v4081
    %5706 = vmatpush.bf16.msra.mxu0 %v4075
    %5707 = vmatpush.bf16.msra.mxu0 %v4069
    %5708 = vmatpush.bf16.msra.mxu0 %v4063
    %5709 = vmatmul.bf16.gmra.mxu0 %v5503
    %v5710 = vpop.f32.mrf.mxu0
    %v5711 = vadd.f32 %v5698, %v5710
    %v5712 = vpop.f32.mrf.mxu0
    %5713 = vdwg.mxu0
    %5714 = vmatpush.bf16.msra.mxu0 %v4153
    %5715 = vmatpush.bf16.msra.mxu0 %v4147
    %5716 = vmatpush.bf16.msra.mxu0 %v4141
    %5717 = vmatpush.bf16.msra.mxu0 %v4135
    %5718 = vmatpush.bf16.msra.mxu0 %v4129
    %5719 = vmatpush.bf16.msra.mxu0 %v4123
    %5720 = vmatpush.bf16.msra.mxu0 %v4117
    %5721 = vmatpush.bf16.msra.mxu0 %v4111
    %5722 = vmatmul.bf16.gmra.mxu0 %v5504
    %v5723 = vpop.f32.mrf.mxu0
    %v5724 = vadd.f32 %v5711, %v5723
    %v5725 = vpop.f32.mrf.mxu0
    %5726 = vdwg.mxu0
    %5727 = vmatpush.bf16.msra.mxu0 %v4201
    %5728 = vmatpush.bf16.msra.mxu0 %v4195
    %5729 = vmatpush.bf16.msra.mxu0 %v4189
    %5730 = vmatpush.bf16.msra.mxu0 %v4183
    %5731 = vmatpush.bf16.msra.mxu0 %v4177
    %5732 = vmatpush.bf16.msra.mxu0 %v4171
    %5733 = vmatpush.bf16.msra.mxu0 %v4165
    %5734 = vmatpush.bf16.msra.mxu0 %v4159
    %5735 = vmatmul.bf16.gmra.mxu0 %v5505
    %v5736 = vpop.f32.mrf.mxu0
    %v5737 = vadd.f32 %v5724, %v5736
    %v5738 = vpop.f32.mrf.mxu0
    %5739 = vdwg.mxu0
    %5740 = vmatpush.bf16.msra.mxu0 %v4249
    %5741 = vmatpush.bf16.msra.mxu0 %v4243
    %5742 = vmatpush.bf16.msra.mxu0 %v4237
    %5743 = vmatpush.bf16.msra.mxu0 %v4231
    %5744 = vmatpush.bf16.msra.mxu0 %v4225
    %5745 = vmatpush.bf16.msra.mxu0 %v4219
    %5746 = vmatpush.bf16.msra.mxu0 %v4213
    %5747 = vmatpush.bf16.msra.mxu0 %v4207
    %5748 = vmatmul.bf16.gmra.mxu0 %v5506
    %v5749 = vpop.f32.mrf.mxu0
    %v5750 = vadd.f32 %v5737, %v5749
    %v5751 = vpop.f32.mrf.mxu0
    %5752 = vdwg.mxu0
    %5753 = vmatpush.bf16.msra.mxu0 %v4010
    %5754 = vmatpush.bf16.msra.mxu0 %v4004
    %5755 = vmatpush.bf16.msra.mxu0 %v3998
    %5756 = vmatpush.bf16.msra.mxu0 %v3992
    %5757 = vmatpush.bf16.msra.mxu0 %v3986
    %5758 = vmatpush.bf16.msra.mxu0 %v3980
    %5759 = vmatpush.bf16.msra.mxu0 %v3974
    %5760 = vmatpush.bf16.msra.mxu0 %v3968
    %5761 = vmatmul.bf16.gmra.mxu0 %v5501
    %v5762 = vpop.f32.mrf.mxu0
    %v5763 = vadd.f32 %v5510, %v5762
    %v5764 = vpop.f32.mrf.mxu0
    %5765 = vdwg.mxu0
    %5766 = vmatpush.bf16.msra.mxu0 %v4058
    %5767 = vmatpush.bf16.msra.mxu0 %v4052
    %5768 = vmatpush.bf16.msra.mxu0 %v4046
    %5769 = vmatpush.bf16.msra.mxu0 %v4040
    %5770 = vmatpush.bf16.msra.mxu0 %v4034
    %5771 = vmatpush.bf16.msra.mxu0 %v4028
    %5772 = vmatpush.bf16.msra.mxu0 %v4022
    %5773 = vmatpush.bf16.msra.mxu0 %v4016
    %5774 = vmatmul.bf16.gmra.mxu0 %v5502
    %v5775 = vpop.f32.mrf.mxu0
    %v5776 = vadd.f32 %v5763, %v5775
    %v5777 = vpop.f32.mrf.mxu0
    %5778 = vdwg.mxu0
    %5779 = vmatpush.bf16.msra.mxu0 %v4106
    %5780 = vmatpush.bf16.msra.mxu0 %v4100
    %5781 = vmatpush.bf16.msra.mxu0 %v4094
    %5782 = vmatpush.bf16.msra.mxu0 %v4088
    %5783 = vmatpush.bf16.msra.mxu0 %v4082
    %5784 = vmatpush.bf16.msra.mxu0 %v4076
    %5785 = vmatpush.bf16.msra.mxu0 %v4070
    %5786 = vmatpush.bf16.msra.mxu0 %v4064
    %5787 = vmatmul.bf16.gmra.mxu0 %v5503
    %v5788 = vpop.f32.mrf.mxu0
    %v5789 = vadd.f32 %v5776, %v5788
    %v5790 = vpop.f32.mrf.mxu0
    %5791 = vdwg.mxu0
    %5792 = vmatpush.bf16.msra.mxu0 %v4154
    %5793 = vmatpush.bf16.msra.mxu0 %v4148
    %5794 = vmatpush.bf16.msra.mxu0 %v4142
    %5795 = vmatpush.bf16.msra.mxu0 %v4136
    %5796 = vmatpush.bf16.msra.mxu0 %v4130
    %5797 = vmatpush.bf16.msra.mxu0 %v4124
    %5798 = vmatpush.bf16.msra.mxu0 %v4118
    %5799 = vmatpush.bf16.msra.mxu0 %v4112
    %5800 = vmatmul.bf16.gmra.mxu0 %v5504
    %v5801 = vpop.f32.mrf.mxu0
    %v5802 = vadd.f32 %v5789, %v5801
    %v5803 = vpop.f32.mrf.mxu0
    %5804 = vdwg.mxu0
    %5805 = vmatpush.bf16.msra.mxu0 %v4202
    %5806 = vmatpush.bf16.msra.mxu0 %v4196
    %5807 = vmatpush.bf16.msra.mxu0 %v4190
    %5808 = vmatpush.bf16.msra.mxu0 %v4184
    %5809 = vmatpush.bf16.msra.mxu0 %v4178
    %5810 = vmatpush.bf16.msra.mxu0 %v4172
    %5811 = vmatpush.bf16.msra.mxu0 %v4166
    %5812 = vmatpush.bf16.msra.mxu0 %v4160
    %5813 = vmatmul.bf16.gmra.mxu0 %v5505
    %v5814 = vpop.f32.mrf.mxu0
    %v5815 = vadd.f32 %v5802, %v5814
    %v5816 = vpop.f32.mrf.mxu0
    %5817 = vdwg.mxu0
    %5818 = vmatpush.bf16.msra.mxu0 %v4250
    %5819 = vmatpush.bf16.msra.mxu0 %v4244
    %5820 = vmatpush.bf16.msra.mxu0 %v4238
    %5821 = vmatpush.bf16.msra.mxu0 %v4232
    %5822 = vmatpush.bf16.msra.mxu0 %v4226
    %5823 = vmatpush.bf16.msra.mxu0 %v4220
    %5824 = vmatpush.bf16.msra.mxu0 %v4214
    %5825 = vmatpush.bf16.msra.mxu0 %v4208
    %5826 = vmatmul.bf16.gmra.mxu0 %v5506
    %v5827 = vpop.f32.mrf.mxu0
    %v5828 = vadd.f32 %v5815, %v5827
    %v5829 = vpop.f32.mrf.mxu0
    %5830 = vdwg.mxu0
    %5831 = vmatpush.bf16.msra.mxu0 %v4011
    %5832 = vmatpush.bf16.msra.mxu0 %v4005
    %5833 = vmatpush.bf16.msra.mxu0 %v3999
    %5834 = vmatpush.bf16.msra.mxu0 %v3993
    %5835 = vmatpush.bf16.msra.mxu0 %v3987
    %5836 = vmatpush.bf16.msra.mxu0 %v3981
    %5837 = vmatpush.bf16.msra.mxu0 %v3975
    %5838 = vmatpush.bf16.msra.mxu0 %v3969
    %5839 = vmatmul.bf16.gmra.mxu0 %v5501
    %v5840 = vpop.f32.mrf.mxu0
    %v5841 = vadd.f32 %v5511, %v5840
    %v5842 = vpop.f32.mrf.mxu0
    %5843 = vdwg.mxu0
    %5844 = vmatpush.bf16.msra.mxu0 %v4059
    %5845 = vmatpush.bf16.msra.mxu0 %v4053
    %5846 = vmatpush.bf16.msra.mxu0 %v4047
    %5847 = vmatpush.bf16.msra.mxu0 %v4041
    %5848 = vmatpush.bf16.msra.mxu0 %v4035
    %5849 = vmatpush.bf16.msra.mxu0 %v4029
    %5850 = vmatpush.bf16.msra.mxu0 %v4023
    %5851 = vmatpush.bf16.msra.mxu0 %v4017
    %5852 = vmatmul.bf16.gmra.mxu0 %v5502
    %v5853 = vpop.f32.mrf.mxu0
    %v5854 = vadd.f32 %v5841, %v5853
    %v5855 = vpop.f32.mrf.mxu0
    %5856 = vdwg.mxu0
    %5857 = vmatpush.bf16.msra.mxu0 %v4107
    %5858 = vmatpush.bf16.msra.mxu0 %v4101
    %5859 = vmatpush.bf16.msra.mxu0 %v4095
    %5860 = vmatpush.bf16.msra.mxu0 %v4089
    %5861 = vmatpush.bf16.msra.mxu0 %v4083
    %5862 = vmatpush.bf16.msra.mxu0 %v4077
    %5863 = vmatpush.bf16.msra.mxu0 %v4071
    %5864 = vmatpush.bf16.msra.mxu0 %v4065
    %5865 = vmatmul.bf16.gmra.mxu0 %v5503
    %v5866 = vpop.f32.mrf.mxu0
    %v5867 = vadd.f32 %v5854, %v5866
    %v5868 = vpop.f32.mrf.mxu0
    %5869 = vdwg.mxu0
    %5870 = vmatpush.bf16.msra.mxu0 %v4155
    %5871 = vmatpush.bf16.msra.mxu0 %v4149
    %5872 = vmatpush.bf16.msra.mxu0 %v4143
    %5873 = vmatpush.bf16.msra.mxu0 %v4137
    %5874 = vmatpush.bf16.msra.mxu0 %v4131
    %5875 = vmatpush.bf16.msra.mxu0 %v4125
    %5876 = vmatpush.bf16.msra.mxu0 %v4119
    %5877 = vmatpush.bf16.msra.mxu0 %v4113
    %5878 = vmatmul.bf16.gmra.mxu0 %v5504
    %v5879 = vpop.f32.mrf.mxu0
    %v5880 = vadd.f32 %v5867, %v5879
    %v5881 = vpop.f32.mrf.mxu0
    %5882 = vdwg.mxu0
    %5883 = vmatpush.bf16.msra.mxu0 %v4203
    %5884 = vmatpush.bf16.msra.mxu0 %v4197
    %5885 = vmatpush.bf16.msra.mxu0 %v4191
    %5886 = vmatpush.bf16.msra.mxu0 %v4185
    %5887 = vmatpush.bf16.msra.mxu0 %v4179
    %5888 = vmatpush.bf16.msra.mxu0 %v4173
    %5889 = vmatpush.bf16.msra.mxu0 %v4167
    %5890 = vmatpush.bf16.msra.mxu0 %v4161
    %5891 = vmatmul.bf16.gmra.mxu0 %v5505
    %v5892 = vpop.f32.mrf.mxu0
    %v5893 = vadd.f32 %v5880, %v5892
    %v5894 = vpop.f32.mrf.mxu0
    %5895 = vdwg.mxu0
    %5896 = vmatpush.bf16.msra.mxu0 %v4251
    %5897 = vmatpush.bf16.msra.mxu0 %v4245
    %5898 = vmatpush.bf16.msra.mxu0 %v4239
    %5899 = vmatpush.bf16.msra.mxu0 %v4233
    %5900 = vmatpush.bf16.msra.mxu0 %v4227
    %5901 = vmatpush.bf16.msra.mxu0 %v4221
    %5902 = vmatpush.bf16.msra.mxu0 %v4215
    %5903 = vmatpush.bf16.msra.mxu0 %v4209
    %5904 = vmatmul.bf16.gmra.mxu0 %v5506
    %v5905 = vpop.f32.mrf.mxu0
    %v5906 = vadd.f32 %v5893, %v5905
    %v5907 = vpop.f32.mrf.mxu0
    %5908 = vdwg.mxu0
    %5909 = vmatpush.bf16.msra.mxu0 %v4012
    %5910 = vmatpush.bf16.msra.mxu0 %v4006
    %5911 = vmatpush.bf16.msra.mxu0 %v4000
    %5912 = vmatpush.bf16.msra.mxu0 %v3994
    %5913 = vmatpush.bf16.msra.mxu0 %v3988
    %5914 = vmatpush.bf16.msra.mxu0 %v3982
    %5915 = vmatpush.bf16.msra.mxu0 %v3976
    %5916 = vmatpush.bf16.msra.mxu0 %v3970
    %5917 = vmatmul.bf16.gmra.mxu0 %v5501
    %v5918 = vpop.f32.mrf.mxu0
    %v5919 = vadd.f32 %v5512, %v5918
    %v5920 = vpop.f32.mrf.mxu0
    %5921 = vdwg.mxu0
    %5922 = vmatpush.bf16.msra.mxu0 %v4060
    %5923 = vmatpush.bf16.msra.mxu0 %v4054
    %5924 = vmatpush.bf16.msra.mxu0 %v4048
    %5925 = vmatpush.bf16.msra.mxu0 %v4042
    %5926 = vmatpush.bf16.msra.mxu0 %v4036
    %5927 = vmatpush.bf16.msra.mxu0 %v4030
    %5928 = vmatpush.bf16.msra.mxu0 %v4024
    %5929 = vmatpush.bf16.msra.mxu0 %v4018
    %5930 = vmatmul.bf16.gmra.mxu0 %v5502
    %v5931 = vpop.f32.mrf.mxu0
    %v5932 = vadd.f32 %v5919, %v5931
    %v5933 = vpop.f32.mrf.mxu0
    %5934 = vdwg.mxu0
    %5935 = vmatpush.bf16.msra.mxu0 %v4108
    %5936 = vmatpush.bf16.msra.mxu0 %v4102
    %5937 = vmatpush.bf16.msra.mxu0 %v4096
    %5938 = vmatpush.bf16.msra.mxu0 %v4090
    %5939 = vmatpush.bf16.msra.mxu0 %v4084
    %5940 = vmatpush.bf16.msra.mxu0 %v4078
    %5941 = vmatpush.bf16.msra.mxu0 %v4072
    %5942 = vmatpush.bf16.msra.mxu0 %v4066
    %5943 = vmatmul.bf16.gmra.mxu0 %v5503
    %v5944 = vpop.f32.mrf.mxu0
    %v5945 = vadd.f32 %v5932, %v5944
    %v5946 = vpop.f32.mrf.mxu0
    %5947 = vdwg.mxu0
    %5948 = vmatpush.bf16.msra.mxu0 %v4156
    %5949 = vmatpush.bf16.msra.mxu0 %v4150
    %5950 = vmatpush.bf16.msra.mxu0 %v4144
    %5951 = vmatpush.bf16.msra.mxu0 %v4138
    %5952 = vmatpush.bf16.msra.mxu0 %v4132
    %5953 = vmatpush.bf16.msra.mxu0 %v4126
    %5954 = vmatpush.bf16.msra.mxu0 %v4120
    %5955 = vmatpush.bf16.msra.mxu0 %v4114
    %5956 = vmatmul.bf16.gmra.mxu0 %v5504
    %v5957 = vpop.f32.mrf.mxu0
    %v5958 = vadd.f32 %v5945, %v5957
    %v5959 = vpop.f32.mrf.mxu0
    %5960 = vdwg.mxu0
    %5961 = vmatpush.bf16.msra.mxu0 %v4204
    %5962 = vmatpush.bf16.msra.mxu0 %v4198
    %5963 = vmatpush.bf16.msra.mxu0 %v4192
    %5964 = vmatpush.bf16.msra.mxu0 %v4186
    %5965 = vmatpush.bf16.msra.mxu0 %v4180
    %5966 = vmatpush.bf16.msra.mxu0 %v4174
    %5967 = vmatpush.bf16.msra.mxu0 %v4168
    %5968 = vmatpush.bf16.msra.mxu0 %v4162
    %5969 = vmatmul.bf16.gmra.mxu0 %v5505
    %v5970 = vpop.f32.mrf.mxu0
    %v5971 = vadd.f32 %v5958, %v5970
    %v5972 = vpop.f32.mrf.mxu0
    %5973 = vdwg.mxu0
    %5974 = vmatpush.bf16.msra.mxu0 %v4252
    %5975 = vmatpush.bf16.msra.mxu0 %v4246
    %5976 = vmatpush.bf16.msra.mxu0 %v4240
    %5977 = vmatpush.bf16.msra.mxu0 %v4234
    %5978 = vmatpush.bf16.msra.mxu0 %v4228
    %5979 = vmatpush.bf16.msra.mxu0 %v4222
    %5980 = vmatpush.bf16.msra.mxu0 %v4216
    %5981 = vmatpush.bf16.msra.mxu0 %v4210
    %5982 = vmatmul.bf16.gmra.mxu0 %v5506
    %v5983 = vpop.f32.mrf.mxu0
    %v5984 = vadd.f32 %v5971, %v5983
    %v5985 = vpop.f32.mrf.mxu0
    %5986 = vdwg.mxu0
    %v5987 = vpack.c.bf16 %v5594, %v5594
    %v5988 = vpack.c.bf16 %v5672, %v5672
    %v5989 = vpack.c.bf16 %v5750, %v5750
    %v5990 = vpack.c.bf16 %v5828, %v5828
    %v5991 = vpack.c.bf16 %v5906, %v5906
    %v5992 = vpack.c.bf16 %v5984, %v5984
    %v5993 = vld [vmem:[#allocation7] sm:$0xf]
    %v5994 = vld [vmem:[#allocation7 + $0x4] sm:$0xf]
    %v5995 = vld [vmem:[#allocation7 + $0x8] sm:$0xf]
    %v5996 = vld [vmem:[#allocation7 + $0xc] sm:$0xf]
    %v5997 = vld [vmem:[#allocation7 + $0x10] sm:$0xf]
    %v5998 = vld [vmem:[#allocation7 + $0x14] sm:$0xf]
    %v5999 = vld [vmem:[#allocation7 + $0x18] sm:$0xf]
    %v6000 = vld [vmem:[#allocation7 + $0x1c] sm:$0xf]
    %v6001 = vld [vmem:[#allocation7 + $0x20] sm:$0xf]
    %v6002 = vld [vmem:[#allocation7 + $0x24] sm:$0xf]
    %v6003 = vld [vmem:[#allocation7 + $0x28] sm:$0xf]
    %v6004 = vld [vmem:[#allocation7 + $0x2c] sm:$0xf]
    %v6005 = vld [vmem:[#allocation7 + $0x30] sm:$0xf]
    %v6006 = vld [vmem:[#allocation7 + $0x34] sm:$0xf]
    %v6007 = vld [vmem:[#allocation7 + $0x38] sm:$0xf]
    %v6008 = vld [vmem:[#allocation7 + $0x3c] sm:$0xf]
    %v6009 = vld [vmem:[#allocation7 + $0x40] sm:$0xf]
    %v6010 = vld [vmem:[#allocation7 + $0x44] sm:$0xf]
    %v6011 = vld [vmem:[#allocation7 + $0x48] sm:$0xf]
    %v6012 = vld [vmem:[#allocation7 + $0x4c] sm:$0xf]
    %v6013 = vld [vmem:[#allocation7 + $0x50] sm:$0xf]
    %v6014 = vld [vmem:[#allocation7 + $0x54] sm:$0xf]
    %v6015 = vld [vmem:[#allocation7 + $0x58] sm:$0xf]
    %v6016 = vld [vmem:[#allocation7 + $0x5c] sm:$0xf]
    %v6017 = vld [vmem:[#allocation7 + $0x60] sm:$0xf]
    %v6018 = vld [vmem:[#allocation7 + $0x64] sm:$0xf]
    %v6019 = vld [vmem:[#allocation7 + $0x68] sm:$0xf]
    %v6020 = vld [vmem:[#allocation7 + $0x6c] sm:$0xf]
    %v6021 = vld [vmem:[#allocation7 + $0x70] sm:$0xf]
    %v6022 = vld [vmem:[#allocation7 + $0x74] sm:$0xf]
    %v6023 = vld [vmem:[#allocation7 + $0x78] sm:$0xf]
    %v6024 = vld [vmem:[#allocation7 + $0x7c] sm:$0xf]
    %v6025 = vld [vmem:[#allocation7 + $0x80] sm:$0xf]
    %v6026 = vld [vmem:[#allocation7 + $0x84] sm:$0xf]
    %v6027 = vld [vmem:[#allocation7 + $0x88] sm:$0xf]
    %v6028 = vld [vmem:[#allocation7 + $0x8c] sm:$0xf]
    %v6029 = vld [vmem:[#allocation7 + $0x90] sm:$0xf]
    %v6030 = vld [vmem:[#allocation7 + $0x94] sm:$0xf]
    %v6031 = vld [vmem:[#allocation7 + $0x98] sm:$0xf]
    %v6032 = vld [vmem:[#allocation7 + $0x9c] sm:$0xf]
    %v6033 = vld [vmem:[#allocation7 + $0xa0] sm:$0xf]
    %v6034 = vld [vmem:[#allocation7 + $0xa4] sm:$0xf]
    %v6035 = vld [vmem:[#allocation7 + $0xa8] sm:$0xf]
    %v6036 = vld [vmem:[#allocation7 + $0xac] sm:$0xf]
    %v6037 = vld [vmem:[#allocation7 + $0xb0] sm:$0xf]
    %v6038 = vld [vmem:[#allocation7 + $0xb4] sm:$0xf]
    %v6039 = vld [vmem:[#allocation7 + $0xb8] sm:$0xf]
    %v6040 = vld [vmem:[#allocation7 + $0xbc] sm:$0xf]
    %v6041 = vld [vmem:[#allocation7 + $0xc0] sm:$0xf]
    %v6042 = vld [vmem:[#allocation7 + $0xc4] sm:$0xf]
    %v6043 = vld [vmem:[#allocation7 + $0xc8] sm:$0xf]
    %v6044 = vld [vmem:[#allocation7 + $0xcc] sm:$0xf]
    %v6045 = vld [vmem:[#allocation7 + $0xd0] sm:$0xf]
    %v6046 = vld [vmem:[#allocation7 + $0xd4] sm:$0xf]
    %v6047 = vld [vmem:[#allocation7 + $0xd8] sm:$0xf]
    %v6048 = vld [vmem:[#allocation7 + $0xdc] sm:$0xf]
    %v6049 = vld [vmem:[#allocation7 + $0xe0] sm:$0xf]
    %v6050 = vld [vmem:[#allocation7 + $0xe4] sm:$0xf]
    %v6051 = vld [vmem:[#allocation7 + $0xe8] sm:$0xf]
    %v6052 = vld [vmem:[#allocation7 + $0xec] sm:$0xf]
    %v6053 = vld [vmem:[#allocation7 + $0xf0] sm:$0xf]
    %v6054 = vld [vmem:[#allocation7 + $0xf4] sm:$0xf]
    %v6055 = vld [vmem:[#allocation7 + $0xf8] sm:$0xf]
    %v6056 = vld [vmem:[#allocation7 + $0xfc] sm:$0xf]
    %v6057 = vld [vmem:[#allocation7 + $0x100] sm:$0xf]
    %v6058 = vld [vmem:[#allocation7 + $0x104] sm:$0xf]
    %v6059 = vld [vmem:[#allocation7 + $0x108] sm:$0xf]
    %v6060 = vld [vmem:[#allocation7 + $0x10c] sm:$0xf]
    %v6061 = vld [vmem:[#allocation7 + $0x110] sm:$0xf]
    %v6062 = vld [vmem:[#allocation7 + $0x114] sm:$0xf]
    %v6063 = vld [vmem:[#allocation7 + $0x118] sm:$0xf]
    %v6064 = vld [vmem:[#allocation7 + $0x11c] sm:$0xf]
    %v6065 = vld [vmem:[#allocation7 + $0x120] sm:$0xf]
    %v6066 = vld [vmem:[#allocation7 + $0x124] sm:$0xf]
    %v6067 = vld [vmem:[#allocation7 + $0x128] sm:$0xf]
    %v6068 = vld [vmem:[#allocation7 + $0x12c] sm:$0xf]
    %v6069 = vld [vmem:[#allocation7 + $0x130] sm:$0xf]
    %v6070 = vld [vmem:[#allocation7 + $0x134] sm:$0xf]
    %v6071 = vld [vmem:[#allocation7 + $0x138] sm:$0xf]
    %v6072 = vld [vmem:[#allocation7 + $0x13c] sm:$0xf]
    %v6073 = vld [vmem:[#allocation7 + $0x140] sm:$0xf]
    %v6074 = vld [vmem:[#allocation7 + $0x144] sm:$0xf]
    %v6075 = vld [vmem:[#allocation7 + $0x148] sm:$0xf]
    %v6076 = vld [vmem:[#allocation7 + $0x14c] sm:$0xf]
    %v6077 = vld [vmem:[#allocation7 + $0x150] sm:$0xf]
    %v6078 = vld [vmem:[#allocation7 + $0x154] sm:$0xf]
    %v6079 = vld [vmem:[#allocation7 + $0x158] sm:$0xf]
    %v6080 = vld [vmem:[#allocation7 + $0x15c] sm:$0xf]
    %v6081 = vld [vmem:[#allocation7 + $0x160] sm:$0xf]
    %v6082 = vld [vmem:[#allocation7 + $0x164] sm:$0xf]
    %v6083 = vld [vmem:[#allocation7 + $0x168] sm:$0xf]
    %v6084 = vld [vmem:[#allocation7 + $0x16c] sm:$0xf]
    %v6085 = vld [vmem:[#allocation7 + $0x170] sm:$0xf]
    %v6086 = vld [vmem:[#allocation7 + $0x174] sm:$0xf]
    %v6087 = vld [vmem:[#allocation7 + $0x178] sm:$0xf]
    %v6088 = vld [vmem:[#allocation7 + $0x17c] sm:$0xf]
    %v6185 = vunpack.c.l.b16 %v5993
    %v6186 = vunpack.c.l.b16 %v5994
    %v6187 = vunpack.c.l.b16 %v5995
    %v6188 = vunpack.c.l.b16 %v5996
    %v6189 = vunpack.c.l.b16 %v5997
    %v6190 = vunpack.c.l.b16 %v5998
    %v6191 = vunpack.c.l.b16 %v5999
    %v6192 = vunpack.c.l.b16 %v6000
    %v6193 = vunpack.c.l.b16 %v6001
    %v6194 = vunpack.c.l.b16 %v6002
    %v6195 = vunpack.c.l.b16 %v6003
    %v6196 = vunpack.c.l.b16 %v6004
    %v6197 = vunpack.c.l.b16 %v6005
    %v6198 = vunpack.c.l.b16 %v6006
    %v6199 = vunpack.c.l.b16 %v6007
    %v6200 = vunpack.c.l.b16 %v6008
    %v6201 = vunpack.c.l.b16 %v6009
    %v6202 = vunpack.c.l.b16 %v6010
    %v6203 = vunpack.c.l.b16 %v6011
    %v6204 = vunpack.c.l.b16 %v6012
    %v6205 = vunpack.c.l.b16 %v6013
    %v6206 = vunpack.c.l.b16 %v6014
    %v6207 = vunpack.c.l.b16 %v6015
    %v6208 = vunpack.c.l.b16 %v6016
    %v6209 = vunpack.c.l.b16 %v6017
    %v6210 = vunpack.c.l.b16 %v6018
    %v6211 = vunpack.c.l.b16 %v6019
    %v6212 = vunpack.c.l.b16 %v6020
    %v6213 = vunpack.c.l.b16 %v6021
    %v6214 = vunpack.c.l.b16 %v6022
    %v6215 = vunpack.c.l.b16 %v6023
    %v6216 = vunpack.c.l.b16 %v6024
    %v6217 = vunpack.c.l.b16 %v6025
    %v6218 = vunpack.c.l.b16 %v6026
    %v6219 = vunpack.c.l.b16 %v6027
    %v6220 = vunpack.c.l.b16 %v6028
    %v6221 = vunpack.c.l.b16 %v6029
    %v6222 = vunpack.c.l.b16 %v6030
    %v6223 = vunpack.c.l.b16 %v6031
    %v6224 = vunpack.c.l.b16 %v6032
    %v6225 = vunpack.c.l.b16 %v6033
    %v6226 = vunpack.c.l.b16 %v6034
    %v6227 = vunpack.c.l.b16 %v6035
    %v6228 = vunpack.c.l.b16 %v6036
    %v6229 = vunpack.c.l.b16 %v6037
    %v6230 = vunpack.c.l.b16 %v6038
    %v6231 = vunpack.c.l.b16 %v6039
    %v6232 = vunpack.c.l.b16 %v6040
    %v6233 = vunpack.c.l.b16 %v6041
    %v6234 = vunpack.c.l.b16 %v6042
    %v6235 = vunpack.c.l.b16 %v6043
    %v6236 = vunpack.c.l.b16 %v6044
    %v6237 = vunpack.c.l.b16 %v6045
    %v6238 = vunpack.c.l.b16 %v6046
    %v6239 = vunpack.c.l.b16 %v6047
    %v6240 = vunpack.c.l.b16 %v6048
    %v6241 = vunpack.c.l.b16 %v6049
    %v6242 = vunpack.c.l.b16 %v6050
    %v6243 = vunpack.c.l.b16 %v6051
    %v6244 = vunpack.c.l.b16 %v6052
    %v6245 = vunpack.c.l.b16 %v6053
    %v6246 = vunpack.c.l.b16 %v6054
    %v6247 = vunpack.c.l.b16 %v6055
    %v6248 = vunpack.c.l.b16 %v6056
    %v6249 = vunpack.c.l.b16 %v6057
    %v6250 = vunpack.c.l.b16 %v6058
    %v6251 = vunpack.c.l.b16 %v6059
    %v6252 = vunpack.c.l.b16 %v6060
    %v6253 = vunpack.c.l.b16 %v6061
    %v6254 = vunpack.c.l.b16 %v6062
    %v6255 = vunpack.c.l.b16 %v6063
    %v6256 = vunpack.c.l.b16 %v6064
    %v6257 = vunpack.c.l.b16 %v6065
    %v6258 = vunpack.c.l.b16 %v6066
    %v6259 = vunpack.c.l.b16 %v6067
    %v6260 = vunpack.c.l.b16 %v6068
    %v6261 = vunpack.c.l.b16 %v6069
    %v6262 = vunpack.c.l.b16 %v6070
    %v6263 = vunpack.c.l.b16 %v6071
    %v6264 = vunpack.c.l.b16 %v6072
    %v6265 = vunpack.c.l.b16 %v6073
    %v6266 = vunpack.c.l.b16 %v6074
    %v6267 = vunpack.c.l.b16 %v6075
    %v6268 = vunpack.c.l.b16 %v6076
    %v6269 = vunpack.c.l.b16 %v6077
    %v6270 = vunpack.c.l.b16 %v6078
    %v6271 = vunpack.c.l.b16 %v6079
    %v6272 = vunpack.c.l.b16 %v6080
    %v6273 = vunpack.c.l.b16 %v6081
    %v6274 = vunpack.c.l.b16 %v6082
    %v6275 = vunpack.c.l.b16 %v6083
    %v6276 = vunpack.c.l.b16 %v6084
    %v6277 = vunpack.c.l.b16 %v6085
    %v6278 = vunpack.c.l.b16 %v6086
    %v6279 = vunpack.c.l.b16 %v6087
    %v6280 = vunpack.c.l.b16 %v6088
    %v6281 = vpack.c.b16 %v6186, %v6185
    %v6282 = vpack.c.b16 %v6188, %v6187
    %v6283 = vpack.c.b16 %v6190, %v6189
    %v6284 = vpack.c.b16 %v6192, %v6191
    %v6285 = vpack.c.b16 %v6194, %v6193
    %v6286 = vpack.c.b16 %v6196, %v6195
    %v6287 = vpack.c.b16 %v6198, %v6197
    %v6288 = vpack.c.b16 %v6200, %v6199
    %v6289 = vpack.c.b16 %v6202, %v6201
    %v6290 = vpack.c.b16 %v6204, %v6203
    %v6291 = vpack.c.b16 %v6206, %v6205
    %v6292 = vpack.c.b16 %v6208, %v6207
    %v6293 = vpack.c.b16 %v6210, %v6209
    %v6294 = vpack.c.b16 %v6212, %v6211
    %v6295 = vpack.c.b16 %v6214, %v6213
    %v6296 = vpack.c.b16 %v6216, %v6215
    %v6297 = vpack.c.b16 %v6218, %v6217
    %v6298 = vpack.c.b16 %v6220, %v6219
    %v6299 = vpack.c.b16 %v6222, %v6221
    %v6300 = vpack.c.b16 %v6224, %v6223
    %v6301 = vpack.c.b16 %v6226, %v6225
    %v6302 = vpack.c.b16 %v6228, %v6227
    %v6303 = vpack.c.b16 %v6230, %v6229
    %v6304 = vpack.c.b16 %v6232, %v6231
    %v6305 = vpack.c.b16 %v6234, %v6233
    %v6306 = vpack.c.b16 %v6236, %v6235
    %v6307 = vpack.c.b16 %v6238, %v6237
    %v6308 = vpack.c.b16 %v6240, %v6239
    %v6309 = vpack.c.b16 %v6242, %v6241
    %v6310 = vpack.c.b16 %v6244, %v6243
    %v6311 = vpack.c.b16 %v6246, %v6245
    %v6312 = vpack.c.b16 %v6248, %v6247
    %v6313 = vpack.c.b16 %v6250, %v6249
    %v6314 = vpack.c.b16 %v6252, %v6251
    %v6315 = vpack.c.b16 %v6254, %v6253
    %v6316 = vpack.c.b16 %v6256, %v6255
    %v6317 = vpack.c.b16 %v6258, %v6257
    %v6318 = vpack.c.b16 %v6260, %v6259
    %v6319 = vpack.c.b16 %v6262, %v6261
    %v6320 = vpack.c.b16 %v6264, %v6263
    %v6321 = vpack.c.b16 %v6266, %v6265
    %v6322 = vpack.c.b16 %v6268, %v6267
    %v6323 = vpack.c.b16 %v6270, %v6269
    %v6324 = vpack.c.b16 %v6272, %v6271
    %v6325 = vpack.c.b16 %v6274, %v6273
    %v6326 = vpack.c.b16 %v6276, %v6275
    %v6327 = vpack.c.b16 %v6278, %v6277
    %v6328 = vpack.c.b16 %v6280, %v6279
    %6377 = vmatpush.bf16.msra.mxu0 %v6288
    %6378 = vmatpush.bf16.msra.mxu0 %v6287
    %6379 = vmatpush.bf16.msra.mxu0 %v6286
    %6380 = vmatpush.bf16.msra.mxu0 %v6285
    %6381 = vmatpush.bf16.msra.mxu0 %v6284
    %6382 = vmatpush.bf16.msra.mxu0 %v6283
    %6383 = vmatpush.bf16.msra.mxu0 %v6282
    %6384 = vmatpush.bf16.msra.mxu0 %v6281
    %6385 = vmatmul.bf16.gmra.mxu0 %v5987
    %v6386 = vpop.f32.mrf.mxu0
    %v6387 = vadd.f32 0.0, %v6386
    %v6388 = vpop.f32.mrf.mxu0
    %6389 = vdwg.mxu0
    %6390 = vmatpush.bf16.msra.mxu0 %v6296
    %6391 = vmatpush.bf16.msra.mxu0 %v6295
    %6392 = vmatpush.bf16.msra.mxu0 %v6294
    %6393 = vmatpush.bf16.msra.mxu0 %v6293
    %6394 = vmatpush.bf16.msra.mxu0 %v6292
    %6395 = vmatpush.bf16.msra.mxu0 %v6291
    %6396 = vmatpush.bf16.msra.mxu0 %v6290
    %6397 = vmatpush.bf16.msra.mxu0 %v6289
    %6398 = vmatmul.bf16.gmra.mxu0 %v5988
    %v6399 = vpop.f32.mrf.mxu0
    %v6400 = vadd.f32 %v6387, %v6399
    %v6401 = vpop.f32.mrf.mxu0
    %6402 = vdwg.mxu0
    %6403 = vmatpush.bf16.msra.mxu0 %v6304
    %6404 = vmatpush.bf16.msra.mxu0 %v6303
    %6405 = vmatpush.bf16.msra.mxu0 %v6302
    %6406 = vmatpush.bf16.msra.mxu0 %v6301
    %6407 = vmatpush.bf16.msra.mxu0 %v6300
    %6408 = vmatpush.bf16.msra.mxu0 %v6299
    %6409 = vmatpush.bf16.msra.mxu0 %v6298
    %6410 = vmatpush.bf16.msra.mxu0 %v6297
    %6411 = vmatmul.bf16.gmra.mxu0 %v5989
    %v6412 = vpop.f32.mrf.mxu0
    %v6413 = vadd.f32 %v6400, %v6412
    %v6414 = vpop.f32.mrf.mxu0
    %6415 = vdwg.mxu0
    %6416 = vmatpush.bf16.msra.mxu0 %v6312
    %6417 = vmatpush.bf16.msra.mxu0 %v6311
    %6418 = vmatpush.bf16.msra.mxu0 %v6310
    %6419 = vmatpush.bf16.msra.mxu0 %v6309
    %6420 = vmatpush.bf16.msra.mxu0 %v6308
    %6421 = vmatpush.bf16.msra.mxu0 %v6307
    %6422 = vmatpush.bf16.msra.mxu0 %v6306
    %6423 = vmatpush.bf16.msra.mxu0 %v6305
    %6424 = vmatmul.bf16.gmra.mxu0 %v5990
    %v6425 = vpop.f32.mrf.mxu0
    %v6426 = vadd.f32 %v6413, %v6425
    %v6427 = vpop.f32.mrf.mxu0
    %6428 = vdwg.mxu0
    %6429 = vmatpush.bf16.msra.mxu0 %v6320
    %6430 = vmatpush.bf16.msra.mxu0 %v6319
    %6431 = vmatpush.bf16.msra.mxu0 %v6318
    %6432 = vmatpush.bf16.msra.mxu0 %v6317
    %6433 = vmatpush.bf16.msra.mxu0 %v6316
    %6434 = vmatpush.bf16.msra.mxu0 %v6315
    %6435 = vmatpush.bf16.msra.mxu0 %v6314
    %6436 = vmatpush.bf16.msra.mxu0 %v6313
    %6437 = vmatmul.bf16.gmra.mxu0 %v5991
    %v6438 = vpop.f32.mrf.mxu0
    %v6439 = vadd.f32 %v6426, %v6438
    %v6440 = vpop.f32.mrf.mxu0
    %6441 = vdwg.mxu0
    %6442 = vmatpush.bf16.msra.mxu0 %v6328
    %6443 = vmatpush.bf16.msra.mxu0 %v6327
    %6444 = vmatpush.bf16.msra.mxu0 %v6326
    %6445 = vmatpush.bf16.msra.mxu0 %v6325
    %6446 = vmatpush.bf16.msra.mxu0 %v6324
    %6447 = vmatpush.bf16.msra.mxu0 %v6323
    %6448 = vmatpush.bf16.msra.mxu0 %v6322
    %6449 = vmatpush.bf16.msra.mxu0 %v6321
    %6450 = vmatmul.bf16.gmra.mxu0 %v5992
    %v6451 = vpop.f32.mrf.mxu0
    %v6452 = vadd.f32 %v6439, %v6451
    %v6453 = vpop.f32.mrf.mxu0
    %6454 = vdwg.mxu0
    %v6456 = vrot.slane %v6452, 5
    %v6458 = vadd.f32 %v2771, %v6456
    %v6459 = vld [vmem:[#allocation10] sm:$0x1]
    %v6461 = vperm.slane %v6459, 0
    %v6463 = vadd.f32 %v6458, %v6461
    %6464 = vst [vmem:[#allocation12 - $0x3] sm:$0x8] %v6463
    // Predicated region
    $region46: #{bert_context_emb_forward.1} parent=1 // pred_check
      _
    $region47: #{bert_context_emb_forward.1} parent=1 // pred_check_branch
      %6466 = sbr.rel (0) target = $region49
    $region48: #{bert_context_emb_forward.1} parent=1 // pred_region
      %6468 = vsyncadd [#allocation6], 0
      %s6470 = sshll.u32 [#allocation12], 4
      %s6471 = int_to_ptr.vmem [resolvable:$true] %s6470
      %s6472 = sshll.u32 %s7, 4
      %s6473 = int_to_ptr.hbm [resolvable:$true] %s6472
      %6475 = dma.vmem_to_hbm [thread:$0]  %s6471, 16, %s6473, [#allocation6]
    $region49: #{bert_context_emb_forward.1} parent=1 // pred_fallthru
      _
    // Predicated region
    $region50: #{bert_context_emb_forward.1} parent=1 // pred_check
      _
    $region51: #{bert_context_emb_forward.1} parent=1 // pred_check_branch
      %6477 = sbr.rel (0) target = $region53
    $region52: #{bert_context_emb_forward.1} parent=1 // pred_region
      %6479 = dma.done [#allocation6], 16
    $region53: #{bert_context_emb_forward.1} parent=1 // pred_fallthru
      _
    %6480 = vsyncpa [#allocation5], 1
    %6481 = vsyncpa [#allocation8], 1
    %6482 = vsyncpa [#allocation11], 1
    %6483 = vsyncpa [#allocation6], 1
  %6484 = vsyncmov [#allocation3]
  %s6485 = vpop.sfrf %6484
  %p6486 = scmp.eq.s32.totalorder %s6485, 0
  %p6487 = pneg %p6486
  %6489 = shalt.err (%p6487)

</llo_original>
